<compile_context>
chip_gen: v5e
topology: v5e:2x2
jax: 0.10.0
libtpu: 0.0.40
codegen_flags: <defaults>
</compile_context>

<pallas_src>
import functools
import math

import jax
import jax.numpy as jnp
import numpy as np
from jax.experimental import pallas as pl
from jax.experimental.pallas import tpu as pltpu

D_MODEL = 32
N_HEAD = 4
HEAD_DIM = D_MODEL // N_HEAD
LN_EPS = 1e-5
TB_MAX = 128          # max sequences per grid step (VMEM-safe on v7x as well)


def _erf(x):
    # Abramowitz & Stegun 7.1.26 polynomial (|err| < 1.5e-7): matches the
    # exact-erf GELU used by torch.nn.GELU() to tolerance, using only
    # Mosaic-supported elementwise ops (abs / exp / where / mul / add / recip).
    a1, a2, a3, a4, a5 = (0.254829592, -0.284496736, 1.421413741,
                          -1.453152027, 1.061405429)
    p = 0.3275911
    ax = jnp.abs(x)
    t = pl.reciprocal(1.0 + p * ax, approx=False)        # EUP, not a VALU divide
    poly = ((((a5 * t + a4) * t + a3) * t + a2) * t + a1) * t
    erf_abs = 1.0 - poly * jnp.exp(-ax * ax)
    return jnp.where(x < 0.0, -erf_abs, erf_abs)


def _gelu_exact(x):
    return 0.5 * x * (1.0 + _erf(x * (1.0 / math.sqrt(2.0))))


def _layer_norm(x, w, b):
    mu = jnp.mean(x, axis=-1, keepdims=True)
    xc = x - mu
    var = jnp.mean(xc * xc, axis=-1, keepdims=True)
    return xc * jax.lax.rsqrt(var + LN_EPS) * w + b


def _make_block_kernel(n_head, has_mask):
    """Build the kernel; `has_mask` is a static specialization flag."""

    def kernel(*refs):
        if has_mask:
            (mask_ref, x_ref, wqkv_ref, bqkv_ref, wo_ref, bo_ref,
             g1_ref, be1_ref, g2_ref, be2_ref,
             wfc_ref, bfc_ref, wpr_ref, bpr_ref, o_ref) = refs
        else:
            (x_ref, wqkv_ref, bqkv_ref, wo_ref, bo_ref,
             g1_ref, be1_ref, g2_ref, be2_ref,
             wfc_ref, bfc_ref, wpr_ref, bpr_ref, o_ref) = refs
            mask_ref = None

        tb, L, D = x_ref.shape
        hd = D // n_head
        x = x_ref[...].reshape(tb * L, D)          # all positions of TB seqs

        # ---- attention branch ----------------------------------------------
        h = _layer_norm(x, g1_ref[...], be1_ref[...])
        qkv = jnp.dot(h, wqkv_ref[...],
                      preferred_element_type=jnp.float32) + bqkv_ref[...]
        scale = 1.0 / math.sqrt(hd)
        q = qkv[:, :D] * scale
        k = qkv[:, D:2 * D]
        v = qkv[:, 2 * D:]
        maskb = mask_ref[...][None, :, :] if has_mask else None   # (1, L, L)

        head_outs = []
        for hh in range(n_head):                   # static unroll, n_head small
            lo = hh * hd
            qh = q[:, lo:lo + hd].reshape(tb, L, hd)
            kh = k[:, lo:lo + hd].reshape(tb, L, hd)
            vh = v[:, lo:lo + hd].reshape(tb, L, hd)
            s = jnp.einsum('bqd,bkd->bqk', qh, kh,
                           preferred_element_type=jnp.float32)    # (tb, L, L)
            if has_mask:
                s = s + maskb
            s = s - jnp.max(s, axis=-1, keepdims=True)
            e = jnp.exp(s)
            pmat = e * pl.reciprocal(jnp.sum(e, axis=-1, keepdims=True),
                                     approx=True)                 # EUP recip
            oh = jnp.einsum('bqk,bkd->bqd', pmat, vh,
                            preferred_element_type=jnp.float32)   # (tb, L, hd)
            head_outs.append(oh.reshape(tb * L, hd))
        attn = jnp.concatenate(head_outs, axis=-1)                # (tb*L, D)
        attn = jnp.dot(attn, wo_ref[...],
                       preferred_element_type=jnp.float32) + bo_ref[...]

        x1 = x + attn

        # ---- MLP branch ------------------------------------------------------
        h2 = _layer_norm(x1, g2_ref[...], be2_ref[...])
        mid = jnp.dot(h2, wfc_ref[...],
                      preferred_element_type=jnp.float32) + bfc_ref[...]
        mid = _gelu_exact(mid)
        mlp = jnp.dot(mid, wpr_ref[...],
                      preferred_element_type=jnp.float32) + bpr_ref[...]

        o_ref[...] = (x1 + mlp).reshape(tb, L, D).astype(o_ref.dtype)

    return kernel


def _largest_divisor_leq(n, cap):
    for t in range(min(n, cap), 0, -1):
        if n % t == 0:
            return t
    return 1


def init_params(key, d=D_MODEL):
    ks = jax.random.split(key, 12)
    n = lambda k, shape, s=0.05: jax.random.normal(k, shape, jnp.float32) * s
    return dict(
        in_proj_w=n(ks[0], (3 * d, d)),      # nn.MultiheadAttention.in_proj_weight
        in_proj_b=n(ks[1], (3 * d,)),
        out_proj_w=n(ks[2], (d, d)),
        out_proj_b=n(ks[3], (d,)),
        ln1_w=1.0 + n(ks[4], (d,), 0.1),
        ln1_b=n(ks[5], (d,), 0.1),
        ln2_w=1.0 + n(ks[6], (d,), 0.1),
        ln2_b=n(ks[7], (d,), 0.1),
        fc_w=n(ks[8], (4 * d, d)),           # mlp.c_fc
        fc_b=n(ks[9], (4 * d,)),
        proj_w=n(ks[10], (d, 4 * d)),        # mlp.c_proj
        proj_b=n(ks[11], (d,)),
    )


def residual_attention_block(x_lnd, params, attn_mask=None, tb_max=TB_MAX):
    """x_lnd: (L, N, D) float32, matching the PyTorch module's input layout."""
    L, N, D = x_lnd.shape
    assert D % N_HEAD == 0
    has_mask = attn_mask is not None

    # (L, N, D) -> (N, L, D): per-sequence-contiguous rows for batched blocks.
    # TODO(synk): absorb these two XLA transposes into the kernel's BlockSpecs
    # (block (L, TB, D) + in-VMEM rearrange) to save one HBM pass each way.
    x = jnp.transpose(x_lnd, (1, 0, 2))

    tb = _largest_divisor_leq(N, tb_max)     # sequences per grid step
    grid = (N // tb,)

    w_in = params["in_proj_w"]               # (3D, D) -> fused QKV weight (D, 3D)
    b_in = params["in_proj_b"]               # (3D,)
    r2 = lambda a: a.reshape(1, -1)

    operands = [
        x,
        w_in.T, r2(b_in),                                   # fused Wqkv, bqkv
        params["out_proj_w"].T, r2(params["out_proj_b"]),   # Wo, bo
        r2(params["ln1_w"]), r2(params["ln1_b"]),
        r2(params["ln2_w"]), r2(params["ln2_b"]),
        params["fc_w"].T, r2(params["fc_b"]),               # c_fc
        params["proj_w"].T, r2(params["proj_b"]),           # c_proj
    ]

    def full(shape):
        nd = len(shape)
        return pl.BlockSpec(shape, lambda n, nd=nd: (0,) * nd)

    in_specs = [
        pl.BlockSpec((tb, L, D), lambda n: (n, 0, 0)),      # x (TB sequences)
        full((D, 3 * D)), full((1, 3 * D)),
        full((D, D)), full((1, D)),
        full((1, D)), full((1, D)),
        full((1, D)), full((1, D)),
        full((D, 4 * D)), full((1, 4 * D)),
        full((4 * D, D)), full((1, D)),
    ]
    if has_mask:
        operands.insert(0, attn_mask.astype(jnp.float32))
        in_specs.insert(0, full((L, L)))

    out_specs = pl.BlockSpec((tb, L, D), lambda n: (n, 0, 0))

    out = pl.pallas_call(
        _make_block_kernel(N_HEAD, has_mask),
        out_shape=jax.ShapeDtypeStruct((N, L, D), x.dtype),
        grid_spec=pltpu.PrefetchScalarGridSpec(
            num_scalar_prefetch=0,
            grid=grid,
            in_specs=in_specs,
            out_specs=out_specs,
        ),
        compiler_params=pltpu.CompilerParams(
            dimension_semantics=("parallel",),
            vmem_limit_bytes=32 * 1024 * 1024,
        ),
    )(*operands)

    return jnp.transpose(out, (1, 0, 2))                    # back to (L, N, D)


def reference_block(x, p, attn_mask=None):
    """Pure-JAX reference mirroring the PyTorch forward (exact erf GELU)."""
    L, N, D = x.shape
    H, hd = N_HEAD, HEAD_DIM

    def ln(t, w, b):
        mu = t.mean(-1, keepdims=True)
        var = ((t - mu) ** 2).mean(-1, keepdims=True)
        return (t - mu) / jnp.sqrt(var + LN_EPS) * w + b

    h = ln(x, p["ln1_w"], p["ln1_b"])
    qkv = h @ p["in_proj_w"].T + p["in_proj_b"]
    q, k, v = jnp.split(qkv, 3, axis=-1)
    to_heads = lambda t: t.reshape(L, N * H, hd).transpose(1, 0, 2)
    qh, kh, vh = to_heads(q), to_heads(k), to_heads(v)
    s = jnp.einsum("bld,bmd->blm", qh, kh) / math.sqrt(hd)
    if attn_mask is not None:
        s = s + attn_mask
    a = jax.nn.softmax(s, axis=-1)
    o = jnp.einsum("blm,bmd->bld", a, vh).transpose(1, 0, 2).reshape(L, N, D)
    o = o @ p["out_proj_w"].T + p["out_proj_b"]
    x = x + o
    h2 = ln(x, p["ln2_w"], p["ln2_b"])
    m = jax.nn.gelu(h2 @ p["fc_w"].T + p["fc_b"], approximate=False)
    m = m @ p["proj_w"].T + p["proj_b"]
    return x + m


if __name__ == "__main__":
    L, N = 8, 8
    key = jax.random.PRNGKey(0)
    kx, kp = jax.random.split(key)
    x = jax.random.normal(kx, (L, N, D_MODEL), jnp.float32)
    params = init_params(kp)

    # --- no-mask path (specialized kernel without a mask operand) -----------
    out = jax.block_until_ready(residual_attention_block(x, params, attn_mask=None))
    ref = reference_block(x, params, attn_mask=None)
    np.testing.assert_allclose(np.asarray(out), np.asarray(ref),
                               rtol=2e-3, atol=2e-3)

    # --- causal additive mask path -------------------------------------------
    causal = jnp.where(jnp.arange(L)[None, :] <= jnp.arange(L)[:, None],
                       0.0, -1e9).astype(jnp.float32)
    out_m = jax.block_until_ready(residual_attention_block(x, params, attn_mask=causal))
    ref_m = reference_block(x, params, attn_mask=causal)
    np.testing.assert_allclose(np.asarray(out_m), np.asarray(ref_m),
                               rtol=2e-3, atol=2e-3)

    print("KERNEL_OK")
</pallas_src>

<mosaic_0001>
module attributes {stable_mosaic.version = 11 : i64} {
  func.func @kernel(%arg0: i32, %arg1: memref<8x8x32xf32, #tpu.memory_space<vmem>>, %arg2: memref<32x96xf32, #tpu.memory_space<vmem>>, %arg3: memref<1x96xf32, #tpu.memory_space<vmem>>, %arg4: memref<32x32xf32, #tpu.memory_space<vmem>>, %arg5: memref<1x32xf32, #tpu.memory_space<vmem>>, %arg6: memref<1x32xf32, #tpu.memory_space<vmem>>, %arg7: memref<1x32xf32, #tpu.memory_space<vmem>>, %arg8: memref<1x32xf32, #tpu.memory_space<vmem>>, %arg9: memref<1x32xf32, #tpu.memory_space<vmem>>, %arg10: memref<32x128xf32, #tpu.memory_space<vmem>>, %arg11: memref<1x128xf32, #tpu.memory_space<vmem>>, %arg12: memref<128x32xf32, #tpu.memory_space<vmem>>, %arg13: memref<1x32xf32, #tpu.memory_space<vmem>>, %arg14: memref<8x8x32xf32, #tpu.memory_space<vmem>>) attributes {dimension_semantics = [#tpu.dimension_semantics<parallel>], iteration_bounds = array<i64: 1>, scalar_prefetch = 0 : i64, scratch_operands = 0 : i64, tpu.core_type = #tpu.core_type<tc>, window_params = [{transform_indices = @transform_0, window_bounds = array<i64: 8, 8, 32>}, {pipeline_mode = #tpu.pipeline_mode<synchronous>, transform_indices = @transform_1, window_bounds = array<i64: 32, 96>}, {pipeline_mode = #tpu.pipeline_mode<synchronous>, transform_indices = @transform_2, window_bounds = array<i64: 1, 96>}, {pipeline_mode = #tpu.pipeline_mode<synchronous>, transform_indices = @transform_3, window_bounds = array<i64: 32, 32>}, {pipeline_mode = #tpu.pipeline_mode<synchronous>, transform_indices = @transform_4, window_bounds = array<i64: 1, 32>}, {pipeline_mode = #tpu.pipeline_mode<synchronous>, transform_indices = @transform_5, window_bounds = array<i64: 1, 32>}, {pipeline_mode = #tpu.pipeline_mode<synchronous>, transform_indices = @transform_6, window_bounds = array<i64: 1, 32>}, {pipeline_mode = #tpu.pipeline_mode<synchronous>, transform_indices = @transform_7, window_bounds = array<i64: 1, 32>}, {pipeline_mode = #tpu.pipeline_mode<synchronous>, transform_indices = @transform_8, window_bounds = array<i64: 1, 32>}, {pipeline_mode = #tpu.pipeline_mode<synchronous>, transform_indices = @transform_9, window_bounds = array<i64: 32, 128>}, {pipeline_mode = #tpu.pipeline_mode<synchronous>, transform_indices = @transform_10, window_bounds = array<i64: 1, 128>}, {pipeline_mode = #tpu.pipeline_mode<synchronous>, transform_indices = @transform_11, window_bounds = array<i64: 128, 32>}, {pipeline_mode = #tpu.pipeline_mode<synchronous>, transform_indices = @transform_12, window_bounds = array<i64: 1, 32>}, {transform_indices = @transform_13, window_bounds = array<i64: 8, 8, 32>}]} {
    %c0 = arith.constant 0 : index
    %c0_0 = arith.constant 0 : index
    %c0_1 = arith.constant 0 : index
    %0 = vector.load %arg1[%c0, %c0_0, %c0_1] : memref<8x8x32xf32, #tpu.memory_space<vmem>>, vector<8x8x32xf32>
    %1 = vector.shape_cast %0 : vector<8x8x32xf32> to vector<64x32xf32>
    %c0_2 = arith.constant 0 : index
    %c0_3 = arith.constant 0 : index
    %2 = vector.load %arg6[%c0_2, %c0_3] : memref<1x32xf32, #tpu.memory_space<vmem>>, vector<1x32xf32>
    %c0_4 = arith.constant 0 : index
    %c0_5 = arith.constant 0 : index
    %3 = vector.load %arg7[%c0_4, %c0_5] : memref<1x32xf32, #tpu.memory_space<vmem>>, vector<1x32xf32>
    %cst = arith.constant dense<0.000000e+00> : vector<64xf32>
    %4 = vector.multi_reduction <add>, %1, %cst [1] : vector<64x32xf32> to vector<64xf32>
    %5 = vector.shape_cast %4 : vector<64xf32> to vector<64x1xf32>
    %cst_6 = arith.constant 3.200000e+01 : f32
    %6 = vector.broadcast %cst_6 : f32 to vector<64x1xf32>
    %7 = arith.divf %5, %6 : vector<64x1xf32>
    %8 = vector.broadcast %7 : vector<64x1xf32> to vector<64x32xf32>
    %9 = arith.subf %1, %8 : vector<64x32xf32>
    %10 = arith.mulf %9, %9 : vector<64x32xf32>
    %cst_7 = arith.constant dense<0.000000e+00> : vector<64xf32>
    %11 = vector.multi_reduction <add>, %10, %cst_7 [1] : vector<64x32xf32> to vector<64xf32>
    %12 = vector.shape_cast %11 : vector<64xf32> to vector<64x1xf32>
    %cst_8 = arith.constant 3.200000e+01 : f32
    %13 = vector.broadcast %cst_8 : f32 to vector<64x1xf32>
    %14 = arith.divf %12, %13 : vector<64x1xf32>
    %cst_9 = arith.constant 9.99999974E-6 : f32
    %15 = vector.broadcast %cst_9 : f32 to vector<64x1xf32>
    %16 = arith.addf %14, %15 : vector<64x1xf32>
    %17 = math.rsqrt %16 : vector<64x1xf32>
    %18 = vector.broadcast %17 : vector<64x1xf32> to vector<64x32xf32>
    %19 = arith.mulf %9, %18 : vector<64x32xf32>
    %20 = vector.broadcast %2 : vector<1x32xf32> to vector<64x32xf32>
    %21 = arith.mulf %19, %20 : vector<64x32xf32>
    %22 = vector.broadcast %3 : vector<1x32xf32> to vector<64x32xf32>
    %23 = arith.addf %21, %22 : vector<64x32xf32>
    %c0_10 = arith.constant 0 : index
    %c0_11 = arith.constant 0 : index
    %24 = vector.load %arg2[%c0_10, %c0_11] : memref<32x96xf32, #tpu.memory_space<vmem>>, vector<32x96xf32>
    %cst_12 = arith.constant dense<0.000000e+00> : vector<64x96xf32>
    %25 = tpu.matmul %23, %24, %cst_12 {dimension_numbers = #tpu.dot_dimension_numbers<[1], [0], [0], [1], [0, 0, 1, 1], [], []>} : vector<64x32xf32>, vector<32x96xf32>, vector<64x96xf32> -> vector<64x96xf32>
    %c0_13 = arith.constant 0 : index
    %c0_14 = arith.constant 0 : index
    %26 = vector.load %arg3[%c0_13, %c0_14] : memref<1x96xf32, #tpu.memory_space<vmem>>, vector<1x96xf32>
    %27 = vector.broadcast %26 : vector<1x96xf32> to vector<64x96xf32>
    %28 = arith.addf %25, %27 : vector<64x96xf32>
    %29 = vector.extract_strided_slice %28 {offsets = [0, 0], sizes = [64, 32], strides = [1, 1]} : vector<64x96xf32> to vector<64x32xf32>
    %cst_15 = arith.constant 0.353553385 : f32
    %30 = vector.broadcast %cst_15 : f32 to vector<64x32xf32>
    %31 = arith.mulf %29, %30 : vector<64x32xf32>
    %32 = vector.extract_strided_slice %28 {offsets = [0, 32], sizes = [64, 32], strides = [1, 1]} : vector<64x96xf32> to vector<64x32xf32>
    %33 = vector.extract_strided_slice %28 {offsets = [0, 64], sizes = [64, 32], strides = [1, 1]} : vector<64x96xf32> to vector<64x32xf32>
    %34 = vector.extract_strided_slice %31 {offsets = [0, 0], sizes = [64, 8], strides = [1, 1]} : vector<64x32xf32> to vector<64x8xf32>
    %35 = vector.shape_cast %34 : vector<64x8xf32> to vector<8x8x8xf32>
    %36 = vector.extract_strided_slice %32 {offsets = [0, 0], sizes = [64, 8], strides = [1, 1]} : vector<64x32xf32> to vector<64x8xf32>
    %37 = vector.shape_cast %36 : vector<64x8xf32> to vector<8x8x8xf32>
    %38 = vector.extract_strided_slice %33 {offsets = [0, 0], sizes = [64, 8], strides = [1, 1]} : vector<64x32xf32> to vector<64x8xf32>
    %39 = vector.shape_cast %38 : vector<64x8xf32> to vector<8x8x8xf32>
    "tpu.trace_start"() <{level = 10 : i32, message = "bqd,bkd->bqk"}> : () -> ()
    %cst_16 = arith.constant dense<0.000000e+00> : vector<8x8x8xf32>
    %40 = tpu.matmul %35, %37, %cst_16 {dimension_numbers = #tpu.dot_dimension_numbers<[2], [2], [1], [1], [0, 0, 0, 1, 1, 1], [0], [0]>} : vector<8x8x8xf32>, vector<8x8x8xf32>, vector<8x8x8xf32> -> vector<8x8x8xf32>
    "tpu.trace_stop"() : () -> ()
    %cst_17 = arith.constant dense<0xFF800000> : vector<8x8xf32>
    %41 = vector.multi_reduction <maximumf>, %40, %cst_17 [2] : vector<8x8x8xf32> to vector<8x8xf32>
    %42 = vector.shape_cast %41 : vector<8x8xf32> to vector<8x8x1xf32>
    %43 = vector.broadcast %42 : vector<8x8x1xf32> to vector<8x8x8xf32>
    %44 = arith.subf %40, %43 : vector<8x8x8xf32>
    %45 = math.exp %44 : vector<8x8x8xf32>
    %cst_18 = arith.constant dense<0.000000e+00> : vector<8x8xf32>
    %46 = vector.multi_reduction <add>, %45, %cst_18 [2] : vector<8x8x8xf32> to vector<8x8xf32>
    %47 = vector.shape_cast %46 : vector<8x8xf32> to vector<8x8x1xf32>
    %48 = tpu.reciprocal %47 {approx = true} : vector<8x8x1xf32> -> vector<8x8x1xf32>
    %49 = vector.broadcast %48 : vector<8x8x1xf32> to vector<8x8x8xf32>
    %50 = arith.mulf %45, %49 : vector<8x8x8xf32>
    "tpu.trace_start"() <{level = 10 : i32, message = "bqk,bkd->bqd"}> : () -> ()
    %cst_19 = arith.constant dense<0.000000e+00> : vector<8x8x8xf32>
    %51 = tpu.matmul %50, %39, %cst_19 {dimension_numbers = #tpu.dot_dimension_numbers<[2], [1], [1], [2], [0, 0, 0, 1, 1, 2], [0], [0]>} : vector<8x8x8xf32>, vector<8x8x8xf32>, vector<8x8x8xf32> -> vector<8x8x8xf32>
    "tpu.trace_stop"() : () -> ()
    %52 = vector.shape_cast %51 : vector<8x8x8xf32> to vector<64x8xf32>
    %53 = vector.extract_strided_slice %31 {offsets = [0, 8], sizes = [64, 8], strides = [1, 1]} : vector<64x32xf32> to vector<64x8xf32>
    %54 = vector.shape_cast %53 : vector<64x8xf32> to vector<8x8x8xf32>
    %55 = vector.extract_strided_slice %32 {offsets = [0, 8], sizes = [64, 8], strides = [1, 1]} : vector<64x32xf32> to vector<64x8xf32>
    %56 = vector.shape_cast %55 : vector<64x8xf32> to vector<8x8x8xf32>
    %57 = vector.extract_strided_slice %33 {offsets = [0, 8], sizes = [64, 8], strides = [1, 1]} : vector<64x32xf32> to vector<64x8xf32>
    %58 = vector.shape_cast %57 : vector<64x8xf32> to vector<8x8x8xf32>
    "tpu.trace_start"() <{level = 10 : i32, message = "bqd,bkd->bqk"}> : () -> ()
    %cst_20 = arith.constant dense<0.000000e+00> : vector<8x8x8xf32>
    %59 = tpu.matmul %54, %56, %cst_20 {dimension_numbers = #tpu.dot_dimension_numbers<[2], [2], [1], [1], [0, 0, 0, 1, 1, 1], [0], [0]>} : vector<8x8x8xf32>, vector<8x8x8xf32>, vector<8x8x8xf32> -> vector<8x8x8xf32>
    "tpu.trace_stop"() : () -> ()
    %cst_21 = arith.constant dense<0xFF800000> : vector<8x8xf32>
    %60 = vector.multi_reduction <maximumf>, %59, %cst_21 [2] : vector<8x8x8xf32> to vector<8x8xf32>
    %61 = vector.shape_cast %60 : vector<8x8xf32> to vector<8x8x1xf32>
    %62 = vector.broadcast %61 : vector<8x8x1xf32> to vector<8x8x8xf32>
    %63 = arith.subf %59, %62 : vector<8x8x8xf32>
    %64 = math.exp %63 : vector<8x8x8xf32>
    %cst_22 = arith.constant dense<0.000000e+00> : vector<8x8xf32>
    %65 = vector.multi_reduction <add>, %64, %cst_22 [2] : vector<8x8x8xf32> to vector<8x8xf32>
    %66 = vector.shape_cast %65 : vector<8x8xf32> to vector<8x8x1xf32>
    %67 = tpu.reciprocal %66 {approx = true} : vector<8x8x1xf32> -> vector<8x8x1xf32>
    %68 = vector.broadcast %67 : vector<8x8x1xf32> to vector<8x8x8xf32>
    %69 = arith.mulf %64, %68 : vector<8x8x8xf32>
    "tpu.trace_start"() <{level = 10 : i32, message = "bqk,bkd->bqd"}> : () -> ()
    %cst_23 = arith.constant dense<0.000000e+00> : vector<8x8x8xf32>
    %70 = tpu.matmul %69, %58, %cst_23 {dimension_numbers = #tpu.dot_dimension_numbers<[2], [1], [1], [2], [0, 0, 0, 1, 1, 2], [0], [0]>} : vector<8x8x8xf32>, vector<8x8x8xf32>, vector<8x8x8xf32> -> vector<8x8x8xf32>
    "tpu.trace_stop"() : () -> ()
    %71 = vector.shape_cast %70 : vector<8x8x8xf32> to vector<64x8xf32>
    %72 = vector.extract_strided_slice %31 {offsets = [0, 16], sizes = [64, 8], strides = [1, 1]} : vector<64x32xf32> to vector<64x8xf32>
    %73 = vector.shape_cast %72 : vector<64x8xf32> to vector<8x8x8xf32>
    %74 = vector.extract_strided_slice %32 {offsets = [0, 16], sizes = [64, 8], strides = [1, 1]} : vector<64x32xf32> to vector<64x8xf32>
    %75 = vector.shape_cast %74 : vector<64x8xf32> to vector<8x8x8xf32>
    %76 = vector.extract_strided_slice %33 {offsets = [0, 16], sizes = [64, 8], strides = [1, 1]} : vector<64x32xf32> to vector<64x8xf32>
    %77 = vector.shape_cast %76 : vector<64x8xf32> to vector<8x8x8xf32>
    "tpu.trace_start"() <{level = 10 : i32, message = "bqd,bkd->bqk"}> : () -> ()
    %cst_24 = arith.constant dense<0.000000e+00> : vector<8x8x8xf32>
    %78 = tpu.matmul %73, %75, %cst_24 {dimension_numbers = #tpu.dot_dimension_numbers<[2], [2], [1], [1], [0, 0, 0, 1, 1, 1], [0], [0]>} : vector<8x8x8xf32>, vector<8x8x8xf32>, vector<8x8x8xf32> -> vector<8x8x8xf32>
    "tpu.trace_stop"() : () -> ()
    %cst_25 = arith.constant dense<0xFF800000> : vector<8x8xf32>
    %79 = vector.multi_reduction <maximumf>, %78, %cst_25 [2] : vector<8x8x8xf32> to vector<8x8xf32>
    %80 = vector.shape_cast %79 : vector<8x8xf32> to vector<8x8x1xf32>
    %81 = vector.broadcast %80 : vector<8x8x1xf32> to vector<8x8x8xf32>
    %82 = arith.subf %78, %81 : vector<8x8x8xf32>
    %83 = math.exp %82 : vector<8x8x8xf32>
    %cst_26 = arith.constant dense<0.000000e+00> : vector<8x8xf32>
    %84 = vector.multi_reduction <add>, %83, %cst_26 [2] : vector<8x8x8xf32> to vector<8x8xf32>
    %85 = vector.shape_cast %84 : vector<8x8xf32> to vector<8x8x1xf32>
    %86 = tpu.reciprocal %85 {approx = true} : vector<8x8x1xf32> -> vector<8x8x1xf32>
    %87 = vector.broadcast %86 : vector<8x8x1xf32> to vector<8x8x8xf32>
    %88 = arith.mulf %83, %87 : vector<8x8x8xf32>
    "tpu.trace_start"() <{level = 10 : i32, message = "bqk,bkd->bqd"}> : () -> ()
    %cst_27 = arith.constant dense<0.000000e+00> : vector<8x8x8xf32>
    %89 = tpu.matmul %88, %77, %cst_27 {dimension_numbers = #tpu.dot_dimension_numbers<[2], [1], [1], [2], [0, 0, 0, 1, 1, 2], [0], [0]>} : vector<8x8x8xf32>, vector<8x8x8xf32>, vector<8x8x8xf32> -> vector<8x8x8xf32>
    "tpu.trace_stop"() : () -> ()
    %90 = vector.shape_cast %89 : vector<8x8x8xf32> to vector<64x8xf32>
    %91 = vector.extract_strided_slice %31 {offsets = [0, 24], sizes = [64, 8], strides = [1, 1]} : vector<64x32xf32> to vector<64x8xf32>
    %92 = vector.shape_cast %91 : vector<64x8xf32> to vector<8x8x8xf32>
    %93 = vector.extract_strided_slice %32 {offsets = [0, 24], sizes = [64, 8], strides = [1, 1]} : vector<64x32xf32> to vector<64x8xf32>
    %94 = vector.shape_cast %93 : vector<64x8xf32> to vector<8x8x8xf32>
    %95 = vector.extract_strided_slice %33 {offsets = [0, 24], sizes = [64, 8], strides = [1, 1]} : vector<64x32xf32> to vector<64x8xf32>
    %96 = vector.shape_cast %95 : vector<64x8xf32> to vector<8x8x8xf32>
    "tpu.trace_start"() <{level = 10 : i32, message = "bqd,bkd->bqk"}> : () -> ()
    %cst_28 = arith.constant dense<0.000000e+00> : vector<8x8x8xf32>
    %97 = tpu.matmul %92, %94, %cst_28 {dimension_numbers = #tpu.dot_dimension_numbers<[2], [2], [1], [1], [0, 0, 0, 1, 1, 1], [0], [0]>} : vector<8x8x8xf32>, vector<8x8x8xf32>, vector<8x8x8xf32> -> vector<8x8x8xf32>
    "tpu.trace_stop"() : () -> ()
    %cst_29 = arith.constant dense<0xFF800000> : vector<8x8xf32>
    %98 = vector.multi_reduction <maximumf>, %97, %cst_29 [2] : vector<8x8x8xf32> to vector<8x8xf32>
    %99 = vector.shape_cast %98 : vector<8x8xf32> to vector<8x8x1xf32>
    %100 = vector.broadcast %99 : vector<8x8x1xf32> to vector<8x8x8xf32>
    %101 = arith.subf %97, %100 : vector<8x8x8xf32>
    %102 = math.exp %101 : vector<8x8x8xf32>
    %cst_30 = arith.constant dense<0.000000e+00> : vector<8x8xf32>
    %103 = vector.multi_reduction <add>, %102, %cst_30 [2] : vector<8x8x8xf32> to vector<8x8xf32>
    %104 = vector.shape_cast %103 : vector<8x8xf32> to vector<8x8x1xf32>
    %105 = tpu.reciprocal %104 {approx = true} : vector<8x8x1xf32> -> vector<8x8x1xf32>
    %106 = vector.broadcast %105 : vector<8x8x1xf32> to vector<8x8x8xf32>
    %107 = arith.mulf %102, %106 : vector<8x8x8xf32>
    "tpu.trace_start"() <{level = 10 : i32, message = "bqk,bkd->bqd"}> : () -> ()
    %cst_31 = arith.constant dense<0.000000e+00> : vector<8x8x8xf32>
    %108 = tpu.matmul %107, %96, %cst_31 {dimension_numbers = #tpu.dot_dimension_numbers<[2], [1], [1], [2], [0, 0, 0, 1, 1, 2], [0], [0]>} : vector<8x8x8xf32>, vector<8x8x8xf32>, vector<8x8x8xf32> -> vector<8x8x8xf32>
    "tpu.trace_stop"() : () -> ()
    %109 = vector.shape_cast %108 : vector<8x8x8xf32> to vector<64x8xf32>
    %110 = tpu.concatenate %52, %71, %90, %109 in 1 : vector<64x8xf32>, vector<64x8xf32>, vector<64x8xf32>, vector<64x8xf32> -> vector<64x32xf32>
    %c0_32 = arith.constant 0 : index
    %c0_33 = arith.constant 0 : index
    %111 = vector.load %arg4[%c0_32, %c0_33] : memref<32x32xf32, #tpu.memory_space<vmem>>, vector<32x32xf32>
    %cst_34 = arith.constant dense<0.000000e+00> : vector<64x32xf32>
    %112 = tpu.matmul %110, %111, %cst_34 {dimension_numbers = #tpu.dot_dimension_numbers<[1], [0], [0], [1], [0, 0, 1, 1], [], []>} : vector<64x32xf32>, vector<32x32xf32>, vector<64x32xf32> -> vector<64x32xf32>
    %c0_35 = arith.constant 0 : index
    %c0_36 = arith.constant 0 : index
    %113 = vector.load %arg5[%c0_35, %c0_36] : memref<1x32xf32, #tpu.memory_space<vmem>>, vector<1x32xf32>
    %114 = vector.broadcast %113 : vector<1x32xf32> to vector<64x32xf32>
    %115 = arith.addf %112, %114 : vector<64x32xf32>
    %116 = arith.addf %1, %115 : vector<64x32xf32>
    %c0_37 = arith.constant 0 : index
    %c0_38 = arith.constant 0 : index
    %117 = vector.load %arg8[%c0_37, %c0_38] : memref<1x32xf32, #tpu.memory_space<vmem>>, vector<1x32xf32>
    %c0_39 = arith.constant 0 : index
    %c0_40 = arith.constant 0 : index
    %118 = vector.load %arg9[%c0_39, %c0_40] : memref<1x32xf32, #tpu.memory_space<vmem>>, vector<1x32xf32>
    %cst_41 = arith.constant dense<0.000000e+00> : vector<64xf32>
    %119 = vector.multi_reduction <add>, %116, %cst_41 [1] : vector<64x32xf32> to vector<64xf32>
    %120 = vector.shape_cast %119 : vector<64xf32> to vector<64x1xf32>
    %cst_42 = arith.constant 3.200000e+01 : f32
    %121 = vector.broadcast %cst_42 : f32 to vector<64x1xf32>
    %122 = arith.divf %120, %121 : vector<64x1xf32>
    %123 = vector.broadcast %122 : vector<64x1xf32> to vector<64x32xf32>
    %124 = arith.subf %116, %123 : vector<64x32xf32>
    %125 = arith.mulf %124, %124 : vector<64x32xf32>
    %cst_43 = arith.constant dense<0.000000e+00> : vector<64xf32>
    %126 = vector.multi_reduction <add>, %125, %cst_43 [1] : vector<64x32xf32> to vector<64xf32>
    %127 = vector.shape_cast %126 : vector<64xf32> to vector<64x1xf32>
    %cst_44 = arith.constant 3.200000e+01 : f32
    %128 = vector.broadcast %cst_44 : f32 to vector<64x1xf32>
    %129 = arith.divf %127, %128 : vector<64x1xf32>
    %cst_45 = arith.constant 9.99999974E-6 : f32
    %130 = vector.broadcast %cst_45 : f32 to vector<64x1xf32>
    %131 = arith.addf %129, %130 : vector<64x1xf32>
    %132 = math.rsqrt %131 : vector<64x1xf32>
    %133 = vector.broadcast %132 : vector<64x1xf32> to vector<64x32xf32>
    %134 = arith.mulf %124, %133 : vector<64x32xf32>
    %135 = vector.broadcast %117 : vector<1x32xf32> to vector<64x32xf32>
    %136 = arith.mulf %134, %135 : vector<64x32xf32>
    %137 = vector.broadcast %118 : vector<1x32xf32> to vector<64x32xf32>
    %138 = arith.addf %136, %137 : vector<64x32xf32>
    %c0_46 = arith.constant 0 : index
    %c0_47 = arith.constant 0 : index
    %139 = vector.load %arg10[%c0_46, %c0_47] : memref<32x128xf32, #tpu.memory_space<vmem>>, vector<32x128xf32>
    %cst_48 = arith.constant dense<0.000000e+00> : vector<64x128xf32>
    %140 = tpu.matmul %138, %139, %cst_48 {dimension_numbers = #tpu.dot_dimension_numbers<[1], [0], [0], [1], [0, 0, 1, 1], [], []>} : vector<64x32xf32>, vector<32x128xf32>, vector<64x128xf32> -> vector<64x128xf32>
    %c0_49 = arith.constant 0 : index
    %c0_50 = arith.constant 0 : index
    %141 = vector.load %arg11[%c0_49, %c0_50] : memref<1x128xf32, #tpu.memory_space<vmem>>, vector<1x128xf32>
    %142 = vector.broadcast %141 : vector<1x128xf32> to vector<64x128xf32>
    %143 = arith.addf %140, %142 : vector<64x128xf32>
    %cst_51 = arith.constant 5.000000e-01 : f32
    %144 = vector.broadcast %cst_51 : f32 to vector<64x128xf32>
    %145 = arith.mulf %144, %143 : vector<64x128xf32>
    %cst_52 = arith.constant 0.707106769 : f32
    %146 = vector.broadcast %cst_52 : f32 to vector<64x128xf32>
    %147 = arith.mulf %143, %146 : vector<64x128xf32>
    %148 = math.absf %147 : vector<64x128xf32>
    %cst_53 = arith.constant 0.327591091 : f32
    %149 = vector.broadcast %cst_53 : f32 to vector<64x128xf32>
    %150 = arith.mulf %149, %148 : vector<64x128xf32>
    %cst_54 = arith.constant 1.000000e+00 : f32
    %151 = vector.broadcast %cst_54 : f32 to vector<64x128xf32>
    %152 = arith.addf %151, %150 : vector<64x128xf32>
    %153 = tpu.reciprocal %152 : vector<64x128xf32> -> vector<64x128xf32>
    %cst_55 = arith.constant 1.06140542 : f32
    %154 = vector.broadcast %cst_55 : f32 to vector<64x128xf32>
    %155 = arith.mulf %154, %153 : vector<64x128xf32>
    %cst_56 = arith.constant -1.45315206 : f32
    %156 = vector.broadcast %cst_56 : f32 to vector<64x128xf32>
    %157 = arith.addf %155, %156 : vector<64x128xf32>
    %158 = arith.mulf %157, %153 : vector<64x128xf32>
    %cst_57 = arith.constant 1.42141378 : f32
    %159 = vector.broadcast %cst_57 : f32 to vector<64x128xf32>
    %160 = arith.addf %158, %159 : vector<64x128xf32>
    %161 = arith.mulf %160, %153 : vector<64x128xf32>
    %cst_58 = arith.constant -0.284496725 : f32
    %162 = vector.broadcast %cst_58 : f32 to vector<64x128xf32>
    %163 = arith.addf %161, %162 : vector<64x128xf32>
    %164 = arith.mulf %163, %153 : vector<64x128xf32>
    %cst_59 = arith.constant 0.254829586 : f32
    %165 = vector.broadcast %cst_59 : f32 to vector<64x128xf32>
    %166 = arith.addf %164, %165 : vector<64x128xf32>
    %167 = arith.mulf %166, %153 : vector<64x128xf32>
    %cst_60 = arith.constant 0.000000e+00 : f32
    %168 = vector.broadcast %cst_60 : f32 to vector<64x128xf32>
    %169 = arith.subf %168, %148 : vector<64x128xf32>
    %170 = arith.mulf %169, %148 : vector<64x128xf32>
    %171 = math.exp %170 : vector<64x128xf32>
    %172 = arith.mulf %167, %171 : vector<64x128xf32>
    %cst_61 = arith.constant 1.000000e+00 : f32
    %173 = vector.broadcast %cst_61 : f32 to vector<64x128xf32>
    %174 = arith.subf %173, %172 : vector<64x128xf32>
    %cst_62 = arith.constant 0.000000e+00 : f32
    %175 = vector.broadcast %cst_62 : f32 to vector<64x128xf32>
    %176 = arith.cmpf olt, %147, %175 : vector<64x128xf32>
    %cst_63 = arith.constant 0.000000e+00 : f32
    %177 = vector.broadcast %cst_63 : f32 to vector<64x128xf32>
    %178 = arith.subf %177, %174 : vector<64x128xf32>
    %179 = arith.select %176, %178, %174 : vector<64x128xi1>, vector<64x128xf32>
    %cst_64 = arith.constant 1.000000e+00 : f32
    %180 = vector.broadcast %cst_64 : f32 to vector<64x128xf32>
    %181 = arith.addf %180, %179 : vector<64x128xf32>
    %182 = arith.mulf %145, %181 : vector<64x128xf32>
    %c0_65 = arith.constant 0 : index
    %c0_66 = arith.constant 0 : index
    %183 = vector.load %arg12[%c0_65, %c0_66] : memref<128x32xf32, #tpu.memory_space<vmem>>, vector<128x32xf32>
    %cst_67 = arith.constant dense<0.000000e+00> : vector<64x32xf32>
    %184 = tpu.matmul %182, %183, %cst_67 {dimension_numbers = #tpu.dot_dimension_numbers<[1], [0], [0], [1], [0, 0, 1, 1], [], []>} : vector<64x128xf32>, vector<128x32xf32>, vector<64x32xf32> -> vector<64x32xf32>
    %c0_68 = arith.constant 0 : index
    %c0_69 = arith.constant 0 : index
    %185 = vector.load %arg13[%c0_68, %c0_69] : memref<1x32xf32, #tpu.memory_space<vmem>>, vector<1x32xf32>
    %186 = vector.broadcast %185 : vector<1x32xf32> to vector<64x32xf32>
    %187 = arith.addf %184, %186 : vector<64x32xf32>
    %188 = arith.addf %116, %187 : vector<64x32xf32>
    %189 = vector.shape_cast %188 : vector<64x32xf32> to vector<8x8x32xf32>
    %c0_70 = arith.constant 0 : index
    %c0_71 = arith.constant 0 : index
    %c0_72 = arith.constant 0 : index
    %190 = vector.load %arg14[%c0_70, %c0_71, %c0_72] : memref<8x8x32xf32, #tpu.memory_space<vmem>>, vector<8x8x32xf32>
    tpu.vector_store %arg14[%c0_70, %c0_71, %c0_72], %189 {strides = array<i32>} : memref<8x8x32xf32, #tpu.memory_space<vmem>>, vector<8x8x32xf32>,
    return
  }
  func.func @transform_0(%arg0: i32) -> (i32, i32, i32) {
    %c0_i32 = arith.constant 0 : i32
    %c0_i32_0 = arith.constant 0 : i32
    %c0_i32_1 = arith.constant 0 : i32
    return %arg0, %c0_i32, %c0_i32_0 : i32, i32, i32
  }
  func.func @transform_1(%arg0: i32) -> (i32, i32) {
    %c0_i32 = arith.constant 0 : i32
    %c0_i32_0 = arith.constant 0 : i32
    %c0_i32_1 = arith.constant 0 : i32
    return %c0_i32, %c0_i32_0 : i32, i32
  }
  func.func @transform_2(%arg0: i32) -> (i32, i32) {
    %c0_i32 = arith.constant 0 : i32
    %c0_i32_0 = arith.constant 0 : i32
    %c0_i32_1 = arith.constant 0 : i32
    return %c0_i32, %c0_i32_0 : i32, i32
  }
  func.func @transform_3(%arg0: i32) -> (i32, i32) {
    %c0_i32 = arith.constant 0 : i32
    %c0_i32_0 = arith.constant 0 : i32
    %c0_i32_1 = arith.constant 0 : i32
    return %c0_i32, %c0_i32_0 : i32, i32
  }
  func.func @transform_4(%arg0: i32) -> (i32, i32) {
    %c0_i32 = arith.constant 0 : i32
    %c0_i32_0 = arith.constant 0 : i32
    %c0_i32_1 = arith.constant 0 : i32
    return %c0_i32, %c0_i32_0 : i32, i32
  }
  func.func @transform_5(%arg0: i32) -> (i32, i32) {
    %c0_i32 = arith.constant 0 : i32
    %c0_i32_0 = arith.constant 0 : i32
    %c0_i32_1 = arith.constant 0 : i32
    return %c0_i32, %c0_i32_0 : i32, i32
  }
  func.func @transform_6(%arg0: i32) -> (i32, i32) {
    %c0_i32 = arith.constant 0 : i32
    %c0_i32_0 = arith.constant 0 : i32
    %c0_i32_1 = arith.constant 0 : i32
    return %c0_i32, %c0_i32_0 : i32, i32
  }
  func.func @transform_7(%arg0: i32) -> (i32, i32) {
    %c0_i32 = arith.constant 0 : i32
    %c0_i32_0 = arith.constant 0 : i32
    %c0_i32_1 = arith.constant 0 : i32
    return %c0_i32, %c0_i32_0 : i32, i32
  }
  func.func @transform_8(%arg0: i32) -> (i32, i32) {
    %c0_i32 = arith.constant 0 : i32
    %c0_i32_0 = arith.constant 0 : i32
    %c0_i32_1 = arith.constant 0 : i32
    return %c0_i32, %c0_i32_0 : i32, i32
  }
  func.func @transform_9(%arg0: i32) -> (i32, i32) {
    %c0_i32 = arith.constant 0 : i32
    %c0_i32_0 = arith.constant 0 : i32
    %c0_i32_1 = arith.constant 0 : i32
    return %c0_i32, %c0_i32_0 : i32, i32
  }
  func.func @transform_10(%arg0: i32) -> (i32, i32) {
    %c0_i32 = arith.constant 0 : i32
    %c0_i32_0 = arith.constant 0 : i32
    %c0_i32_1 = arith.constant 0 : i32
    return %c0_i32, %c0_i32_0 : i32, i32
  }
  func.func @transform_11(%arg0: i32) -> (i32, i32) {
    %c0_i32 = arith.constant 0 : i32
    %c0_i32_0 = arith.constant 0 : i32
    %c0_i32_1 = arith.constant 0 : i32
    return %c0_i32, %c0_i32_0 : i32, i32
  }
  func.func @transform_12(%arg0: i32) -> (i32, i32) {
    %c0_i32 = arith.constant 0 : i32
    %c0_i32_0 = arith.constant 0 : i32
    %c0_i32_1 = arith.constant 0 : i32
    return %c0_i32, %c0_i32_0 : i32, i32
  }
  func.func @transform_13(%arg0: i32) -> (i32, i32, i32) {
    %c0_i32 = arith.constant 0 : i32
    %c0_i32_0 = arith.constant 0 : i32
    %c0_i32_1 = arith.constant 0 : i32
    return %arg0, %c0_i32, %c0_i32_0 : i32, i32, i32
  }
}

</mosaic_0001>

<llo_original>
// kernel: tpu_custom_call.1
$region0: #{tpu_custom_call.1}
  #allocation0 [shape = 'u32[]', space=smem, size = 0x4, offset = 0x4, fixed_abs, tag = 'smem constant byte address 0x4 - core index']
  #allocation1 [shape = 'u32[72,128]{1,0:T(1,128)}', space=vmem, size = 0x9000, scoped, tag = 'internal scratch']
  %s0 = inlined_call_operand.vmem [shape: f32[8,8,32], index: 0, kind: input, shape index: {}]
  %s1 = inlined_call_operand.vmem [shape: f32[32,96], index: 1, kind: input, shape index: {}]
  %s2 = inlined_call_operand.vmem [shape: f32[1,96], index: 2, kind: input, shape index: {}]
  %s3 = inlined_call_operand.vmem [shape: f32[32,32], index: 3, kind: input, shape index: {}]
  %s4 = inlined_call_operand.vmem [shape: f32[1,32], index: 4, kind: input, shape index: {}]
  %s5 = inlined_call_operand.vmem [shape: f32[1,32], index: 5, kind: input, shape index: {}]
  %s6 = inlined_call_operand.vmem [shape: f32[1,32], index: 6, kind: input, shape index: {}]
  %s7 = inlined_call_operand.vmem [shape: f32[1,32], index: 7, kind: input, shape index: {}]
  %s8 = inlined_call_operand.vmem [shape: f32[1,32], index: 8, kind: input, shape index: {}]
  %s9 = inlined_call_operand.vmem [shape: f32[32,128], index: 9, kind: input, shape index: {}]
  %s10 = inlined_call_operand.vmem [shape: f32[1,128], index: 10, kind: input, shape index: {}]
  %s11 = inlined_call_operand.vmem [shape: f32[128,32], index: 11, kind: input, shape index: {}]
  %s12 = inlined_call_operand.vmem [shape: f32[1,32], index: 12, kind: input, shape index: {}]
  %s13 = inlined_call_operand.hbm [shape: f32[8,8,32], index: 13, kind: output, shape index: {}]
  %s14 = sld [smem:[#allocation0]]
  $region62: #{tpu_custom_call.1} parent=0
    _
  %s16 = ssub.s32 1, %s14
  %s17 = scalar_select 0, %s16, %s14
  $region1: #{tpu_custom_call.1} parent=0
    #allocation2 [shape = 'u8[32768]{0}', space=vmem, size = 0x8000, scoped, tag = 'output window, operand 0, single buffered']
    #allocation3 [shape = 's32[1]{0}', space=sflag, size = 0x4, scoped, tag = 'scoped memory for tpu_custom_call.1']
    %18 = vsyncpa [#allocation3], 0
    // Predicated region
    $region2: #{tpu_custom_call.1} parent=1 // pred_check
      _
    $region3: #{tpu_custom_call.1} parent=1 // pred_check_branch
      %20 = sbr.rel (0) target = $region5
    $region4: #{tpu_custom_call.1} parent=1 // pred_region
      _
    $region5: #{tpu_custom_call.1} parent=1 // pred_fallthru
      _
    // Predicated region
    $region6: #{tpu_custom_call.1} parent=1 // pred_check
      _
    $region7: #{tpu_custom_call.1} parent=1 // pred_check_branch
      %22 = sbr.rel (0) target = $region9
    $region8: #{tpu_custom_call.1} parent=1 // pred_region
      _
    $region9: #{tpu_custom_call.1} parent=1 // pred_fallthru
      _
    // Predicated region
    $region10: #{tpu_custom_call.1} parent=1 // pred_check
      _
    $region11: #{tpu_custom_call.1} parent=1 // pred_check_branch
      %24 = sbr.rel (0) target = $region13
    $region12: #{tpu_custom_call.1} parent=1 // pred_region
      _
    $region13: #{tpu_custom_call.1} parent=1 // pred_fallthru
      _
    // Predicated region
    $region14: #{tpu_custom_call.1} parent=1 // pred_check
      _
    $region15: #{tpu_custom_call.1} parent=1 // pred_check_branch
      %26 = sbr.rel (0) target = $region17
    $region16: #{tpu_custom_call.1} parent=1 // pred_region
      _
    $region17: #{tpu_custom_call.1} parent=1 // pred_fallthru
      _
    // Predicated region
    $region18: #{tpu_custom_call.1} parent=1 // pred_check
      _
    $region19: #{tpu_custom_call.1} parent=1 // pred_check_branch
      %28 = sbr.rel (0) target = $region21
    $region20: #{tpu_custom_call.1} parent=1 // pred_region
      _
    $region21: #{tpu_custom_call.1} parent=1 // pred_fallthru
      _
    // Predicated region
    $region22: #{tpu_custom_call.1} parent=1 // pred_check
      _
    $region23: #{tpu_custom_call.1} parent=1 // pred_check_branch
      %30 = sbr.rel (0) target = $region25
    $region24: #{tpu_custom_call.1} parent=1 // pred_region
      _
    $region25: #{tpu_custom_call.1} parent=1 // pred_fallthru
      _
    // Predicated region
    $region26: #{tpu_custom_call.1} parent=1 // pred_check
      _
    $region27: #{tpu_custom_call.1} parent=1 // pred_check_branch
      %32 = sbr.rel (0) target = $region29
    $region28: #{tpu_custom_call.1} parent=1 // pred_region
      _
    $region29: #{tpu_custom_call.1} parent=1 // pred_fallthru
      _
    // Predicated region
    $region30: #{tpu_custom_call.1} parent=1 // pred_check
      _
    $region31: #{tpu_custom_call.1} parent=1 // pred_check_branch
      %34 = sbr.rel (0) target = $region33
    $region32: #{tpu_custom_call.1} parent=1 // pred_region
      _
    $region33: #{tpu_custom_call.1} parent=1 // pred_fallthru
      _
    // Predicated region
    $region34: #{tpu_custom_call.1} parent=1 // pred_check
      _
    $region35: #{tpu_custom_call.1} parent=1 // pred_check_branch
      %36 = sbr.rel (0) target = $region37
    $region36: #{tpu_custom_call.1} parent=1 // pred_region
      _
    $region37: #{tpu_custom_call.1} parent=1 // pred_fallthru
      _
    // Predicated region
    $region38: #{tpu_custom_call.1} parent=1 // pred_check
      _
    $region39: #{tpu_custom_call.1} parent=1 // pred_check_branch
      %38 = sbr.rel (0) target = $region41
    $region40: #{tpu_custom_call.1} parent=1 // pred_region
      _
    $region41: #{tpu_custom_call.1} parent=1 // pred_fallthru
      _
    // Predicated region
    $region42: #{tpu_custom_call.1} parent=1 // pred_check
      _
    $region43: #{tpu_custom_call.1} parent=1 // pred_check_branch
      %40 = sbr.rel (0) target = $region45
    $region44: #{tpu_custom_call.1} parent=1 // pred_region
      _
    $region45: #{tpu_custom_call.1} parent=1 // pred_fallthru
      _
    // Predicated region
    $region46: #{tpu_custom_call.1} parent=1 // pred_check
      _
    $region47: #{tpu_custom_call.1} parent=1 // pred_check_branch
      %42 = sbr.rel (0) target = $region49
    $region48: #{tpu_custom_call.1} parent=1 // pred_region
      _
    $region49: #{tpu_custom_call.1} parent=1 // pred_fallthru
      _
    // Predicated region
    $region50: #{tpu_custom_call.1} parent=1 // pred_check
      _
    $region51: #{tpu_custom_call.1} parent=1 // pred_check_branch
      %44 = sbr.rel (0) target = $region53
    $region52: #{tpu_custom_call.1} parent=1 // pred_region
      _
    $region53: #{tpu_custom_call.1} parent=1 // pred_fallthru
      _
    %v45 = vld [vmem:[%s0] sm:$0xff]
    %v46 = vld [vmem:[%s0 + $0x8] sm:$0xff]
    %v47 = vld [vmem:[%s0 + $0x10] sm:$0xff]
    %v48 = vld [vmem:[%s0 + $0x18] sm:$0xff]
    %v49 = vld [vmem:[%s0 + $0x20] sm:$0xff]
    %v50 = vld [vmem:[%s0 + $0x28] sm:$0xff]
    %v51 = vld [vmem:[%s0 + $0x30] sm:$0xff]
    %v52 = vld [vmem:[%s0 + $0x38] sm:$0xff]
    %v53 = vld [vmem:[%s5] sm:$0x1]
    %v54 = vld [vmem:[%s6] sm:$0x1]
    %vm55 = vcmask 261120
    %v56 = vsel %vm55, %v45, 0.0
    %57 = vadd.xlane.f32.xlu0 %v56
    %v58 = vpop.xlane.xlu0 %57
    %v59 = vsel %vm55, %v46, 0.0
    %60 = vadd.xlane.f32.xlu0 %v59
    %v61 = vpop.xlane.xlu0 %60
    %v62 = vsel %vm55, %v47, 0.0
    %63 = vadd.xlane.f32.xlu0 %v62
    %v64 = vpop.xlane.xlu0 %63
    %v65 = vsel %vm55, %v48, 0.0
    %66 = vadd.xlane.f32.xlu0 %v65
    %v67 = vpop.xlane.xlu0 %66
    %v68 = vsel %vm55, %v49, 0.0
    %69 = vadd.xlane.f32.xlu0 %v68
    %v70 = vpop.xlane.xlu0 %69
    %v71 = vsel %vm55, %v50, 0.0
    %72 = vadd.xlane.f32.xlu0 %v71
    %v73 = vpop.xlane.xlu0 %72
    %v74 = vsel %vm55, %v51, 0.0
    %75 = vadd.xlane.f32.xlu0 %v74
    %v76 = vpop.xlane.xlu0 %75
    %v77 = vsel %vm55, %v52, 0.0
    %78 = vadd.xlane.f32.xlu0 %v77
    %v79 = vpop.xlane.xlu0 %78
    %v80 = vrcp.pop 32.0
    %v81 = vmul.f32 32.0, %v80
    %v82 = vsub.f32 1.0, %v81
    %v83 = vmul.f32 %v80, %v82
    %v84 = vadd.f32 %v80, %v83
    %vm85 = vweird.f32 %v80
    %v86 = vsel %vm85, %v80, %v84
    %v87 = vmul.f32 %v58, %v86
    %v88 = vmul.f32 %v61, %v86
    %v89 = vmul.f32 %v64, %v86
    %v90 = vmul.f32 %v67, %v86
    %v91 = vmul.f32 %v70, %v86
    %v92 = vmul.f32 %v73, %v86
    %v93 = vmul.f32 %v76, %v86
    %v94 = vmul.f32 %v79, %v86
    %v95 = vsub.f32 %v45, %v87
    %v96 = vsub.f32 %v46, %v88
    %v97 = vsub.f32 %v47, %v89
    %v98 = vsub.f32 %v48, %v90
    %v99 = vsub.f32 %v49, %v91
    %v100 = vsub.f32 %v50, %v92
    %v101 = vsub.f32 %v51, %v93
    %v102 = vsub.f32 %v52, %v94
    %v103 = vmul.f32 %v95, %v95
    %v104 = vmul.f32 %v96, %v96
    %v105 = vmul.f32 %v97, %v97
    %v106 = vmul.f32 %v98, %v98
    %v107 = vmul.f32 %v99, %v99
    %v108 = vmul.f32 %v100, %v100
    %v109 = vmul.f32 %v101, %v101
    %v110 = vmul.f32 %v102, %v102
    %v111 = vsel %vm55, %v103, 0.0
    %112 = vadd.xlane.f32.xlu0 %v111
    %v113 = vpop.xlane.xlu0 %112
    %v114 = vsel %vm55, %v104, 0.0
    %115 = vadd.xlane.f32.xlu0 %v114
    %v116 = vpop.xlane.xlu0 %115
    %v117 = vsel %vm55, %v105, 0.0
    %118 = vadd.xlane.f32.xlu0 %v117
    %v119 = vpop.xlane.xlu0 %118
    %v120 = vsel %vm55, %v106, 0.0
    %121 = vadd.xlane.f32.xlu0 %v120
    %v122 = vpop.xlane.xlu0 %121
    %v123 = vsel %vm55, %v107, 0.0
    %124 = vadd.xlane.f32.xlu0 %v123
    %v125 = vpop.xlane.xlu0 %124
    %v126 = vsel %vm55, %v108, 0.0
    %127 = vadd.xlane.f32.xlu0 %v126
    %v128 = vpop.xlane.xlu0 %127
    %v129 = vsel %vm55, %v109, 0.0
    %130 = vadd.xlane.f32.xlu0 %v129
    %v131 = vpop.xlane.xlu0 %130
    %v132 = vsel %vm55, %v110, 0.0
    %133 = vadd.xlane.f32.xlu0 %v132
    %v134 = vpop.xlane.xlu0 %133
    %v135 = vmul.f32 %v113, %v86
    %v136 = vmul.f32 %v116, %v86
    %v137 = vmul.f32 %v119, %v86
    %v138 = vmul.f32 %v122, %v86
    %v139 = vmul.f32 %v125, %v86
    %v140 = vmul.f32 %v128, %v86
    %v141 = vmul.f32 %v131, %v86
    %v142 = vmul.f32 %v134, %v86
    %v143 = vadd.f32 %v135, 1e-05
    %v144 = vadd.f32 %v136, 1e-05
    %v145 = vadd.f32 %v137, 1e-05
    %v146 = vadd.f32 %v138, 1e-05
    %v147 = vadd.f32 %v139, 1e-05
    %v148 = vadd.f32 %v140, 1e-05
    %v149 = vadd.f32 %v141, 1e-05
    %v150 = vadd.f32 %v142, 1e-05
    %v151 = vrsqrt.pop %v143
    %v152 = vmul.f32 %v151, %v143
    %v153 = vmul.f32 %v152, %v151
    %v154 = vmul.f32 0.5, %v153
    %v155 = vsub.f32 1.5, %v154
    %v156 = vmul.f32 %v151, %v155
    %vm157 = vweird.f32 %v143
    %vm158 = vweird.f32 %v151
    %vm159 = vmor %vm157, %vm158
    %v160 = vsel %vm159, %v151, %v156
    %v161 = vrsqrt.pop %v144
    %v162 = vmul.f32 %v161, %v144
    %v163 = vmul.f32 %v162, %v161
    %v164 = vmul.f32 0.5, %v163
    %v165 = vsub.f32 1.5, %v164
    %v166 = vmul.f32 %v161, %v165
    %vm167 = vweird.f32 %v144
    %vm168 = vweird.f32 %v161
    %vm169 = vmor %vm167, %vm168
    %v170 = vsel %vm169, %v161, %v166
    %v171 = vrsqrt.pop %v145
    %v172 = vmul.f32 %v171, %v145
    %v173 = vmul.f32 %v172, %v171
    %v174 = vmul.f32 0.5, %v173
    %v175 = vsub.f32 1.5, %v174
    %v176 = vmul.f32 %v171, %v175
    %vm177 = vweird.f32 %v145
    %vm178 = vweird.f32 %v171
    %vm179 = vmor %vm177, %vm178
    %v180 = vsel %vm179, %v171, %v176
    %v181 = vrsqrt.pop %v146
    %v182 = vmul.f32 %v181, %v146
    %v183 = vmul.f32 %v182, %v181
    %v184 = vmul.f32 0.5, %v183
    %v185 = vsub.f32 1.5, %v184
    %v186 = vmul.f32 %v181, %v185
    %vm187 = vweird.f32 %v146
    %vm188 = vweird.f32 %v181
    %vm189 = vmor %vm187, %vm188
    %v190 = vsel %vm189, %v181, %v186
    %v191 = vrsqrt.pop %v147
    %v192 = vmul.f32 %v191, %v147
    %v193 = vmul.f32 %v192, %v191
    %v194 = vmul.f32 0.5, %v193
    %v195 = vsub.f32 1.5, %v194
    %v196 = vmul.f32 %v191, %v195
    %vm197 = vweird.f32 %v147
    %vm198 = vweird.f32 %v191
    %vm199 = vmor %vm197, %vm198
    %v200 = vsel %vm199, %v191, %v196
    %v201 = vrsqrt.pop %v148
    %v202 = vmul.f32 %v201, %v148
    %v203 = vmul.f32 %v202, %v201
    %v204 = vmul.f32 0.5, %v203
    %v205 = vsub.f32 1.5, %v204
    %v206 = vmul.f32 %v201, %v205
    %vm207 = vweird.f32 %v148
    %vm208 = vweird.f32 %v201
    %vm209 = vmor %vm207, %vm208
    %v210 = vsel %vm209, %v201, %v206
    %v211 = vrsqrt.pop %v149
    %v212 = vmul.f32 %v211, %v149
    %v213 = vmul.f32 %v212, %v211
    %v214 = vmul.f32 0.5, %v213
    %v215 = vsub.f32 1.5, %v214
    %v216 = vmul.f32 %v211, %v215
    %vm217 = vweird.f32 %v149
    %vm218 = vweird.f32 %v211
    %vm219 = vmor %vm217, %vm218
    %v220 = vsel %vm219, %v211, %v216
    %v221 = vrsqrt.pop %v150
    %v222 = vmul.f32 %v221, %v150
    %v223 = vmul.f32 %v222, %v221
    %v224 = vmul.f32 0.5, %v223
    %v225 = vsub.f32 1.5, %v224
    %v226 = vmul.f32 %v221, %v225
    %vm227 = vweird.f32 %v150
    %vm228 = vweird.f32 %v221
    %vm229 = vmor %vm227, %vm228
    %v230 = vsel %vm229, %v221, %v226
    %v231 = vmul.f32 %v95, %v160
    %v232 = vmul.f32 %v96, %v170
    %v233 = vmul.f32 %v97, %v180
    %v234 = vmul.f32 %v98, %v190
    %v235 = vmul.f32 %v99, %v200
    %v236 = vmul.f32 %v100, %v210
    %v237 = vmul.f32 %v101, %v220
    %v238 = vmul.f32 %v102, %v230
    %v240 = vperm.slane %v53, 0
    %v242 = vmul.f32 %v231, %v240
    %v243 = vmul.f32 %v232, %v240
    %v244 = vmul.f32 %v233, %v240
    %v245 = vmul.f32 %v234, %v240
    %v246 = vmul.f32 %v235, %v240
    %v247 = vmul.f32 %v236, %v240
    %v248 = vmul.f32 %v237, %v240
    %v249 = vmul.f32 %v238, %v240
    %v251 = vperm.slane %v54, 0
    %v253 = vadd.f32 %v242, %v251
    %v254 = vadd.f32 %v243, %v251
    %v255 = vadd.f32 %v244, %v251
    %v256 = vadd.f32 %v245, %v251
    %v257 = vadd.f32 %v246, %v251
    %v258 = vadd.f32 %v247, %v251
    %v259 = vadd.f32 %v248, %v251
    %v260 = vadd.f32 %v249, %v251
    %v261 = vld [vmem:[%s1] sm:$0xff]
    %v262 = vld [vmem:[%s1 + $0x8] sm:$0xff]
    %v263 = vld [vmem:[%s1 + $0x10] sm:$0xff]
    %v264 = vld [vmem:[%s1 + $0x18] sm:$0xff]
    %v265 = vld [vmem:[%s2] sm:$0x1]
    %v267 = vperm.slane %v265, 0
    %v270 = vsel %vm55, %v253, 0
    %v273 = vsel %vm55, %v254, 0
    %v276 = vsel %vm55, %v255, 0
    %v279 = vsel %vm55, %v256, 0
    %v282 = vsel %vm55, %v257, 0
    %v285 = vsel %vm55, %v258, 0
    %v288 = vsel %vm55, %v259, 0
    %v291 = vsel %vm55, %v260, 0
    %293 = vmatpush.msra.mxu0 0.0
    %294 = vmatpush.msra.mxu0 0.0
    %295 = vmatpush.msra.mxu0 0.0
    %296 = vmatpush.msra.mxu0 0.0
    %297 = vmatpush.msra.mxu0 0.0
    %298 = vmatpush.msra.mxu0 0.0
    %299 = vmatpush.msra.mxu0 0.0
    %300 = vmatpush.msra.mxu0 0.0
    %301 = vmatpush.msra.mxu0 0.0
    %302 = vmatpush.msra.mxu0 0.0
    %303 = vmatpush.msra.mxu0 0.0
    %304 = vmatpush.msra.mxu0 0.0
    %305 = vmatpush.msra.mxu0 %v264
    %306 = vmatpush.msra.mxu0 %v263
    %307 = vmatpush.msra.mxu0 %v262
    %308 = vmatpush.msra.mxu0 %v261
    %309 = vmatmul.f32.gmra.mxu0 %v270
    %v310 = vpop.f32.mrf.mxu0
    %v311 = vadd.f32 %v267, %v310
    %312 = vmatmul.f32.gmra.mxu0 %v273
    %v313 = vpop.f32.mrf.mxu0
    %v314 = vadd.f32 %v267, %v313
    %315 = vmatmul.f32.gmra.mxu0 %v276
    %v316 = vpop.f32.mrf.mxu0
    %v317 = vadd.f32 %v267, %v316
    %318 = vmatmul.f32.gmra.mxu0 %v279
    %v319 = vpop.f32.mrf.mxu0
    %v320 = vadd.f32 %v267, %v319
    %321 = vmatmul.f32.gmra.mxu0 %v282
    %v322 = vpop.f32.mrf.mxu0
    %v323 = vadd.f32 %v267, %v322
    %324 = vmatmul.f32.gmra.mxu0 %v285
    %v325 = vpop.f32.mrf.mxu0
    %v326 = vadd.f32 %v267, %v325
    %327 = vmatmul.f32.gmra.mxu0 %v288
    %v328 = vpop.f32.mrf.mxu0
    %v329 = vadd.f32 %v267, %v328
    %330 = vmatmul.f32.gmra.mxu0 %v291
    %v331 = vpop.f32.mrf.mxu0
    %v332 = vadd.f32 %v267, %v331
    %333 = vdwg.mxu0
    %v334 = vmul.f32 %v311, 0.35355338
    %v335 = vmul.f32 %v314, 0.35355338
    %v336 = vmul.f32 %v317, 0.35355338
    %v337 = vmul.f32 %v320, 0.35355338
    %v338 = vmul.f32 %v323, 0.35355338
    %v339 = vmul.f32 %v326, 0.35355338
    %v340 = vmul.f32 %v329, 0.35355338
    %v341 = vmul.f32 %v332, 0.35355338
    %343 = vrot.lane.b32.xlu0 %v311, 96
    %v344 = vpop.permute.xlu0 %343
    %vm345 = vcmask 64512
    %v347 = vsel %vm345, %v334, 0
    %v349 = vsel %vm345, %v344, 0
    %351 = vmatpush.xpose.msra.mxu0 0.0
    %352 = vmatpush.xpose.msra.mxu0 0.0
    %353 = vmatpush.xpose.msra.mxu0 0.0
    %354 = vmatpush.xpose.msra.mxu0 0.0
    %355 = vmatpush.xpose.msra.mxu0 0.0
    %356 = vmatpush.xpose.msra.mxu0 0.0
    %357 = vmatpush.xpose.msra.mxu0 0.0
    %358 = vmatpush.xpose.msra.mxu0 0.0
    %359 = vmatpush.xpose.msra.mxu0 0.0
    %360 = vmatpush.xpose.msra.mxu0 0.0
    %361 = vmatpush.xpose.msra.mxu0 0.0
    %362 = vmatpush.xpose.msra.mxu0 0.0
    %363 = vmatpush.xpose.msra.mxu0 0.0
    %364 = vmatpush.xpose.msra.mxu0 0.0
    %365 = vmatpush.xpose.msra.mxu0 0.0
    %366 = vmatpush.xpose.msra.mxu0 %v349
    %367 = vmatmul.f32.gmra.mxu0 %v347
    %v368 = vpop.f32.mrf.mxu0
    %v369 = vadd.f32 0.0, %v368
    %370 = vdwg.mxu0
    %372 = vrot.lane.b32.xlu0 %v314, 96
    %v373 = vpop.permute.xlu0 %372
    %v375 = vsel %vm345, %v335, 0
    %v377 = vsel %vm345, %v373, 0
    %379 = vmatpush.xpose.msra.mxu0 0.0
    %380 = vmatpush.xpose.msra.mxu0 0.0
    %381 = vmatpush.xpose.msra.mxu0 0.0
    %382 = vmatpush.xpose.msra.mxu0 0.0
    %383 = vmatpush.xpose.msra.mxu0 0.0
    %384 = vmatpush.xpose.msra.mxu0 0.0
    %385 = vmatpush.xpose.msra.mxu0 0.0
    %386 = vmatpush.xpose.msra.mxu0 0.0
    %387 = vmatpush.xpose.msra.mxu0 0.0
    %388 = vmatpush.xpose.msra.mxu0 0.0
    %389 = vmatpush.xpose.msra.mxu0 0.0
    %390 = vmatpush.xpose.msra.mxu0 0.0
    %391 = vmatpush.xpose.msra.mxu0 0.0
    %392 = vmatpush.xpose.msra.mxu0 0.0
    %393 = vmatpush.xpose.msra.mxu0 0.0
    %394 = vmatpush.xpose.msra.mxu0 %v377
    %395 = vmatmul.f32.gmra.mxu0 %v375
    %v396 = vpop.f32.mrf.mxu0
    %v397 = vadd.f32 0.0, %v396
    %398 = vdwg.mxu0
    %400 = vrot.lane.b32.xlu0 %v317, 96
    %v401 = vpop.permute.xlu0 %400
    %v403 = vsel %vm345, %v336, 0
    %v405 = vsel %vm345, %v401, 0
    %407 = vmatpush.xpose.msra.mxu0 0.0
    %408 = vmatpush.xpose.msra.mxu0 0.0
    %409 = vmatpush.xpose.msra.mxu0 0.0
    %410 = vmatpush.xpose.msra.mxu0 0.0
    %411 = vmatpush.xpose.msra.mxu0 0.0
    %412 = vmatpush.xpose.msra.mxu0 0.0
    %413 = vmatpush.xpose.msra.mxu0 0.0
    %414 = vmatpush.xpose.msra.mxu0 0.0
    %415 = vmatpush.xpose.msra.mxu0 0.0
    %416 = vmatpush.xpose.msra.mxu0 0.0
    %417 = vmatpush.xpose.msra.mxu0 0.0
    %418 = vmatpush.xpose.msra.mxu0 0.0
    %419 = vmatpush.xpose.msra.mxu0 0.0
    %420 = vmatpush.xpose.msra.mxu0 0.0
    %421 = vmatpush.xpose.msra.mxu0 0.0
    %422 = vmatpush.xpose.msra.mxu0 %v405
    %423 = vmatmul.f32.gmra.mxu0 %v403
    %v424 = vpop.f32.mrf.mxu0
    %v425 = vadd.f32 0.0, %v424
    %426 = vdwg.mxu0
    %428 = vrot.lane.b32.xlu0 %v320, 96
    %v429 = vpop.permute.xlu0 %428
    %v431 = vsel %vm345, %v337, 0
    %v433 = vsel %vm345, %v429, 0
    %435 = vmatpush.xpose.msra.mxu0 0.0
    %436 = vmatpush.xpose.msra.mxu0 0.0
    %437 = vmatpush.xpose.msra.mxu0 0.0
    %438 = vmatpush.xpose.msra.mxu0 0.0
    %439 = vmatpush.xpose.msra.mxu0 0.0
    %440 = vmatpush.xpose.msra.mxu0 0.0
    %441 = vmatpush.xpose.msra.mxu0 0.0
    %442 = vmatpush.xpose.msra.mxu0 0.0
    %443 = vmatpush.xpose.msra.mxu0 0.0
    %444 = vmatpush.xpose.msra.mxu0 0.0
    %445 = vmatpush.xpose.msra.mxu0 0.0
    %446 = vmatpush.xpose.msra.mxu0 0.0
    %447 = vmatpush.xpose.msra.mxu0 0.0
    %448 = vmatpush.xpose.msra.mxu0 0.0
    %449 = vmatpush.xpose.msra.mxu0 0.0
    %450 = vmatpush.xpose.msra.mxu0 %v433
    %451 = vmatmul.f32.gmra.mxu0 %v431
    %v452 = vpop.f32.mrf.mxu0
    %v453 = vadd.f32 0.0, %v452
    %454 = vdwg.mxu0
    %456 = vrot.lane.b32.xlu0 %v323, 96
    %v457 = vpop.permute.xlu0 %456
    %v459 = vsel %vm345, %v338, 0
    %v461 = vsel %vm345, %v457, 0
    %463 = vmatpush.xpose.msra.mxu0 0.0
    %464 = vmatpush.xpose.msra.mxu0 0.0
    %465 = vmatpush.xpose.msra.mxu0 0.0
    %466 = vmatpush.xpose.msra.mxu0 0.0
    %467 = vmatpush.xpose.msra.mxu0 0.0
    %468 = vmatpush.xpose.msra.mxu0 0.0
    %469 = vmatpush.xpose.msra.mxu0 0.0
    %470 = vmatpush.xpose.msra.mxu0 0.0
    %471 = vmatpush.xpose.msra.mxu0 0.0
    %472 = vmatpush.xpose.msra.mxu0 0.0
    %473 = vmatpush.xpose.msra.mxu0 0.0
    %474 = vmatpush.xpose.msra.mxu0 0.0
    %475 = vmatpush.xpose.msra.mxu0 0.0
    %476 = vmatpush.xpose.msra.mxu0 0.0
    %477 = vmatpush.xpose.msra.mxu0 0.0
    %478 = vmatpush.xpose.msra.mxu0 %v461
    %479 = vmatmul.f32.gmra.mxu0 %v459
    %v480 = vpop.f32.mrf.mxu0
    %v481 = vadd.f32 0.0, %v480
    %482 = vdwg.mxu0
    %484 = vrot.lane.b32.xlu0 %v326, 96
    %v485 = vpop.permute.xlu0 %484
    %v487 = vsel %vm345, %v339, 0
    %v489 = vsel %vm345, %v485, 0
    %491 = vmatpush.xpose.msra.mxu0 0.0
    %492 = vmatpush.xpose.msra.mxu0 0.0
    %493 = vmatpush.xpose.msra.mxu0 0.0
    %494 = vmatpush.xpose.msra.mxu0 0.0
    %495 = vmatpush.xpose.msra.mxu0 0.0
    %496 = vmatpush.xpose.msra.mxu0 0.0
    %497 = vmatpush.xpose.msra.mxu0 0.0
    %498 = vmatpush.xpose.msra.mxu0 0.0
    %499 = vmatpush.xpose.msra.mxu0 0.0
    %500 = vmatpush.xpose.msra.mxu0 0.0
    %501 = vmatpush.xpose.msra.mxu0 0.0
    %502 = vmatpush.xpose.msra.mxu0 0.0
    %503 = vmatpush.xpose.msra.mxu0 0.0
    %504 = vmatpush.xpose.msra.mxu0 0.0
    %505 = vmatpush.xpose.msra.mxu0 0.0
    %506 = vmatpush.xpose.msra.mxu0 %v489
    %507 = vmatmul.f32.gmra.mxu0 %v487
    %v508 = vpop.f32.mrf.mxu0
    %v509 = vadd.f32 0.0, %v508
    %510 = vdwg.mxu0
    %512 = vrot.lane.b32.xlu0 %v329, 96
    %v513 = vpop.permute.xlu0 %512
    %v515 = vsel %vm345, %v340, 0
    %v517 = vsel %vm345, %v513, 0
    %519 = vmatpush.xpose.msra.mxu0 0.0
    %520 = vmatpush.xpose.msra.mxu0 0.0
    %521 = vmatpush.xpose.msra.mxu0 0.0
    %522 = vmatpush.xpose.msra.mxu0 0.0
    %523 = vmatpush.xpose.msra.mxu0 0.0
    %524 = vmatpush.xpose.msra.mxu0 0.0
    %525 = vmatpush.xpose.msra.mxu0 0.0
    %526 = vmatpush.xpose.msra.mxu0 0.0
    %527 = vmatpush.xpose.msra.mxu0 0.0
    %528 = vmatpush.xpose.msra.mxu0 0.0
    %529 = vmatpush.xpose.msra.mxu0 0.0
    %530 = vmatpush.xpose.msra.mxu0 0.0
    %531 = vmatpush.xpose.msra.mxu0 0.0
    %532 = vmatpush.xpose.msra.mxu0 0.0
    %533 = vmatpush.xpose.msra.mxu0 0.0
    %534 = vmatpush.xpose.msra.mxu0 %v517
    %535 = vmatmul.f32.gmra.mxu0 %v515
    %v536 = vpop.f32.mrf.mxu0
    %v537 = vadd.f32 0.0, %v536
    %538 = vdwg.mxu0
    %540 = vrot.lane.b32.xlu0 %v332, 96
    %v541 = vpop.permute.xlu0 %540
    %v543 = vsel %vm345, %v341, 0
    %v545 = vsel %vm345, %v541, 0
    %547 = vmatpush.xpose.msra.mxu0 0.0
    %548 = vmatpush.xpose.msra.mxu0 0.0
    %549 = vmatpush.xpose.msra.mxu0 0.0
    %550 = vmatpush.xpose.msra.mxu0 0.0
    %551 = vmatpush.xpose.msra.mxu0 0.0
    %552 = vmatpush.xpose.msra.mxu0 0.0
    %553 = vmatpush.xpose.msra.mxu0 0.0
    %554 = vmatpush.xpose.msra.mxu0 0.0
    %555 = vmatpush.xpose.msra.mxu0 0.0
    %556 = vmatpush.xpose.msra.mxu0 0.0
    %557 = vmatpush.xpose.msra.mxu0 0.0
    %558 = vmatpush.xpose.msra.mxu0 0.0
    %559 = vmatpush.xpose.msra.mxu0 0.0
    %560 = vmatpush.xpose.msra.mxu0 0.0
    %561 = vmatpush.xpose.msra.mxu0 0.0
    %562 = vmatpush.xpose.msra.mxu0 %v545
    %563 = vmatmul.f32.gmra.mxu0 %v543
    %v564 = vpop.f32.mrf.mxu0
    %v565 = vadd.f32 0.0, %v564
    %566 = vdwg.mxu0
    %v567 = vsel %vm345, %v369, -inf
    %568 = vmax.xlane.f32.xlu0 %v567
    %v569 = vpop.xlane.xlu0 %568
    %v570 = vsel %vm345, %v397, -inf
    %571 = vmax.xlane.f32.xlu0 %v570
    %v572 = vpop.xlane.xlu0 %571
    %v573 = vsel %vm345, %v425, -inf
    %574 = vmax.xlane.f32.xlu0 %v573
    %v575 = vpop.xlane.xlu0 %574
    %v576 = vsel %vm345, %v453, -inf
    %577 = vmax.xlane.f32.xlu0 %v576
    %v578 = vpop.xlane.xlu0 %577
    %v579 = vsel %vm345, %v481, -inf
    %580 = vmax.xlane.f32.xlu0 %v579
    %v581 = vpop.xlane.xlu0 %580
    %v582 = vsel %vm345, %v509, -inf
    %583 = vmax.xlane.f32.xlu0 %v582
    %v584 = vpop.xlane.xlu0 %583
    %v585 = vsel %vm345, %v537, -inf
    %586 = vmax.xlane.f32.xlu0 %v585
    %v587 = vpop.xlane.xlu0 %586
    %v588 = vsel %vm345, %v565, -inf
    %589 = vmax.xlane.f32.xlu0 %v588
    %v590 = vpop.xlane.xlu0 %589
    %v591 = vsub.f32 %v369, %v569
    %v592 = vsub.f32 %v397, %v572
    %v593 = vsub.f32 %v425, %v575
    %v594 = vsub.f32 %v453, %v578
    %v595 = vsub.f32 %v481, %v581
    %v596 = vsub.f32 %v509, %v584
    %v597 = vsub.f32 %v537, %v587
    %v598 = vsub.f32 %v565, %v590
    %v599 = vmul.f32 %v591, 1.442695
    %v600 = vpow.pop %v599
    %v601 = vmul.f32 %v592, 1.442695
    %v602 = vpow.pop %v601
    %v603 = vmul.f32 %v593, 1.442695
    %v604 = vpow.pop %v603
    %v605 = vmul.f32 %v594, 1.442695
    %v606 = vpow.pop %v605
    %v607 = vmul.f32 %v595, 1.442695
    %v608 = vpow.pop %v607
    %v609 = vmul.f32 %v596, 1.442695
    %v610 = vpow.pop %v609
    %v611 = vmul.f32 %v597, 1.442695
    %v612 = vpow.pop %v611
    %v613 = vmul.f32 %v598, 1.442695
    %v614 = vpow.pop %v613
    %v615 = vsel %vm345, %v600, 0.0
    %616 = vadd.xlane.f32.xlu0 %v615
    %v617 = vpop.xlane.xlu0 %616
    %v618 = vsel %vm345, %v602, 0.0
    %619 = vadd.xlane.f32.xlu0 %v618
    %v620 = vpop.xlane.xlu0 %619
    %v621 = vsel %vm345, %v604, 0.0
    %622 = vadd.xlane.f32.xlu0 %v621
    %v623 = vpop.xlane.xlu0 %622
    %v624 = vsel %vm345, %v606, 0.0
    %625 = vadd.xlane.f32.xlu0 %v624
    %v626 = vpop.xlane.xlu0 %625
    %v627 = vsel %vm345, %v608, 0.0
    %628 = vadd.xlane.f32.xlu0 %v627
    %v629 = vpop.xlane.xlu0 %628
    %v630 = vsel %vm345, %v610, 0.0
    %631 = vadd.xlane.f32.xlu0 %v630
    %v632 = vpop.xlane.xlu0 %631
    %v633 = vsel %vm345, %v612, 0.0
    %634 = vadd.xlane.f32.xlu0 %v633
    %v635 = vpop.xlane.xlu0 %634
    %v636 = vsel %vm345, %v614, 0.0
    %637 = vadd.xlane.f32.xlu0 %v636
    %v638 = vpop.xlane.xlu0 %637
    %v639 = vrcp.pop %v617
    %v640 = vrcp.pop %v620
    %v641 = vrcp.pop %v623
    %v642 = vrcp.pop %v626
    %v643 = vrcp.pop %v629
    %v644 = vrcp.pop %v632
    %v645 = vrcp.pop %v635
    %v646 = vrcp.pop %v638
    %v647 = vmul.f32 %v600, %v639
    %v648 = vmul.f32 %v602, %v640
    %v649 = vmul.f32 %v604, %v641
    %v650 = vmul.f32 %v606, %v642
    %v651 = vmul.f32 %v608, %v643
    %v652 = vmul.f32 %v610, %v644
    %v653 = vmul.f32 %v612, %v645
    %v654 = vmul.f32 %v614, %v646
    %655 = vrot.lane.b32.xlu0 %v311, 64
    %v656 = vpop.permute.xlu0 %655
    %v659 = vsel %vm345, %v647, 0
    %661 = vmatpush.msra.mxu0 0.0
    %662 = vmatpush.msra.mxu0 0.0
    %663 = vmatpush.msra.mxu0 0.0
    %664 = vmatpush.msra.mxu0 0.0
    %665 = vmatpush.msra.mxu0 0.0
    %666 = vmatpush.msra.mxu0 0.0
    %667 = vmatpush.msra.mxu0 0.0
    %668 = vmatpush.msra.mxu0 0.0
    %669 = vmatpush.msra.mxu0 0.0
    %670 = vmatpush.msra.mxu0 0.0
    %671 = vmatpush.msra.mxu0 0.0
    %672 = vmatpush.msra.mxu0 0.0
    %673 = vmatpush.msra.mxu0 0.0
    %674 = vmatpush.msra.mxu0 0.0
    %675 = vmatpush.msra.mxu0 0.0
    %676 = vmatpush.msra.mxu0 %v656
    %677 = vmatmul.f32.gmra.mxu0 %v659
    %v678 = vpop.f32.mrf.mxu0
    %v679 = vadd.f32 0.0, %v678
    %680 = vdwg.mxu0
    %681 = vrot.lane.b32.xlu0 %v314, 64
    %v682 = vpop.permute.xlu0 %681
    %v685 = vsel %vm345, %v648, 0
    %687 = vmatpush.msra.mxu0 0.0
    %688 = vmatpush.msra.mxu0 0.0
    %689 = vmatpush.msra.mxu0 0.0
    %690 = vmatpush.msra.mxu0 0.0
    %691 = vmatpush.msra.mxu0 0.0
    %692 = vmatpush.msra.mxu0 0.0
    %693 = vmatpush.msra.mxu0 0.0
    %694 = vmatpush.msra.mxu0 0.0
    %695 = vmatpush.msra.mxu0 0.0
    %696 = vmatpush.msra.mxu0 0.0
    %697 = vmatpush.msra.mxu0 0.0
    %698 = vmatpush.msra.mxu0 0.0
    %699 = vmatpush.msra.mxu0 0.0
    %700 = vmatpush.msra.mxu0 0.0
    %701 = vmatpush.msra.mxu0 0.0
    %702 = vmatpush.msra.mxu0 %v682
    %703 = vmatmul.f32.gmra.mxu0 %v685
    %v704 = vpop.f32.mrf.mxu0
    %v705 = vadd.f32 0.0, %v704
    %706 = vdwg.mxu0
    %707 = vrot.lane.b32.xlu0 %v317, 64
    %v708 = vpop.permute.xlu0 %707
    %v711 = vsel %vm345, %v649, 0
    %713 = vmatpush.msra.mxu0 0.0
    %714 = vmatpush.msra.mxu0 0.0
    %715 = vmatpush.msra.mxu0 0.0
    %716 = vmatpush.msra.mxu0 0.0
    %717 = vmatpush.msra.mxu0 0.0
    %718 = vmatpush.msra.mxu0 0.0
    %719 = vmatpush.msra.mxu0 0.0
    %720 = vmatpush.msra.mxu0 0.0
    %721 = vmatpush.msra.mxu0 0.0
    %722 = vmatpush.msra.mxu0 0.0
    %723 = vmatpush.msra.mxu0 0.0
    %724 = vmatpush.msra.mxu0 0.0
    %725 = vmatpush.msra.mxu0 0.0
    %726 = vmatpush.msra.mxu0 0.0
    %727 = vmatpush.msra.mxu0 0.0
    %728 = vmatpush.msra.mxu0 %v708
    %729 = vmatmul.f32.gmra.mxu0 %v711
    %v730 = vpop.f32.mrf.mxu0
    %v731 = vadd.f32 0.0, %v730
    %732 = vdwg.mxu0
    %733 = vrot.lane.b32.xlu0 %v320, 64
    %v734 = vpop.permute.xlu0 %733
    %v737 = vsel %vm345, %v650, 0
    %739 = vmatpush.msra.mxu0 0.0
    %740 = vmatpush.msra.mxu0 0.0
    %741 = vmatpush.msra.mxu0 0.0
    %742 = vmatpush.msra.mxu0 0.0
    %743 = vmatpush.msra.mxu0 0.0
    %744 = vmatpush.msra.mxu0 0.0
    %745 = vmatpush.msra.mxu0 0.0
    %746 = vmatpush.msra.mxu0 0.0
    %747 = vmatpush.msra.mxu0 0.0
    %748 = vmatpush.msra.mxu0 0.0
    %749 = vmatpush.msra.mxu0 0.0
    %750 = vmatpush.msra.mxu0 0.0
    %751 = vmatpush.msra.mxu0 0.0
    %752 = vmatpush.msra.mxu0 0.0
    %753 = vmatpush.msra.mxu0 0.0
    %754 = vmatpush.msra.mxu0 %v734
    %755 = vmatmul.f32.gmra.mxu0 %v737
    %v756 = vpop.f32.mrf.mxu0
    %v757 = vadd.f32 0.0, %v756
    %758 = vdwg.mxu0
    %759 = vrot.lane.b32.xlu0 %v323, 64
    %v760 = vpop.permute.xlu0 %759
    %v763 = vsel %vm345, %v651, 0
    %765 = vmatpush.msra.mxu0 0.0
    %766 = vmatpush.msra.mxu0 0.0
    %767 = vmatpush.msra.mxu0 0.0
    %768 = vmatpush.msra.mxu0 0.0
    %769 = vmatpush.msra.mxu0 0.0
    %770 = vmatpush.msra.mxu0 0.0
    %771 = vmatpush.msra.mxu0 0.0
    %772 = vmatpush.msra.mxu0 0.0
    %773 = vmatpush.msra.mxu0 0.0
    %774 = vmatpush.msra.mxu0 0.0
    %775 = vmatpush.msra.mxu0 0.0
    %776 = vmatpush.msra.mxu0 0.0
    %777 = vmatpush.msra.mxu0 0.0
    %778 = vmatpush.msra.mxu0 0.0
    %779 = vmatpush.msra.mxu0 0.0
    %780 = vmatpush.msra.mxu0 %v760
    %781 = vmatmul.f32.gmra.mxu0 %v763
    %v782 = vpop.f32.mrf.mxu0
    %v783 = vadd.f32 0.0, %v782
    %784 = vdwg.mxu0
    %785 = vrot.lane.b32.xlu0 %v326, 64
    %v786 = vpop.permute.xlu0 %785
    %v789 = vsel %vm345, %v652, 0
    %791 = vmatpush.msra.mxu0 0.0
    %792 = vmatpush.msra.mxu0 0.0
    %793 = vmatpush.msra.mxu0 0.0
    %794 = vmatpush.msra.mxu0 0.0
    %795 = vmatpush.msra.mxu0 0.0
    %796 = vmatpush.msra.mxu0 0.0
    %797 = vmatpush.msra.mxu0 0.0
    %798 = vmatpush.msra.mxu0 0.0
    %799 = vmatpush.msra.mxu0 0.0
    %800 = vmatpush.msra.mxu0 0.0
    %801 = vmatpush.msra.mxu0 0.0
    %802 = vmatpush.msra.mxu0 0.0
    %803 = vmatpush.msra.mxu0 0.0
    %804 = vmatpush.msra.mxu0 0.0
    %805 = vmatpush.msra.mxu0 0.0
    %806 = vmatpush.msra.mxu0 %v786
    %807 = vmatmul.f32.gmra.mxu0 %v789
    %v808 = vpop.f32.mrf.mxu0
    %v809 = vadd.f32 0.0, %v808
    %810 = vdwg.mxu0
    %811 = vrot.lane.b32.xlu0 %v329, 64
    %v812 = vpop.permute.xlu0 %811
    %v815 = vsel %vm345, %v653, 0
    %817 = vmatpush.msra.mxu0 0.0
    %818 = vmatpush.msra.mxu0 0.0
    %819 = vmatpush.msra.mxu0 0.0
    %820 = vmatpush.msra.mxu0 0.0
    %821 = vmatpush.msra.mxu0 0.0
    %822 = vmatpush.msra.mxu0 0.0
    %823 = vmatpush.msra.mxu0 0.0
    %824 = vmatpush.msra.mxu0 0.0
    %825 = vmatpush.msra.mxu0 0.0
    %826 = vmatpush.msra.mxu0 0.0
    %827 = vmatpush.msra.mxu0 0.0
    %828 = vmatpush.msra.mxu0 0.0
    %829 = vmatpush.msra.mxu0 0.0
    %830 = vmatpush.msra.mxu0 0.0
    %831 = vmatpush.msra.mxu0 0.0
    %832 = vmatpush.msra.mxu0 %v812
    %833 = vmatmul.f32.gmra.mxu0 %v815
    %v834 = vpop.f32.mrf.mxu0
    %v835 = vadd.f32 0.0, %v834
    %836 = vdwg.mxu0
    %837 = vrot.lane.b32.xlu0 %v332, 64
    %v838 = vpop.permute.xlu0 %837
    %v841 = vsel %vm345, %v654, 0
    %843 = vmatpush.msra.mxu0 0.0
    %844 = vmatpush.msra.mxu0 0.0
    %845 = vmatpush.msra.mxu0 0.0
    %846 = vmatpush.msra.mxu0 0.0
    %847 = vmatpush.msra.mxu0 0.0
    %848 = vmatpush.msra.mxu0 0.0
    %849 = vmatpush.msra.mxu0 0.0
    %850 = vmatpush.msra.mxu0 0.0
    %851 = vmatpush.msra.mxu0 0.0
    %852 = vmatpush.msra.mxu0 0.0
    %853 = vmatpush.msra.mxu0 0.0
    %854 = vmatpush.msra.mxu0 0.0
    %855 = vmatpush.msra.mxu0 0.0
    %856 = vmatpush.msra.mxu0 0.0
    %857 = vmatpush.msra.mxu0 0.0
    %858 = vmatpush.msra.mxu0 %v838
    %859 = vmatmul.f32.gmra.mxu0 %v841
    %v860 = vpop.f32.mrf.mxu0
    %v861 = vadd.f32 0.0, %v860
    %862 = vdwg.mxu0
    %863 = vrot.lane.b32.xlu0 %v334, 120
    %v864 = vpop.permute.xlu0 %863
    %865 = vrot.lane.b32.xlu0 %v311, 88
    %v866 = vpop.permute.xlu0 %865
    %v867 = vsel %vm345, %v864, 0
    %v869 = vsel %vm345, %v866, 0
    %871 = vmatpush.xpose.msra.mxu0 0.0
    %872 = vmatpush.xpose.msra.mxu0 0.0
    %873 = vmatpush.xpose.msra.mxu0 0.0
    %874 = vmatpush.xpose.msra.mxu0 0.0
    %875 = vmatpush.xpose.msra.mxu0 0.0
    %876 = vmatpush.xpose.msra.mxu0 0.0
    %877 = vmatpush.xpose.msra.mxu0 0.0
    %878 = vmatpush.xpose.msra.mxu0 0.0
    %879 = vmatpush.xpose.msra.mxu0 0.0
    %880 = vmatpush.xpose.msra.mxu0 0.0
    %881 = vmatpush.xpose.msra.mxu0 0.0
    %882 = vmatpush.xpose.msra.mxu0 0.0
    %883 = vmatpush.xpose.msra.mxu0 0.0
    %884 = vmatpush.xpose.msra.mxu0 0.0
    %885 = vmatpush.xpose.msra.mxu0 0.0
    %886 = vmatpush.xpose.msra.mxu0 %v869
    %887 = vmatmul.f32.gmra.mxu0 %v867
    %v888 = vpop.f32.mrf.mxu0
    %v889 = vadd.f32 0.0, %v888
    %890 = vdwg.mxu0
    %891 = vrot.lane.b32.xlu0 %v335, 120
    %v892 = vpop.permute.xlu0 %891
    %893 = vrot.lane.b32.xlu0 %v314, 88
    %v894 = vpop.permute.xlu0 %893
    %v895 = vsel %vm345, %v892, 0
    %v897 = vsel %vm345, %v894, 0
    %899 = vmatpush.xpose.msra.mxu0 0.0
    %900 = vmatpush.xpose.msra.mxu0 0.0
    %901 = vmatpush.xpose.msra.mxu0 0.0
    %902 = vmatpush.xpose.msra.mxu0 0.0
    %903 = vmatpush.xpose.msra.mxu0 0.0
    %904 = vmatpush.xpose.msra.mxu0 0.0
    %905 = vmatpush.xpose.msra.mxu0 0.0
    %906 = vmatpush.xpose.msra.mxu0 0.0
    %907 = vmatpush.xpose.msra.mxu0 0.0
    %908 = vmatpush.xpose.msra.mxu0 0.0
    %909 = vmatpush.xpose.msra.mxu0 0.0
    %910 = vmatpush.xpose.msra.mxu0 0.0
    %911 = vmatpush.xpose.msra.mxu0 0.0
    %912 = vmatpush.xpose.msra.mxu0 0.0
    %913 = vmatpush.xpose.msra.mxu0 0.0
    %914 = vmatpush.xpose.msra.mxu0 %v897
    %915 = vmatmul.f32.gmra.mxu0 %v895
    %v916 = vpop.f32.mrf.mxu0
    %v917 = vadd.f32 0.0, %v916
    %918 = vdwg.mxu0
    %919 = vrot.lane.b32.xlu0 %v336, 120
    %v920 = vpop.permute.xlu0 %919
    %921 = vrot.lane.b32.xlu0 %v317, 88
    %v922 = vpop.permute.xlu0 %921
    %v923 = vsel %vm345, %v920, 0
    %v925 = vsel %vm345, %v922, 0
    %927 = vmatpush.xpose.msra.mxu0 0.0
    %928 = vmatpush.xpose.msra.mxu0 0.0
    %929 = vmatpush.xpose.msra.mxu0 0.0
    %930 = vmatpush.xpose.msra.mxu0 0.0
    %931 = vmatpush.xpose.msra.mxu0 0.0
    %932 = vmatpush.xpose.msra.mxu0 0.0
    %933 = vmatpush.xpose.msra.mxu0 0.0
    %934 = vmatpush.xpose.msra.mxu0 0.0
    %935 = vmatpush.xpose.msra.mxu0 0.0
    %936 = vmatpush.xpose.msra.mxu0 0.0
    %937 = vmatpush.xpose.msra.mxu0 0.0
    %938 = vmatpush.xpose.msra.mxu0 0.0
    %939 = vmatpush.xpose.msra.mxu0 0.0
    %940 = vmatpush.xpose.msra.mxu0 0.0
    %941 = vmatpush.xpose.msra.mxu0 0.0
    %942 = vmatpush.xpose.msra.mxu0 %v925
    %943 = vmatmul.f32.gmra.mxu0 %v923
    %v944 = vpop.f32.mrf.mxu0
    %v945 = vadd.f32 0.0, %v944
    %946 = vdwg.mxu0
    %947 = vrot.lane.b32.xlu0 %v337, 120
    %v948 = vpop.permute.xlu0 %947
    %949 = vrot.lane.b32.xlu0 %v320, 88
    %v950 = vpop.permute.xlu0 %949
    %v951 = vsel %vm345, %v948, 0
    %v953 = vsel %vm345, %v950, 0
    %955 = vmatpush.xpose.msra.mxu0 0.0
    %956 = vmatpush.xpose.msra.mxu0 0.0
    %957 = vmatpush.xpose.msra.mxu0 0.0
    %958 = vmatpush.xpose.msra.mxu0 0.0
    %959 = vmatpush.xpose.msra.mxu0 0.0
    %960 = vmatpush.xpose.msra.mxu0 0.0
    %961 = vmatpush.xpose.msra.mxu0 0.0
    %962 = vmatpush.xpose.msra.mxu0 0.0
    %963 = vmatpush.xpose.msra.mxu0 0.0
    %964 = vmatpush.xpose.msra.mxu0 0.0
    %965 = vmatpush.xpose.msra.mxu0 0.0
    %966 = vmatpush.xpose.msra.mxu0 0.0
    %967 = vmatpush.xpose.msra.mxu0 0.0
    %968 = vmatpush.xpose.msra.mxu0 0.0
    %969 = vmatpush.xpose.msra.mxu0 0.0
    %970 = vmatpush.xpose.msra.mxu0 %v953
    %971 = vmatmul.f32.gmra.mxu0 %v951
    %v972 = vpop.f32.mrf.mxu0
    %v973 = vadd.f32 0.0, %v972
    %974 = vdwg.mxu0
    %975 = vrot.lane.b32.xlu0 %v338, 120
    %v976 = vpop.permute.xlu0 %975
    %977 = vrot.lane.b32.xlu0 %v323, 88
    %v978 = vpop.permute.xlu0 %977
    %v979 = vsel %vm345, %v976, 0
    %v981 = vsel %vm345, %v978, 0
    %983 = vmatpush.xpose.msra.mxu0 0.0
    %984 = vmatpush.xpose.msra.mxu0 0.0
    %985 = vmatpush.xpose.msra.mxu0 0.0
    %986 = vmatpush.xpose.msra.mxu0 0.0
    %987 = vmatpush.xpose.msra.mxu0 0.0
    %988 = vmatpush.xpose.msra.mxu0 0.0
    %989 = vmatpush.xpose.msra.mxu0 0.0
    %990 = vmatpush.xpose.msra.mxu0 0.0
    %991 = vmatpush.xpose.msra.mxu0 0.0
    %992 = vmatpush.xpose.msra.mxu0 0.0
    %993 = vmatpush.xpose.msra.mxu0 0.0
    %994 = vmatpush.xpose.msra.mxu0 0.0
    %995 = vmatpush.xpose.msra.mxu0 0.0
    %996 = vmatpush.xpose.msra.mxu0 0.0
    %997 = vmatpush.xpose.msra.mxu0 0.0
    %998 = vmatpush.xpose.msra.mxu0 %v981
    %999 = vmatmul.f32.gmra.mxu0 %v979
    %v1000 = vpop.f32.mrf.mxu0
    %v1001 = vadd.f32 0.0, %v1000
    %1002 = vdwg.mxu0
    %1003 = vrot.lane.b32.xlu0 %v339, 120
    %v1004 = vpop.permute.xlu0 %1003
    %1005 = vrot.lane.b32.xlu0 %v326, 88
    %v1006 = vpop.permute.xlu0 %1005
    %v1007 = vsel %vm345, %v1004, 0
    %v1009 = vsel %vm345, %v1006, 0
    %1011 = vmatpush.xpose.msra.mxu0 0.0
    %1012 = vmatpush.xpose.msra.mxu0 0.0
    %1013 = vmatpush.xpose.msra.mxu0 0.0
    %1014 = vmatpush.xpose.msra.mxu0 0.0
    %1015 = vmatpush.xpose.msra.mxu0 0.0
    %1016 = vmatpush.xpose.msra.mxu0 0.0
    %1017 = vmatpush.xpose.msra.mxu0 0.0
    %1018 = vmatpush.xpose.msra.mxu0 0.0
    %1019 = vmatpush.xpose.msra.mxu0 0.0
    %1020 = vmatpush.xpose.msra.mxu0 0.0
    %1021 = vmatpush.xpose.msra.mxu0 0.0
    %1022 = vmatpush.xpose.msra.mxu0 0.0
    %1023 = vmatpush.xpose.msra.mxu0 0.0
    %1024 = vmatpush.xpose.msra.mxu0 0.0
    %1025 = vmatpush.xpose.msra.mxu0 0.0
    %1026 = vmatpush.xpose.msra.mxu0 %v1009
    %1027 = vmatmul.f32.gmra.mxu0 %v1007
    %v1028 = vpop.f32.mrf.mxu0
    %v1029 = vadd.f32 0.0, %v1028
    %1030 = vdwg.mxu0
    %1031 = vrot.lane.b32.xlu0 %v340, 120
    %v1032 = vpop.permute.xlu0 %1031
    %1033 = vrot.lane.b32.xlu0 %v329, 88
    %v1034 = vpop.permute.xlu0 %1033
    %v1035 = vsel %vm345, %v1032, 0
    %v1037 = vsel %vm345, %v1034, 0
    %1039 = vmatpush.xpose.msra.mxu0 0.0
    %1040 = vmatpush.xpose.msra.mxu0 0.0
    %1041 = vmatpush.xpose.msra.mxu0 0.0
    %1042 = vmatpush.xpose.msra.mxu0 0.0
    %1043 = vmatpush.xpose.msra.mxu0 0.0
    %1044 = vmatpush.xpose.msra.mxu0 0.0
    %1045 = vmatpush.xpose.msra.mxu0 0.0
    %1046 = vmatpush.xpose.msra.mxu0 0.0
    %1047 = vmatpush.xpose.msra.mxu0 0.0
    %1048 = vmatpush.xpose.msra.mxu0 0.0
    %1049 = vmatpush.xpose.msra.mxu0 0.0
    %1050 = vmatpush.xpose.msra.mxu0 0.0
    %1051 = vmatpush.xpose.msra.mxu0 0.0
    %1052 = vmatpush.xpose.msra.mxu0 0.0
    %1053 = vmatpush.xpose.msra.mxu0 0.0
    %1054 = vmatpush.xpose.msra.mxu0 %v1037
    %1055 = vmatmul.f32.gmra.mxu0 %v1035
    %v1056 = vpop.f32.mrf.mxu0
    %v1057 = vadd.f32 0.0, %v1056
    %1058 = vdwg.mxu0
    %1059 = vrot.lane.b32.xlu0 %v341, 120
    %v1060 = vpop.permute.xlu0 %1059
    %1061 = vrot.lane.b32.xlu0 %v332, 88
    %v1062 = vpop.permute.xlu0 %1061
    %v1063 = vsel %vm345, %v1060, 0
    %v1065 = vsel %vm345, %v1062, 0
    %1067 = vmatpush.xpose.msra.mxu0 0.0
    %1068 = vmatpush.xpose.msra.mxu0 0.0
    %1069 = vmatpush.xpose.msra.mxu0 0.0
    %1070 = vmatpush.xpose.msra.mxu0 0.0
    %1071 = vmatpush.xpose.msra.mxu0 0.0
    %1072 = vmatpush.xpose.msra.mxu0 0.0
    %1073 = vmatpush.xpose.msra.mxu0 0.0
    %1074 = vmatpush.xpose.msra.mxu0 0.0
    %1075 = vmatpush.xpose.msra.mxu0 0.0
    %1076 = vmatpush.xpose.msra.mxu0 0.0
    %1077 = vmatpush.xpose.msra.mxu0 0.0
    %1078 = vmatpush.xpose.msra.mxu0 0.0
    %1079 = vmatpush.xpose.msra.mxu0 0.0
    %1080 = vmatpush.xpose.msra.mxu0 0.0
    %1081 = vmatpush.xpose.msra.mxu0 0.0
    %1082 = vmatpush.xpose.msra.mxu0 %v1065
    %1083 = vmatmul.f32.gmra.mxu0 %v1063
    %v1084 = vpop.f32.mrf.mxu0
    %v1085 = vadd.f32 0.0, %v1084
    %1086 = vdwg.mxu0
    %v1087 = vsel %vm345, %v889, -inf
    %1088 = vmax.xlane.f32.xlu0 %v1087
    %v1089 = vpop.xlane.xlu0 %1088
    %v1090 = vsel %vm345, %v917, -inf
    %1091 = vmax.xlane.f32.xlu0 %v1090
    %v1092 = vpop.xlane.xlu0 %1091
    %v1093 = vsel %vm345, %v945, -inf
    %1094 = vmax.xlane.f32.xlu0 %v1093
    %v1095 = vpop.xlane.xlu0 %1094
    %v1096 = vsel %vm345, %v973, -inf
    %1097 = vmax.xlane.f32.xlu0 %v1096
    %v1098 = vpop.xlane.xlu0 %1097
    %v1099 = vsel %vm345, %v1001, -inf
    %1100 = vmax.xlane.f32.xlu0 %v1099
    %v1101 = vpop.xlane.xlu0 %1100
    %v1102 = vsel %vm345, %v1029, -inf
    %1103 = vmax.xlane.f32.xlu0 %v1102
    %v1104 = vpop.xlane.xlu0 %1103
    %v1105 = vsel %vm345, %v1057, -inf
    %1106 = vmax.xlane.f32.xlu0 %v1105
    %v1107 = vpop.xlane.xlu0 %1106
    %v1108 = vsel %vm345, %v1085, -inf
    %1109 = vmax.xlane.f32.xlu0 %v1108
    %v1110 = vpop.xlane.xlu0 %1109
    %v1111 = vsub.f32 %v889, %v1089
    %v1112 = vsub.f32 %v917, %v1092
    %v1113 = vsub.f32 %v945, %v1095
    %v1114 = vsub.f32 %v973, %v1098
    %v1115 = vsub.f32 %v1001, %v1101
    %v1116 = vsub.f32 %v1029, %v1104
    %v1117 = vsub.f32 %v1057, %v1107
    %v1118 = vsub.f32 %v1085, %v1110
    %v1119 = vmul.f32 %v1111, 1.442695
    %v1120 = vpow.pop %v1119
    %v1121 = vmul.f32 %v1112, 1.442695
    %v1122 = vpow.pop %v1121
    %v1123 = vmul.f32 %v1113, 1.442695
    %v1124 = vpow.pop %v1123
    %v1125 = vmul.f32 %v1114, 1.442695
    %v1126 = vpow.pop %v1125
    %v1127 = vmul.f32 %v1115, 1.442695
    %v1128 = vpow.pop %v1127
    %v1129 = vmul.f32 %v1116, 1.442695
    %v1130 = vpow.pop %v1129
    %v1131 = vmul.f32 %v1117, 1.442695
    %v1132 = vpow.pop %v1131
    %v1133 = vmul.f32 %v1118, 1.442695
    %v1134 = vpow.pop %v1133
    %v1135 = vsel %vm345, %v1120, 0.0
    %1136 = vadd.xlane.f32.xlu0 %v1135
    %v1137 = vpop.xlane.xlu0 %1136
    %v1138 = vsel %vm345, %v1122, 0.0
    %1139 = vadd.xlane.f32.xlu0 %v1138
    %v1140 = vpop.xlane.xlu0 %1139
    %v1141 = vsel %vm345, %v1124, 0.0
    %1142 = vadd.xlane.f32.xlu0 %v1141
    %v1143 = vpop.xlane.xlu0 %1142
    %v1144 = vsel %vm345, %v1126, 0.0
    %1145 = vadd.xlane.f32.xlu0 %v1144
    %v1146 = vpop.xlane.xlu0 %1145
    %v1147 = vsel %vm345, %v1128, 0.0
    %1148 = vadd.xlane.f32.xlu0 %v1147
    %v1149 = vpop.xlane.xlu0 %1148
    %v1150 = vsel %vm345, %v1130, 0.0
    %1151 = vadd.xlane.f32.xlu0 %v1150
    %v1152 = vpop.xlane.xlu0 %1151
    %v1153 = vsel %vm345, %v1132, 0.0
    %1154 = vadd.xlane.f32.xlu0 %v1153
    %v1155 = vpop.xlane.xlu0 %1154
    %v1156 = vsel %vm345, %v1134, 0.0
    %1157 = vadd.xlane.f32.xlu0 %v1156
    %v1158 = vpop.xlane.xlu0 %1157
    %v1159 = vrcp.pop %v1137
    %v1160 = vrcp.pop %v1140
    %v1161 = vrcp.pop %v1143
    %v1162 = vrcp.pop %v1146
    %v1163 = vrcp.pop %v1149
    %v1164 = vrcp.pop %v1152
    %v1165 = vrcp.pop %v1155
    %v1166 = vrcp.pop %v1158
    %v1167 = vmul.f32 %v1120, %v1159
    %v1168 = vmul.f32 %v1122, %v1160
    %v1169 = vmul.f32 %v1124, %v1161
    %v1170 = vmul.f32 %v1126, %v1162
    %v1171 = vmul.f32 %v1128, %v1163
    %v1172 = vmul.f32 %v1130, %v1164
    %v1173 = vmul.f32 %v1132, %v1165
    %v1174 = vmul.f32 %v1134, %v1166
    %1175 = vrot.lane.b32.xlu0 %v311, 56
    %v1176 = vpop.permute.xlu0 %1175
    %v1179 = vsel %vm345, %v1167, 0
    %1181 = vmatpush.msra.mxu0 0.0
    %1182 = vmatpush.msra.mxu0 0.0
    %1183 = vmatpush.msra.mxu0 0.0
    %1184 = vmatpush.msra.mxu0 0.0
    %1185 = vmatpush.msra.mxu0 0.0
    %1186 = vmatpush.msra.mxu0 0.0
    %1187 = vmatpush.msra.mxu0 0.0
    %1188 = vmatpush.msra.mxu0 0.0
    %1189 = vmatpush.msra.mxu0 0.0
    %1190 = vmatpush.msra.mxu0 0.0
    %1191 = vmatpush.msra.mxu0 0.0
    %1192 = vmatpush.msra.mxu0 0.0
    %1193 = vmatpush.msra.mxu0 0.0
    %1194 = vmatpush.msra.mxu0 0.0
    %1195 = vmatpush.msra.mxu0 0.0
    %1196 = vmatpush.msra.mxu0 %v1176
    %1197 = vmatmul.f32.gmra.mxu0 %v1179
    %v1198 = vpop.f32.mrf.mxu0
    %v1199 = vadd.f32 0.0, %v1198
    %1200 = vdwg.mxu0
    %1201 = vrot.lane.b32.xlu0 %v314, 56
    %v1202 = vpop.permute.xlu0 %1201
    %v1205 = vsel %vm345, %v1168, 0
    %1207 = vmatpush.msra.mxu0 0.0
    %1208 = vmatpush.msra.mxu0 0.0
    %1209 = vmatpush.msra.mxu0 0.0
    %1210 = vmatpush.msra.mxu0 0.0
    %1211 = vmatpush.msra.mxu0 0.0
    %1212 = vmatpush.msra.mxu0 0.0
    %1213 = vmatpush.msra.mxu0 0.0
    %1214 = vmatpush.msra.mxu0 0.0
    %1215 = vmatpush.msra.mxu0 0.0
    %1216 = vmatpush.msra.mxu0 0.0
    %1217 = vmatpush.msra.mxu0 0.0
    %1218 = vmatpush.msra.mxu0 0.0
    %1219 = vmatpush.msra.mxu0 0.0
    %1220 = vmatpush.msra.mxu0 0.0
    %1221 = vmatpush.msra.mxu0 0.0
    %1222 = vmatpush.msra.mxu0 %v1202
    %1223 = vmatmul.f32.gmra.mxu0 %v1205
    %v1224 = vpop.f32.mrf.mxu0
    %v1225 = vadd.f32 0.0, %v1224
    %1226 = vdwg.mxu0
    %1227 = vrot.lane.b32.xlu0 %v317, 56
    %v1228 = vpop.permute.xlu0 %1227
    %v1231 = vsel %vm345, %v1169, 0
    %1233 = vmatpush.msra.mxu0 0.0
    %1234 = vmatpush.msra.mxu0 0.0
    %1235 = vmatpush.msra.mxu0 0.0
    %1236 = vmatpush.msra.mxu0 0.0
    %1237 = vmatpush.msra.mxu0 0.0
    %1238 = vmatpush.msra.mxu0 0.0
    %1239 = vmatpush.msra.mxu0 0.0
    %1240 = vmatpush.msra.mxu0 0.0
    %1241 = vmatpush.msra.mxu0 0.0
    %1242 = vmatpush.msra.mxu0 0.0
    %1243 = vmatpush.msra.mxu0 0.0
    %1244 = vmatpush.msra.mxu0 0.0
    %1245 = vmatpush.msra.mxu0 0.0
    %1246 = vmatpush.msra.mxu0 0.0
    %1247 = vmatpush.msra.mxu0 0.0
    %1248 = vmatpush.msra.mxu0 %v1228
    %1249 = vmatmul.f32.gmra.mxu0 %v1231
    %v1250 = vpop.f32.mrf.mxu0
    %v1251 = vadd.f32 0.0, %v1250
    %1252 = vdwg.mxu0
    %1253 = vrot.lane.b32.xlu0 %v320, 56
    %v1254 = vpop.permute.xlu0 %1253
    %v1257 = vsel %vm345, %v1170, 0
    %1259 = vmatpush.msra.mxu0 0.0
    %1260 = vmatpush.msra.mxu0 0.0
    %1261 = vmatpush.msra.mxu0 0.0
    %1262 = vmatpush.msra.mxu0 0.0
    %1263 = vmatpush.msra.mxu0 0.0
    %1264 = vmatpush.msra.mxu0 0.0
    %1265 = vmatpush.msra.mxu0 0.0
    %1266 = vmatpush.msra.mxu0 0.0
    %1267 = vmatpush.msra.mxu0 0.0
    %1268 = vmatpush.msra.mxu0 0.0
    %1269 = vmatpush.msra.mxu0 0.0
    %1270 = vmatpush.msra.mxu0 0.0
    %1271 = vmatpush.msra.mxu0 0.0
    %1272 = vmatpush.msra.mxu0 0.0
    %1273 = vmatpush.msra.mxu0 0.0
    %1274 = vmatpush.msra.mxu0 %v1254
    %1275 = vmatmul.f32.gmra.mxu0 %v1257
    %v1276 = vpop.f32.mrf.mxu0
    %v1277 = vadd.f32 0.0, %v1276
    %1278 = vdwg.mxu0
    %1279 = vrot.lane.b32.xlu0 %v323, 56
    %v1280 = vpop.permute.xlu0 %1279
    %v1283 = vsel %vm345, %v1171, 0
    %1285 = vmatpush.msra.mxu0 0.0
    %1286 = vmatpush.msra.mxu0 0.0
    %1287 = vmatpush.msra.mxu0 0.0
    %1288 = vmatpush.msra.mxu0 0.0
    %1289 = vmatpush.msra.mxu0 0.0
    %1290 = vmatpush.msra.mxu0 0.0
    %1291 = vmatpush.msra.mxu0 0.0
    %1292 = vmatpush.msra.mxu0 0.0
    %1293 = vmatpush.msra.mxu0 0.0
    %1294 = vmatpush.msra.mxu0 0.0
    %1295 = vmatpush.msra.mxu0 0.0
    %1296 = vmatpush.msra.mxu0 0.0
    %1297 = vmatpush.msra.mxu0 0.0
    %1298 = vmatpush.msra.mxu0 0.0
    %1299 = vmatpush.msra.mxu0 0.0
    %1300 = vmatpush.msra.mxu0 %v1280
    %1301 = vmatmul.f32.gmra.mxu0 %v1283
    %v1302 = vpop.f32.mrf.mxu0
    %v1303 = vadd.f32 0.0, %v1302
    %1304 = vdwg.mxu0
    %1305 = vrot.lane.b32.xlu0 %v326, 56
    %v1306 = vpop.permute.xlu0 %1305
    %v1309 = vsel %vm345, %v1172, 0
    %1311 = vmatpush.msra.mxu0 0.0
    %1312 = vmatpush.msra.mxu0 0.0
    %1313 = vmatpush.msra.mxu0 0.0
    %1314 = vmatpush.msra.mxu0 0.0
    %1315 = vmatpush.msra.mxu0 0.0
    %1316 = vmatpush.msra.mxu0 0.0
    %1317 = vmatpush.msra.mxu0 0.0
    %1318 = vmatpush.msra.mxu0 0.0
    %1319 = vmatpush.msra.mxu0 0.0
    %1320 = vmatpush.msra.mxu0 0.0
    %1321 = vmatpush.msra.mxu0 0.0
    %1322 = vmatpush.msra.mxu0 0.0
    %1323 = vmatpush.msra.mxu0 0.0
    %1324 = vmatpush.msra.mxu0 0.0
    %1325 = vmatpush.msra.mxu0 0.0
    %1326 = vmatpush.msra.mxu0 %v1306
    %1327 = vmatmul.f32.gmra.mxu0 %v1309
    %v1328 = vpop.f32.mrf.mxu0
    %v1329 = vadd.f32 0.0, %v1328
    %1330 = vdwg.mxu0
    %1331 = vrot.lane.b32.xlu0 %v329, 56
    %v1332 = vpop.permute.xlu0 %1331
    %v1335 = vsel %vm345, %v1173, 0
    %1337 = vmatpush.msra.mxu0 0.0
    %1338 = vmatpush.msra.mxu0 0.0
    %1339 = vmatpush.msra.mxu0 0.0
    %1340 = vmatpush.msra.mxu0 0.0
    %1341 = vmatpush.msra.mxu0 0.0
    %1342 = vmatpush.msra.mxu0 0.0
    %1343 = vmatpush.msra.mxu0 0.0
    %1344 = vmatpush.msra.mxu0 0.0
    %1345 = vmatpush.msra.mxu0 0.0
    %1346 = vmatpush.msra.mxu0 0.0
    %1347 = vmatpush.msra.mxu0 0.0
    %1348 = vmatpush.msra.mxu0 0.0
    %1349 = vmatpush.msra.mxu0 0.0
    %1350 = vmatpush.msra.mxu0 0.0
    %1351 = vmatpush.msra.mxu0 0.0
    %1352 = vmatpush.msra.mxu0 %v1332
    %1353 = vmatmul.f32.gmra.mxu0 %v1335
    %v1354 = vpop.f32.mrf.mxu0
    %v1355 = vadd.f32 0.0, %v1354
    %1356 = vdwg.mxu0
    %1357 = vrot.lane.b32.xlu0 %v332, 56
    %v1358 = vpop.permute.xlu0 %1357
    %v1361 = vsel %vm345, %v1174, 0
    %1363 = vmatpush.msra.mxu0 0.0
    %1364 = vmatpush.msra.mxu0 0.0
    %1365 = vmatpush.msra.mxu0 0.0
    %1366 = vmatpush.msra.mxu0 0.0
    %1367 = vmatpush.msra.mxu0 0.0
    %1368 = vmatpush.msra.mxu0 0.0
    %1369 = vmatpush.msra.mxu0 0.0
    %1370 = vmatpush.msra.mxu0 0.0
    %1371 = vmatpush.msra.mxu0 0.0
    %1372 = vmatpush.msra.mxu0 0.0
    %1373 = vmatpush.msra.mxu0 0.0
    %1374 = vmatpush.msra.mxu0 0.0
    %1375 = vmatpush.msra.mxu0 0.0
    %1376 = vmatpush.msra.mxu0 0.0
    %1377 = vmatpush.msra.mxu0 0.0
    %1378 = vmatpush.msra.mxu0 %v1358
    %1379 = vmatmul.f32.gmra.mxu0 %v1361
    %v1380 = vpop.f32.mrf.mxu0
    %v1381 = vadd.f32 0.0, %v1380
    %1382 = vdwg.mxu0
    %1383 = vrot.lane.b32.xlu0 %v334, 112
    %v1384 = vpop.permute.xlu0 %1383
    %1385 = vrot.lane.b32.xlu0 %v311, 80
    %v1386 = vpop.permute.xlu0 %1385
    %v1387 = vsel %vm345, %v1384, 0
    %v1389 = vsel %vm345, %v1386, 0
    %1391 = vmatpush.xpose.msra.mxu0 0.0
    %1392 = vmatpush.xpose.msra.mxu0 0.0
    %1393 = vmatpush.xpose.msra.mxu0 0.0
    %1394 = vmatpush.xpose.msra.mxu0 0.0
    %1395 = vmatpush.xpose.msra.mxu0 0.0
    %1396 = vmatpush.xpose.msra.mxu0 0.0
    %1397 = vmatpush.xpose.msra.mxu0 0.0
    %1398 = vmatpush.xpose.msra.mxu0 0.0
    %1399 = vmatpush.xpose.msra.mxu0 0.0
    %1400 = vmatpush.xpose.msra.mxu0 0.0
    %1401 = vmatpush.xpose.msra.mxu0 0.0
    %1402 = vmatpush.xpose.msra.mxu0 0.0
    %1403 = vmatpush.xpose.msra.mxu0 0.0
    %1404 = vmatpush.xpose.msra.mxu0 0.0
    %1405 = vmatpush.xpose.msra.mxu0 0.0
    %1406 = vmatpush.xpose.msra.mxu0 %v1389
    %1407 = vmatmul.f32.gmra.mxu0 %v1387
    %v1408 = vpop.f32.mrf.mxu0
    %v1409 = vadd.f32 0.0, %v1408
    %1410 = vdwg.mxu0
    %1411 = vrot.lane.b32.xlu0 %v335, 112
    %v1412 = vpop.permute.xlu0 %1411
    %1413 = vrot.lane.b32.xlu0 %v314, 80
    %v1414 = vpop.permute.xlu0 %1413
    %v1415 = vsel %vm345, %v1412, 0
    %v1417 = vsel %vm345, %v1414, 0
    %1419 = vmatpush.xpose.msra.mxu0 0.0
    %1420 = vmatpush.xpose.msra.mxu0 0.0
    %1421 = vmatpush.xpose.msra.mxu0 0.0
    %1422 = vmatpush.xpose.msra.mxu0 0.0
    %1423 = vmatpush.xpose.msra.mxu0 0.0
    %1424 = vmatpush.xpose.msra.mxu0 0.0
    %1425 = vmatpush.xpose.msra.mxu0 0.0
    %1426 = vmatpush.xpose.msra.mxu0 0.0
    %1427 = vmatpush.xpose.msra.mxu0 0.0
    %1428 = vmatpush.xpose.msra.mxu0 0.0
    %1429 = vmatpush.xpose.msra.mxu0 0.0
    %1430 = vmatpush.xpose.msra.mxu0 0.0
    %1431 = vmatpush.xpose.msra.mxu0 0.0
    %1432 = vmatpush.xpose.msra.mxu0 0.0
    %1433 = vmatpush.xpose.msra.mxu0 0.0
    %1434 = vmatpush.xpose.msra.mxu0 %v1417
    %1435 = vmatmul.f32.gmra.mxu0 %v1415
    %v1436 = vpop.f32.mrf.mxu0
    %v1437 = vadd.f32 0.0, %v1436
    %1438 = vdwg.mxu0
    %1439 = vrot.lane.b32.xlu0 %v336, 112
    %v1440 = vpop.permute.xlu0 %1439
    %1441 = vrot.lane.b32.xlu0 %v317, 80
    %v1442 = vpop.permute.xlu0 %1441
    %v1443 = vsel %vm345, %v1440, 0
    %v1445 = vsel %vm345, %v1442, 0
    %1447 = vmatpush.xpose.msra.mxu0 0.0
    %1448 = vmatpush.xpose.msra.mxu0 0.0
    %1449 = vmatpush.xpose.msra.mxu0 0.0
    %1450 = vmatpush.xpose.msra.mxu0 0.0
    %1451 = vmatpush.xpose.msra.mxu0 0.0
    %1452 = vmatpush.xpose.msra.mxu0 0.0
    %1453 = vmatpush.xpose.msra.mxu0 0.0
    %1454 = vmatpush.xpose.msra.mxu0 0.0
    %1455 = vmatpush.xpose.msra.mxu0 0.0
    %1456 = vmatpush.xpose.msra.mxu0 0.0
    %1457 = vmatpush.xpose.msra.mxu0 0.0
    %1458 = vmatpush.xpose.msra.mxu0 0.0
    %1459 = vmatpush.xpose.msra.mxu0 0.0
    %1460 = vmatpush.xpose.msra.mxu0 0.0
    %1461 = vmatpush.xpose.msra.mxu0 0.0
    %1462 = vmatpush.xpose.msra.mxu0 %v1445
    %1463 = vmatmul.f32.gmra.mxu0 %v1443
    %v1464 = vpop.f32.mrf.mxu0
    %v1465 = vadd.f32 0.0, %v1464
    %1466 = vdwg.mxu0
    %1467 = vrot.lane.b32.xlu0 %v337, 112
    %v1468 = vpop.permute.xlu0 %1467
    %1469 = vrot.lane.b32.xlu0 %v320, 80
    %v1470 = vpop.permute.xlu0 %1469
    %v1471 = vsel %vm345, %v1468, 0
    %v1473 = vsel %vm345, %v1470, 0
    %1475 = vmatpush.xpose.msra.mxu0 0.0
    %1476 = vmatpush.xpose.msra.mxu0 0.0
    %1477 = vmatpush.xpose.msra.mxu0 0.0
    %1478 = vmatpush.xpose.msra.mxu0 0.0
    %1479 = vmatpush.xpose.msra.mxu0 0.0
    %1480 = vmatpush.xpose.msra.mxu0 0.0
    %1481 = vmatpush.xpose.msra.mxu0 0.0
    %1482 = vmatpush.xpose.msra.mxu0 0.0
    %1483 = vmatpush.xpose.msra.mxu0 0.0
    %1484 = vmatpush.xpose.msra.mxu0 0.0
    %1485 = vmatpush.xpose.msra.mxu0 0.0
    %1486 = vmatpush.xpose.msra.mxu0 0.0
    %1487 = vmatpush.xpose.msra.mxu0 0.0
    %1488 = vmatpush.xpose.msra.mxu0 0.0
    %1489 = vmatpush.xpose.msra.mxu0 0.0
    %1490 = vmatpush.xpose.msra.mxu0 %v1473
    %1491 = vmatmul.f32.gmra.mxu0 %v1471
    %v1492 = vpop.f32.mrf.mxu0
    %v1493 = vadd.f32 0.0, %v1492
    %1494 = vdwg.mxu0
    %1495 = vrot.lane.b32.xlu0 %v338, 112
    %v1496 = vpop.permute.xlu0 %1495
    %1497 = vrot.lane.b32.xlu0 %v323, 80
    %v1498 = vpop.permute.xlu0 %1497
    %v1499 = vsel %vm345, %v1496, 0
    %v1501 = vsel %vm345, %v1498, 0
    %1503 = vmatpush.xpose.msra.mxu0 0.0
    %1504 = vmatpush.xpose.msra.mxu0 0.0
    %1505 = vmatpush.xpose.msra.mxu0 0.0
    %1506 = vmatpush.xpose.msra.mxu0 0.0
    %1507 = vmatpush.xpose.msra.mxu0 0.0
    %1508 = vmatpush.xpose.msra.mxu0 0.0
    %1509 = vmatpush.xpose.msra.mxu0 0.0
    %1510 = vmatpush.xpose.msra.mxu0 0.0
    %1511 = vmatpush.xpose.msra.mxu0 0.0
    %1512 = vmatpush.xpose.msra.mxu0 0.0
    %1513 = vmatpush.xpose.msra.mxu0 0.0
    %1514 = vmatpush.xpose.msra.mxu0 0.0
    %1515 = vmatpush.xpose.msra.mxu0 0.0
    %1516 = vmatpush.xpose.msra.mxu0 0.0
    %1517 = vmatpush.xpose.msra.mxu0 0.0
    %1518 = vmatpush.xpose.msra.mxu0 %v1501
    %1519 = vmatmul.f32.gmra.mxu0 %v1499
    %v1520 = vpop.f32.mrf.mxu0
    %v1521 = vadd.f32 0.0, %v1520
    %1522 = vdwg.mxu0
    %1523 = vrot.lane.b32.xlu0 %v339, 112
    %v1524 = vpop.permute.xlu0 %1523
    %1525 = vrot.lane.b32.xlu0 %v326, 80
    %v1526 = vpop.permute.xlu0 %1525
    %v1527 = vsel %vm345, %v1524, 0
    %v1529 = vsel %vm345, %v1526, 0
    %1531 = vmatpush.xpose.msra.mxu0 0.0
    %1532 = vmatpush.xpose.msra.mxu0 0.0
    %1533 = vmatpush.xpose.msra.mxu0 0.0
    %1534 = vmatpush.xpose.msra.mxu0 0.0
    %1535 = vmatpush.xpose.msra.mxu0 0.0
    %1536 = vmatpush.xpose.msra.mxu0 0.0
    %1537 = vmatpush.xpose.msra.mxu0 0.0
    %1538 = vmatpush.xpose.msra.mxu0 0.0
    %1539 = vmatpush.xpose.msra.mxu0 0.0
    %1540 = vmatpush.xpose.msra.mxu0 0.0
    %1541 = vmatpush.xpose.msra.mxu0 0.0
    %1542 = vmatpush.xpose.msra.mxu0 0.0
    %1543 = vmatpush.xpose.msra.mxu0 0.0
    %1544 = vmatpush.xpose.msra.mxu0 0.0
    %1545 = vmatpush.xpose.msra.mxu0 0.0
    %1546 = vmatpush.xpose.msra.mxu0 %v1529
    %1547 = vmatmul.f32.gmra.mxu0 %v1527
    %v1548 = vpop.f32.mrf.mxu0
    %v1549 = vadd.f32 0.0, %v1548
    %1550 = vdwg.mxu0
    %1551 = vrot.lane.b32.xlu0 %v340, 112
    %v1552 = vpop.permute.xlu0 %1551
    %1553 = vrot.lane.b32.xlu0 %v329, 80
    %v1554 = vpop.permute.xlu0 %1553
    %v1555 = vsel %vm345, %v1552, 0
    %v1557 = vsel %vm345, %v1554, 0
    %1559 = vmatpush.xpose.msra.mxu0 0.0
    %1560 = vmatpush.xpose.msra.mxu0 0.0
    %1561 = vmatpush.xpose.msra.mxu0 0.0
    %1562 = vmatpush.xpose.msra.mxu0 0.0
    %1563 = vmatpush.xpose.msra.mxu0 0.0
    %1564 = vmatpush.xpose.msra.mxu0 0.0
    %1565 = vmatpush.xpose.msra.mxu0 0.0
    %1566 = vmatpush.xpose.msra.mxu0 0.0
    %1567 = vmatpush.xpose.msra.mxu0 0.0
    %1568 = vmatpush.xpose.msra.mxu0 0.0
    %1569 = vmatpush.xpose.msra.mxu0 0.0
    %1570 = vmatpush.xpose.msra.mxu0 0.0
    %1571 = vmatpush.xpose.msra.mxu0 0.0
    %1572 = vmatpush.xpose.msra.mxu0 0.0
    %1573 = vmatpush.xpose.msra.mxu0 0.0
    %1574 = vmatpush.xpose.msra.mxu0 %v1557
    %1575 = vmatmul.f32.gmra.mxu0 %v1555
    %v1576 = vpop.f32.mrf.mxu0
    %v1577 = vadd.f32 0.0, %v1576
    %1578 = vdwg.mxu0
    %1579 = vrot.lane.b32.xlu0 %v341, 112
    %v1580 = vpop.permute.xlu0 %1579
    %1581 = vrot.lane.b32.xlu0 %v332, 80
    %v1582 = vpop.permute.xlu0 %1581
    %v1583 = vsel %vm345, %v1580, 0
    %v1585 = vsel %vm345, %v1582, 0
    %1587 = vmatpush.xpose.msra.mxu0 0.0
    %1588 = vmatpush.xpose.msra.mxu0 0.0
    %1589 = vmatpush.xpose.msra.mxu0 0.0
    %1590 = vmatpush.xpose.msra.mxu0 0.0
    %1591 = vmatpush.xpose.msra.mxu0 0.0
    %1592 = vmatpush.xpose.msra.mxu0 0.0
    %1593 = vmatpush.xpose.msra.mxu0 0.0
    %1594 = vmatpush.xpose.msra.mxu0 0.0
    %1595 = vmatpush.xpose.msra.mxu0 0.0
    %1596 = vmatpush.xpose.msra.mxu0 0.0
    %1597 = vmatpush.xpose.msra.mxu0 0.0
    %1598 = vmatpush.xpose.msra.mxu0 0.0
    %1599 = vmatpush.xpose.msra.mxu0 0.0
    %1600 = vmatpush.xpose.msra.mxu0 0.0
    %1601 = vmatpush.xpose.msra.mxu0 0.0
    %1602 = vmatpush.xpose.msra.mxu0 %v1585
    %1603 = vmatmul.f32.gmra.mxu0 %v1583
    %v1604 = vpop.f32.mrf.mxu0
    %v1605 = vadd.f32 0.0, %v1604
    %1606 = vdwg.mxu0
    %v1607 = vsel %vm345, %v1409, -inf
    %1608 = vmax.xlane.f32.xlu0 %v1607
    %v1609 = vpop.xlane.xlu0 %1608
    %v1610 = vsel %vm345, %v1437, -inf
    %1611 = vmax.xlane.f32.xlu0 %v1610
    %v1612 = vpop.xlane.xlu0 %1611
    %v1613 = vsel %vm345, %v1465, -inf
    %1614 = vmax.xlane.f32.xlu0 %v1613
    %v1615 = vpop.xlane.xlu0 %1614
    %v1616 = vsel %vm345, %v1493, -inf
    %1617 = vmax.xlane.f32.xlu0 %v1616
    %v1618 = vpop.xlane.xlu0 %1617
    %v1619 = vsel %vm345, %v1521, -inf
    %1620 = vmax.xlane.f32.xlu0 %v1619
    %v1621 = vpop.xlane.xlu0 %1620
    %v1622 = vsel %vm345, %v1549, -inf
    %1623 = vmax.xlane.f32.xlu0 %v1622
    %v1624 = vpop.xlane.xlu0 %1623
    %v1625 = vsel %vm345, %v1577, -inf
    %1626 = vmax.xlane.f32.xlu0 %v1625
    %v1627 = vpop.xlane.xlu0 %1626
    %v1628 = vsel %vm345, %v1605, -inf
    %1629 = vmax.xlane.f32.xlu0 %v1628
    %v1630 = vpop.xlane.xlu0 %1629
    %v1631 = vsub.f32 %v1409, %v1609
    %v1632 = vsub.f32 %v1437, %v1612
    %v1633 = vsub.f32 %v1465, %v1615
    %v1634 = vsub.f32 %v1493, %v1618
    %v1635 = vsub.f32 %v1521, %v1621
    %v1636 = vsub.f32 %v1549, %v1624
    %v1637 = vsub.f32 %v1577, %v1627
    %v1638 = vsub.f32 %v1605, %v1630
    %v1639 = vmul.f32 %v1631, 1.442695
    %v1640 = vpow.pop %v1639
    %v1641 = vmul.f32 %v1632, 1.442695
    %v1642 = vpow.pop %v1641
    %v1643 = vmul.f32 %v1633, 1.442695
    %v1644 = vpow.pop %v1643
    %v1645 = vmul.f32 %v1634, 1.442695
    %v1646 = vpow.pop %v1645
    %v1647 = vmul.f32 %v1635, 1.442695
    %v1648 = vpow.pop %v1647
    %v1649 = vmul.f32 %v1636, 1.442695
    %v1650 = vpow.pop %v1649
    %v1651 = vmul.f32 %v1637, 1.442695
    %v1652 = vpow.pop %v1651
    %v1653 = vmul.f32 %v1638, 1.442695
    %v1654 = vpow.pop %v1653
    %v1655 = vsel %vm345, %v1640, 0.0
    %1656 = vadd.xlane.f32.xlu0 %v1655
    %v1657 = vpop.xlane.xlu0 %1656
    %v1658 = vsel %vm345, %v1642, 0.0
    %1659 = vadd.xlane.f32.xlu0 %v1658
    %v1660 = vpop.xlane.xlu0 %1659
    %v1661 = vsel %vm345, %v1644, 0.0
    %1662 = vadd.xlane.f32.xlu0 %v1661
    %v1663 = vpop.xlane.xlu0 %1662
    %v1664 = vsel %vm345, %v1646, 0.0
    %1665 = vadd.xlane.f32.xlu0 %v1664
    %v1666 = vpop.xlane.xlu0 %1665
    %v1667 = vsel %vm345, %v1648, 0.0
    %1668 = vadd.xlane.f32.xlu0 %v1667
    %v1669 = vpop.xlane.xlu0 %1668
    %v1670 = vsel %vm345, %v1650, 0.0
    %1671 = vadd.xlane.f32.xlu0 %v1670
    %v1672 = vpop.xlane.xlu0 %1671
    %v1673 = vsel %vm345, %v1652, 0.0
    %1674 = vadd.xlane.f32.xlu0 %v1673
    %v1675 = vpop.xlane.xlu0 %1674
    %v1676 = vsel %vm345, %v1654, 0.0
    %1677 = vadd.xlane.f32.xlu0 %v1676
    %v1678 = vpop.xlane.xlu0 %1677
    %v1679 = vrcp.pop %v1657
    %v1680 = vrcp.pop %v1660
    %v1681 = vrcp.pop %v1663
    %v1682 = vrcp.pop %v1666
    %v1683 = vrcp.pop %v1669
    %v1684 = vrcp.pop %v1672
    %v1685 = vrcp.pop %v1675
    %v1686 = vrcp.pop %v1678
    %v1687 = vmul.f32 %v1640, %v1679
    %v1688 = vmul.f32 %v1642, %v1680
    %v1689 = vmul.f32 %v1644, %v1681
    %v1690 = vmul.f32 %v1646, %v1682
    %v1691 = vmul.f32 %v1648, %v1683
    %v1692 = vmul.f32 %v1650, %v1684
    %v1693 = vmul.f32 %v1652, %v1685
    %v1694 = vmul.f32 %v1654, %v1686
    %1695 = vrot.lane.b32.xlu0 %v311, 48
    %v1696 = vpop.permute.xlu0 %1695
    %v1699 = vsel %vm345, %v1687, 0
    %1701 = vmatpush.msra.mxu0 0.0
    %1702 = vmatpush.msra.mxu0 0.0
    %1703 = vmatpush.msra.mxu0 0.0
    %1704 = vmatpush.msra.mxu0 0.0
    %1705 = vmatpush.msra.mxu0 0.0
    %1706 = vmatpush.msra.mxu0 0.0
    %1707 = vmatpush.msra.mxu0 0.0
    %1708 = vmatpush.msra.mxu0 0.0
    %1709 = vmatpush.msra.mxu0 0.0
    %1710 = vmatpush.msra.mxu0 0.0
    %1711 = vmatpush.msra.mxu0 0.0
    %1712 = vmatpush.msra.mxu0 0.0
    %1713 = vmatpush.msra.mxu0 0.0
    %1714 = vmatpush.msra.mxu0 0.0
    %1715 = vmatpush.msra.mxu0 0.0
    %1716 = vmatpush.msra.mxu0 %v1696
    %1717 = vmatmul.f32.gmra.mxu0 %v1699
    %v1718 = vpop.f32.mrf.mxu0
    %v1719 = vadd.f32 0.0, %v1718
    %1720 = vdwg.mxu0
    %1721 = vrot.lane.b32.xlu0 %v314, 48
    %v1722 = vpop.permute.xlu0 %1721
    %v1725 = vsel %vm345, %v1688, 0
    %1727 = vmatpush.msra.mxu0 0.0
    %1728 = vmatpush.msra.mxu0 0.0
    %1729 = vmatpush.msra.mxu0 0.0
    %1730 = vmatpush.msra.mxu0 0.0
    %1731 = vmatpush.msra.mxu0 0.0
    %1732 = vmatpush.msra.mxu0 0.0
    %1733 = vmatpush.msra.mxu0 0.0
    %1734 = vmatpush.msra.mxu0 0.0
    %1735 = vmatpush.msra.mxu0 0.0
    %1736 = vmatpush.msra.mxu0 0.0
    %1737 = vmatpush.msra.mxu0 0.0
    %1738 = vmatpush.msra.mxu0 0.0
    %1739 = vmatpush.msra.mxu0 0.0
    %1740 = vmatpush.msra.mxu0 0.0
    %1741 = vmatpush.msra.mxu0 0.0
    %1742 = vmatpush.msra.mxu0 %v1722
    %1743 = vmatmul.f32.gmra.mxu0 %v1725
    %v1744 = vpop.f32.mrf.mxu0
    %v1745 = vadd.f32 0.0, %v1744
    %1746 = vdwg.mxu0
    %1747 = vrot.lane.b32.xlu0 %v317, 48
    %v1748 = vpop.permute.xlu0 %1747
    %v1751 = vsel %vm345, %v1689, 0
    %1753 = vmatpush.msra.mxu0 0.0
    %1754 = vmatpush.msra.mxu0 0.0
    %1755 = vmatpush.msra.mxu0 0.0
    %1756 = vmatpush.msra.mxu0 0.0
    %1757 = vmatpush.msra.mxu0 0.0
    %1758 = vmatpush.msra.mxu0 0.0
    %1759 = vmatpush.msra.mxu0 0.0
    %1760 = vmatpush.msra.mxu0 0.0
    %1761 = vmatpush.msra.mxu0 0.0
    %1762 = vmatpush.msra.mxu0 0.0
    %1763 = vmatpush.msra.mxu0 0.0
    %1764 = vmatpush.msra.mxu0 0.0
    %1765 = vmatpush.msra.mxu0 0.0
    %1766 = vmatpush.msra.mxu0 0.0
    %1767 = vmatpush.msra.mxu0 0.0
    %1768 = vmatpush.msra.mxu0 %v1748
    %1769 = vmatmul.f32.gmra.mxu0 %v1751
    %v1770 = vpop.f32.mrf.mxu0
    %v1771 = vadd.f32 0.0, %v1770
    %1772 = vdwg.mxu0
    %1773 = vrot.lane.b32.xlu0 %v320, 48
    %v1774 = vpop.permute.xlu0 %1773
    %v1777 = vsel %vm345, %v1690, 0
    %1779 = vmatpush.msra.mxu0 0.0
    %1780 = vmatpush.msra.mxu0 0.0
    %1781 = vmatpush.msra.mxu0 0.0
    %1782 = vmatpush.msra.mxu0 0.0
    %1783 = vmatpush.msra.mxu0 0.0
    %1784 = vmatpush.msra.mxu0 0.0
    %1785 = vmatpush.msra.mxu0 0.0
    %1786 = vmatpush.msra.mxu0 0.0
    %1787 = vmatpush.msra.mxu0 0.0
    %1788 = vmatpush.msra.mxu0 0.0
    %1789 = vmatpush.msra.mxu0 0.0
    %1790 = vmatpush.msra.mxu0 0.0
    %1791 = vmatpush.msra.mxu0 0.0
    %1792 = vmatpush.msra.mxu0 0.0
    %1793 = vmatpush.msra.mxu0 0.0
    %1794 = vmatpush.msra.mxu0 %v1774
    %1795 = vmatmul.f32.gmra.mxu0 %v1777
    %v1796 = vpop.f32.mrf.mxu0
    %v1797 = vadd.f32 0.0, %v1796
    %1798 = vdwg.mxu0
    %1799 = vrot.lane.b32.xlu0 %v323, 48
    %v1800 = vpop.permute.xlu0 %1799
    %v1803 = vsel %vm345, %v1691, 0
    %1805 = vmatpush.msra.mxu0 0.0
    %1806 = vmatpush.msra.mxu0 0.0
    %1807 = vmatpush.msra.mxu0 0.0
    %1808 = vmatpush.msra.mxu0 0.0
    %1809 = vmatpush.msra.mxu0 0.0
    %1810 = vmatpush.msra.mxu0 0.0
    %1811 = vmatpush.msra.mxu0 0.0
    %1812 = vmatpush.msra.mxu0 0.0
    %1813 = vmatpush.msra.mxu0 0.0
    %1814 = vmatpush.msra.mxu0 0.0
    %1815 = vmatpush.msra.mxu0 0.0
    %1816 = vmatpush.msra.mxu0 0.0
    %1817 = vmatpush.msra.mxu0 0.0
    %1818 = vmatpush.msra.mxu0 0.0
    %1819 = vmatpush.msra.mxu0 0.0
    %1820 = vmatpush.msra.mxu0 %v1800
    %1821 = vmatmul.f32.gmra.mxu0 %v1803
    %v1822 = vpop.f32.mrf.mxu0
    %v1823 = vadd.f32 0.0, %v1822
    %1824 = vdwg.mxu0
    %1825 = vrot.lane.b32.xlu0 %v326, 48
    %v1826 = vpop.permute.xlu0 %1825
    %v1829 = vsel %vm345, %v1692, 0
    %1831 = vmatpush.msra.mxu0 0.0
    %1832 = vmatpush.msra.mxu0 0.0
    %1833 = vmatpush.msra.mxu0 0.0
    %1834 = vmatpush.msra.mxu0 0.0
    %1835 = vmatpush.msra.mxu0 0.0
    %1836 = vmatpush.msra.mxu0 0.0
    %1837 = vmatpush.msra.mxu0 0.0
    %1838 = vmatpush.msra.mxu0 0.0
    %1839 = vmatpush.msra.mxu0 0.0
    %1840 = vmatpush.msra.mxu0 0.0
    %1841 = vmatpush.msra.mxu0 0.0
    %1842 = vmatpush.msra.mxu0 0.0
    %1843 = vmatpush.msra.mxu0 0.0
    %1844 = vmatpush.msra.mxu0 0.0
    %1845 = vmatpush.msra.mxu0 0.0
    %1846 = vmatpush.msra.mxu0 %v1826
    %1847 = vmatmul.f32.gmra.mxu0 %v1829
    %v1848 = vpop.f32.mrf.mxu0
    %v1849 = vadd.f32 0.0, %v1848
    %1850 = vdwg.mxu0
    %1851 = vrot.lane.b32.xlu0 %v329, 48
    %v1852 = vpop.permute.xlu0 %1851
    %v1855 = vsel %vm345, %v1693, 0
    %1857 = vmatpush.msra.mxu0 0.0
    %1858 = vmatpush.msra.mxu0 0.0
    %1859 = vmatpush.msra.mxu0 0.0
    %1860 = vmatpush.msra.mxu0 0.0
    %1861 = vmatpush.msra.mxu0 0.0
    %1862 = vmatpush.msra.mxu0 0.0
    %1863 = vmatpush.msra.mxu0 0.0
    %1864 = vmatpush.msra.mxu0 0.0
    %1865 = vmatpush.msra.mxu0 0.0
    %1866 = vmatpush.msra.mxu0 0.0
    %1867 = vmatpush.msra.mxu0 0.0
    %1868 = vmatpush.msra.mxu0 0.0
    %1869 = vmatpush.msra.mxu0 0.0
    %1870 = vmatpush.msra.mxu0 0.0
    %1871 = vmatpush.msra.mxu0 0.0
    %1872 = vmatpush.msra.mxu0 %v1852
    %1873 = vmatmul.f32.gmra.mxu0 %v1855
    %v1874 = vpop.f32.mrf.mxu0
    %v1875 = vadd.f32 0.0, %v1874
    %1876 = vdwg.mxu0
    %1877 = vrot.lane.b32.xlu0 %v332, 48
    %v1878 = vpop.permute.xlu0 %1877
    %v1881 = vsel %vm345, %v1694, 0
    %1883 = vmatpush.msra.mxu0 0.0
    %1884 = vmatpush.msra.mxu0 0.0
    %1885 = vmatpush.msra.mxu0 0.0
    %1886 = vmatpush.msra.mxu0 0.0
    %1887 = vmatpush.msra.mxu0 0.0
    %1888 = vmatpush.msra.mxu0 0.0
    %1889 = vmatpush.msra.mxu0 0.0
    %1890 = vmatpush.msra.mxu0 0.0
    %1891 = vmatpush.msra.mxu0 0.0
    %1892 = vmatpush.msra.mxu0 0.0
    %1893 = vmatpush.msra.mxu0 0.0
    %1894 = vmatpush.msra.mxu0 0.0
    %1895 = vmatpush.msra.mxu0 0.0
    %1896 = vmatpush.msra.mxu0 0.0
    %1897 = vmatpush.msra.mxu0 0.0
    %1898 = vmatpush.msra.mxu0 %v1878
    %1899 = vmatmul.f32.gmra.mxu0 %v1881
    %v1900 = vpop.f32.mrf.mxu0
    %v1901 = vadd.f32 0.0, %v1900
    %1902 = vdwg.mxu0
    %1903 = vrot.lane.b32.xlu0 %v334, 104
    %v1904 = vpop.permute.xlu0 %1903
    %1905 = vrot.lane.b32.xlu0 %v311, 72
    %v1906 = vpop.permute.xlu0 %1905
    %v1907 = vsel %vm345, %v1904, 0
    %v1909 = vsel %vm345, %v1906, 0
    %1911 = vmatpush.xpose.msra.mxu0 0.0
    %1912 = vmatpush.xpose.msra.mxu0 0.0
    %1913 = vmatpush.xpose.msra.mxu0 0.0
    %1914 = vmatpush.xpose.msra.mxu0 0.0
    %1915 = vmatpush.xpose.msra.mxu0 0.0
    %1916 = vmatpush.xpose.msra.mxu0 0.0
    %1917 = vmatpush.xpose.msra.mxu0 0.0
    %1918 = vmatpush.xpose.msra.mxu0 0.0
    %1919 = vmatpush.xpose.msra.mxu0 0.0
    %1920 = vmatpush.xpose.msra.mxu0 0.0
    %1921 = vmatpush.xpose.msra.mxu0 0.0
    %1922 = vmatpush.xpose.msra.mxu0 0.0
    %1923 = vmatpush.xpose.msra.mxu0 0.0
    %1924 = vmatpush.xpose.msra.mxu0 0.0
    %1925 = vmatpush.xpose.msra.mxu0 0.0
    %1926 = vmatpush.xpose.msra.mxu0 %v1909
    %1927 = vmatmul.f32.gmra.mxu0 %v1907
    %v1928 = vpop.f32.mrf.mxu0
    %v1929 = vadd.f32 0.0, %v1928
    %1930 = vdwg.mxu0
    %1931 = vrot.lane.b32.xlu0 %v335, 104
    %v1932 = vpop.permute.xlu0 %1931
    %1933 = vrot.lane.b32.xlu0 %v314, 72
    %v1934 = vpop.permute.xlu0 %1933
    %v1935 = vsel %vm345, %v1932, 0
    %v1937 = vsel %vm345, %v1934, 0
    %1939 = vmatpush.xpose.msra.mxu0 0.0
    %1940 = vmatpush.xpose.msra.mxu0 0.0
    %1941 = vmatpush.xpose.msra.mxu0 0.0
    %1942 = vmatpush.xpose.msra.mxu0 0.0
    %1943 = vmatpush.xpose.msra.mxu0 0.0
    %1944 = vmatpush.xpose.msra.mxu0 0.0
    %1945 = vmatpush.xpose.msra.mxu0 0.0
    %1946 = vmatpush.xpose.msra.mxu0 0.0
    %1947 = vmatpush.xpose.msra.mxu0 0.0
    %1948 = vmatpush.xpose.msra.mxu0 0.0
    %1949 = vmatpush.xpose.msra.mxu0 0.0
    %1950 = vmatpush.xpose.msra.mxu0 0.0
    %1951 = vmatpush.xpose.msra.mxu0 0.0
    %1952 = vmatpush.xpose.msra.mxu0 0.0
    %1953 = vmatpush.xpose.msra.mxu0 0.0
    %1954 = vmatpush.xpose.msra.mxu0 %v1937
    %1955 = vmatmul.f32.gmra.mxu0 %v1935
    %v1956 = vpop.f32.mrf.mxu0
    %v1957 = vadd.f32 0.0, %v1956
    %1958 = vdwg.mxu0
    %1959 = vrot.lane.b32.xlu0 %v336, 104
    %v1960 = vpop.permute.xlu0 %1959
    %1961 = vrot.lane.b32.xlu0 %v317, 72
    %v1962 = vpop.permute.xlu0 %1961
    %v1963 = vsel %vm345, %v1960, 0
    %v1965 = vsel %vm345, %v1962, 0
    %1967 = vmatpush.xpose.msra.mxu0 0.0
    %1968 = vmatpush.xpose.msra.mxu0 0.0
    %1969 = vmatpush.xpose.msra.mxu0 0.0
    %1970 = vmatpush.xpose.msra.mxu0 0.0
    %1971 = vmatpush.xpose.msra.mxu0 0.0
    %1972 = vmatpush.xpose.msra.mxu0 0.0
    %1973 = vmatpush.xpose.msra.mxu0 0.0
    %1974 = vmatpush.xpose.msra.mxu0 0.0
    %1975 = vmatpush.xpose.msra.mxu0 0.0
    %1976 = vmatpush.xpose.msra.mxu0 0.0
    %1977 = vmatpush.xpose.msra.mxu0 0.0
    %1978 = vmatpush.xpose.msra.mxu0 0.0
    %1979 = vmatpush.xpose.msra.mxu0 0.0
    %1980 = vmatpush.xpose.msra.mxu0 0.0
    %1981 = vmatpush.xpose.msra.mxu0 0.0
    %1982 = vmatpush.xpose.msra.mxu0 %v1965
    %1983 = vmatmul.f32.gmra.mxu0 %v1963
    %v1984 = vpop.f32.mrf.mxu0
    %v1985 = vadd.f32 0.0, %v1984
    %1986 = vdwg.mxu0
    %1987 = vrot.lane.b32.xlu0 %v337, 104
    %v1988 = vpop.permute.xlu0 %1987
    %1989 = vrot.lane.b32.xlu0 %v320, 72
    %v1990 = vpop.permute.xlu0 %1989
    %v1991 = vsel %vm345, %v1988, 0
    %v1993 = vsel %vm345, %v1990, 0
    %1995 = vmatpush.xpose.msra.mxu0 0.0
    %1996 = vmatpush.xpose.msra.mxu0 0.0
    %1997 = vmatpush.xpose.msra.mxu0 0.0
    %1998 = vmatpush.xpose.msra.mxu0 0.0
    %1999 = vmatpush.xpose.msra.mxu0 0.0
    %2000 = vmatpush.xpose.msra.mxu0 0.0
    %2001 = vmatpush.xpose.msra.mxu0 0.0
    %2002 = vmatpush.xpose.msra.mxu0 0.0
    %2003 = vmatpush.xpose.msra.mxu0 0.0
    %2004 = vmatpush.xpose.msra.mxu0 0.0
    %2005 = vmatpush.xpose.msra.mxu0 0.0
    %2006 = vmatpush.xpose.msra.mxu0 0.0
    %2007 = vmatpush.xpose.msra.mxu0 0.0
    %2008 = vmatpush.xpose.msra.mxu0 0.0
    %2009 = vmatpush.xpose.msra.mxu0 0.0
    %2010 = vmatpush.xpose.msra.mxu0 %v1993
    %2011 = vmatmul.f32.gmra.mxu0 %v1991
    %v2012 = vpop.f32.mrf.mxu0
    %v2013 = vadd.f32 0.0, %v2012
    %2014 = vdwg.mxu0
    %2015 = vrot.lane.b32.xlu0 %v338, 104
    %v2016 = vpop.permute.xlu0 %2015
    %2017 = vrot.lane.b32.xlu0 %v323, 72
    %v2018 = vpop.permute.xlu0 %2017
    %v2019 = vsel %vm345, %v2016, 0
    %v2021 = vsel %vm345, %v2018, 0
    %2023 = vmatpush.xpose.msra.mxu0 0.0
    %2024 = vmatpush.xpose.msra.mxu0 0.0
    %2025 = vmatpush.xpose.msra.mxu0 0.0
    %2026 = vmatpush.xpose.msra.mxu0 0.0
    %2027 = vmatpush.xpose.msra.mxu0 0.0
    %2028 = vmatpush.xpose.msra.mxu0 0.0
    %2029 = vmatpush.xpose.msra.mxu0 0.0
    %2030 = vmatpush.xpose.msra.mxu0 0.0
    %2031 = vmatpush.xpose.msra.mxu0 0.0
    %2032 = vmatpush.xpose.msra.mxu0 0.0
    %2033 = vmatpush.xpose.msra.mxu0 0.0
    %2034 = vmatpush.xpose.msra.mxu0 0.0
    %2035 = vmatpush.xpose.msra.mxu0 0.0
    %2036 = vmatpush.xpose.msra.mxu0 0.0
    %2037 = vmatpush.xpose.msra.mxu0 0.0
    %2038 = vmatpush.xpose.msra.mxu0 %v2021
    %2039 = vmatmul.f32.gmra.mxu0 %v2019
    %v2040 = vpop.f32.mrf.mxu0
    %v2041 = vadd.f32 0.0, %v2040
    %2042 = vdwg.mxu0
    %2043 = vrot.lane.b32.xlu0 %v339, 104
    %v2044 = vpop.permute.xlu0 %2043
    %2045 = vrot.lane.b32.xlu0 %v326, 72
    %v2046 = vpop.permute.xlu0 %2045
    %v2047 = vsel %vm345, %v2044, 0
    %v2049 = vsel %vm345, %v2046, 0
    %2051 = vmatpush.xpose.msra.mxu0 0.0
    %2052 = vmatpush.xpose.msra.mxu0 0.0
    %2053 = vmatpush.xpose.msra.mxu0 0.0
    %2054 = vmatpush.xpose.msra.mxu0 0.0
    %2055 = vmatpush.xpose.msra.mxu0 0.0
    %2056 = vmatpush.xpose.msra.mxu0 0.0
    %2057 = vmatpush.xpose.msra.mxu0 0.0
    %2058 = vmatpush.xpose.msra.mxu0 0.0
    %2059 = vmatpush.xpose.msra.mxu0 0.0
    %2060 = vmatpush.xpose.msra.mxu0 0.0
    %2061 = vmatpush.xpose.msra.mxu0 0.0
    %2062 = vmatpush.xpose.msra.mxu0 0.0
    %2063 = vmatpush.xpose.msra.mxu0 0.0
    %2064 = vmatpush.xpose.msra.mxu0 0.0
    %2065 = vmatpush.xpose.msra.mxu0 0.0
    %2066 = vmatpush.xpose.msra.mxu0 %v2049
    %2067 = vmatmul.f32.gmra.mxu0 %v2047
    %v2068 = vpop.f32.mrf.mxu0
    %v2069 = vadd.f32 0.0, %v2068
    %2070 = vdwg.mxu0
    %2071 = vrot.lane.b32.xlu0 %v340, 104
    %v2072 = vpop.permute.xlu0 %2071
    %2073 = vrot.lane.b32.xlu0 %v329, 72
    %v2074 = vpop.permute.xlu0 %2073
    %v2075 = vsel %vm345, %v2072, 0
    %v2077 = vsel %vm345, %v2074, 0
    %2079 = vmatpush.xpose.msra.mxu0 0.0
    %2080 = vmatpush.xpose.msra.mxu0 0.0
    %2081 = vmatpush.xpose.msra.mxu0 0.0
    %2082 = vmatpush.xpose.msra.mxu0 0.0
    %2083 = vmatpush.xpose.msra.mxu0 0.0
    %2084 = vmatpush.xpose.msra.mxu0 0.0
    %2085 = vmatpush.xpose.msra.mxu0 0.0
    %2086 = vmatpush.xpose.msra.mxu0 0.0
    %2087 = vmatpush.xpose.msra.mxu0 0.0
    %2088 = vmatpush.xpose.msra.mxu0 0.0
    %2089 = vmatpush.xpose.msra.mxu0 0.0
    %2090 = vmatpush.xpose.msra.mxu0 0.0
    %2091 = vmatpush.xpose.msra.mxu0 0.0
    %2092 = vmatpush.xpose.msra.mxu0 0.0
    %2093 = vmatpush.xpose.msra.mxu0 0.0
    %2094 = vmatpush.xpose.msra.mxu0 %v2077
    %2095 = vmatmul.f32.gmra.mxu0 %v2075
    %v2096 = vpop.f32.mrf.mxu0
    %v2097 = vadd.f32 0.0, %v2096
    %2098 = vdwg.mxu0
    %2099 = vrot.lane.b32.xlu0 %v341, 104
    %v2100 = vpop.permute.xlu0 %2099
    %2101 = vrot.lane.b32.xlu0 %v332, 72
    %v2102 = vpop.permute.xlu0 %2101
    %v2103 = vsel %vm345, %v2100, 0
    %v2105 = vsel %vm345, %v2102, 0
    %2107 = vmatpush.xpose.msra.mxu0 0.0
    %2108 = vmatpush.xpose.msra.mxu0 0.0
    %2109 = vmatpush.xpose.msra.mxu0 0.0
    %2110 = vmatpush.xpose.msra.mxu0 0.0
    %2111 = vmatpush.xpose.msra.mxu0 0.0
    %2112 = vmatpush.xpose.msra.mxu0 0.0
    %2113 = vmatpush.xpose.msra.mxu0 0.0
    %2114 = vmatpush.xpose.msra.mxu0 0.0
    %2115 = vmatpush.xpose.msra.mxu0 0.0
    %2116 = vmatpush.xpose.msra.mxu0 0.0
    %2117 = vmatpush.xpose.msra.mxu0 0.0
    %2118 = vmatpush.xpose.msra.mxu0 0.0
    %2119 = vmatpush.xpose.msra.mxu0 0.0
    %2120 = vmatpush.xpose.msra.mxu0 0.0
    %2121 = vmatpush.xpose.msra.mxu0 0.0
    %2122 = vmatpush.xpose.msra.mxu0 %v2105
    %2123 = vmatmul.f32.gmra.mxu0 %v2103
    %v2124 = vpop.f32.mrf.mxu0
    %v2125 = vadd.f32 0.0, %v2124
    %2126 = vdwg.mxu0
    %v2127 = vsel %vm345, %v1929, -inf
    %2128 = vmax.xlane.f32.xlu0 %v2127
    %v2129 = vpop.xlane.xlu0 %2128
    %v2130 = vsel %vm345, %v1957, -inf
    %2131 = vmax.xlane.f32.xlu0 %v2130
    %v2132 = vpop.xlane.xlu0 %2131
    %v2133 = vsel %vm345, %v1985, -inf
    %2134 = vmax.xlane.f32.xlu0 %v2133
    %v2135 = vpop.xlane.xlu0 %2134
    %v2136 = vsel %vm345, %v2013, -inf
    %2137 = vmax.xlane.f32.xlu0 %v2136
    %v2138 = vpop.xlane.xlu0 %2137
    %v2139 = vsel %vm345, %v2041, -inf
    %2140 = vmax.xlane.f32.xlu0 %v2139
    %v2141 = vpop.xlane.xlu0 %2140
    %v2142 = vsel %vm345, %v2069, -inf
    %2143 = vmax.xlane.f32.xlu0 %v2142
    %v2144 = vpop.xlane.xlu0 %2143
    %v2145 = vsel %vm345, %v2097, -inf
    %2146 = vmax.xlane.f32.xlu0 %v2145
    %v2147 = vpop.xlane.xlu0 %2146
    %v2148 = vsel %vm345, %v2125, -inf
    %2149 = vmax.xlane.f32.xlu0 %v2148
    %v2150 = vpop.xlane.xlu0 %2149
    %v2151 = vsub.f32 %v1929, %v2129
    %v2152 = vsub.f32 %v1957, %v2132
    %v2153 = vsub.f32 %v1985, %v2135
    %v2154 = vsub.f32 %v2013, %v2138
    %v2155 = vsub.f32 %v2041, %v2141
    %v2156 = vsub.f32 %v2069, %v2144
    %v2157 = vsub.f32 %v2097, %v2147
    %v2158 = vsub.f32 %v2125, %v2150
    %v2159 = vmul.f32 %v2151, 1.442695
    %v2160 = vpow.pop %v2159
    %v2161 = vmul.f32 %v2152, 1.442695
    %v2162 = vpow.pop %v2161
    %v2163 = vmul.f32 %v2153, 1.442695
    %v2164 = vpow.pop %v2163
    %v2165 = vmul.f32 %v2154, 1.442695
    %v2166 = vpow.pop %v2165
    %v2167 = vmul.f32 %v2155, 1.442695
    %v2168 = vpow.pop %v2167
    %v2169 = vmul.f32 %v2156, 1.442695
    %v2170 = vpow.pop %v2169
    %v2171 = vmul.f32 %v2157, 1.442695
    %v2172 = vpow.pop %v2171
    %v2173 = vmul.f32 %v2158, 1.442695
    %v2174 = vpow.pop %v2173
    %v2175 = vsel %vm345, %v2160, 0.0
    %2176 = vadd.xlane.f32.xlu0 %v2175
    %v2177 = vpop.xlane.xlu0 %2176
    %v2178 = vsel %vm345, %v2162, 0.0
    %2179 = vadd.xlane.f32.xlu0 %v2178
    %v2180 = vpop.xlane.xlu0 %2179
    %v2181 = vsel %vm345, %v2164, 0.0
    %2182 = vadd.xlane.f32.xlu0 %v2181
    %v2183 = vpop.xlane.xlu0 %2182
    %v2184 = vsel %vm345, %v2166, 0.0
    %2185 = vadd.xlane.f32.xlu0 %v2184
    %v2186 = vpop.xlane.xlu0 %2185
    %v2187 = vsel %vm345, %v2168, 0.0
    %2188 = vadd.xlane.f32.xlu0 %v2187
    %v2189 = vpop.xlane.xlu0 %2188
    %v2190 = vsel %vm345, %v2170, 0.0
    %2191 = vadd.xlane.f32.xlu0 %v2190
    %v2192 = vpop.xlane.xlu0 %2191
    %v2193 = vsel %vm345, %v2172, 0.0
    %2194 = vadd.xlane.f32.xlu0 %v2193
    %v2195 = vpop.xlane.xlu0 %2194
    %v2196 = vsel %vm345, %v2174, 0.0
    %2197 = vadd.xlane.f32.xlu0 %v2196
    %v2198 = vpop.xlane.xlu0 %2197
    %v2199 = vrcp.pop %v2177
    %v2200 = vrcp.pop %v2180
    %v2201 = vrcp.pop %v2183
    %v2202 = vrcp.pop %v2186
    %v2203 = vrcp.pop %v2189
    %v2204 = vrcp.pop %v2192
    %v2205 = vrcp.pop %v2195
    %v2206 = vrcp.pop %v2198
    %v2207 = vmul.f32 %v2160, %v2199
    %v2208 = vmul.f32 %v2162, %v2200
    %v2209 = vmul.f32 %v2164, %v2201
    %v2210 = vmul.f32 %v2166, %v2202
    %v2211 = vmul.f32 %v2168, %v2203
    %v2212 = vmul.f32 %v2170, %v2204
    %v2213 = vmul.f32 %v2172, %v2205
    %v2214 = vmul.f32 %v2174, %v2206
    %2215 = vrot.lane.b32.xlu0 %v311, 40
    %v2216 = vpop.permute.xlu0 %2215
    %v2219 = vsel %vm345, %v2207, 0
    %2221 = vmatpush.msra.mxu0 0.0
    %2222 = vmatpush.msra.mxu0 0.0
    %2223 = vmatpush.msra.mxu0 0.0
    %2224 = vmatpush.msra.mxu0 0.0
    %2225 = vmatpush.msra.mxu0 0.0
    %2226 = vmatpush.msra.mxu0 0.0
    %2227 = vmatpush.msra.mxu0 0.0
    %2228 = vmatpush.msra.mxu0 0.0
    %2229 = vmatpush.msra.mxu0 0.0
    %2230 = vmatpush.msra.mxu0 0.0
    %2231 = vmatpush.msra.mxu0 0.0
    %2232 = vmatpush.msra.mxu0 0.0
    %2233 = vmatpush.msra.mxu0 0.0
    %2234 = vmatpush.msra.mxu0 0.0
    %2235 = vmatpush.msra.mxu0 0.0
    %2236 = vmatpush.msra.mxu0 %v2216
    %2237 = vmatmul.f32.gmra.mxu0 %v2219
    %v2238 = vpop.f32.mrf.mxu0
    %v2239 = vadd.f32 0.0, %v2238
    %2240 = vdwg.mxu0
    %2241 = vrot.lane.b32.xlu0 %v314, 40
    %v2242 = vpop.permute.xlu0 %2241
    %v2245 = vsel %vm345, %v2208, 0
    %2247 = vmatpush.msra.mxu0 0.0
    %2248 = vmatpush.msra.mxu0 0.0
    %2249 = vmatpush.msra.mxu0 0.0
    %2250 = vmatpush.msra.mxu0 0.0
    %2251 = vmatpush.msra.mxu0 0.0
    %2252 = vmatpush.msra.mxu0 0.0
    %2253 = vmatpush.msra.mxu0 0.0
    %2254 = vmatpush.msra.mxu0 0.0
    %2255 = vmatpush.msra.mxu0 0.0
    %2256 = vmatpush.msra.mxu0 0.0
    %2257 = vmatpush.msra.mxu0 0.0
    %2258 = vmatpush.msra.mxu0 0.0
    %2259 = vmatpush.msra.mxu0 0.0
    %2260 = vmatpush.msra.mxu0 0.0
    %2261 = vmatpush.msra.mxu0 0.0
    %2262 = vmatpush.msra.mxu0 %v2242
    %2263 = vmatmul.f32.gmra.mxu0 %v2245
    %v2264 = vpop.f32.mrf.mxu0
    %v2265 = vadd.f32 0.0, %v2264
    %2266 = vdwg.mxu0
    %2267 = vrot.lane.b32.xlu0 %v317, 40
    %v2268 = vpop.permute.xlu0 %2267
    %v2271 = vsel %vm345, %v2209, 0
    %2273 = vmatpush.msra.mxu0 0.0
    %2274 = vmatpush.msra.mxu0 0.0
    %2275 = vmatpush.msra.mxu0 0.0
    %2276 = vmatpush.msra.mxu0 0.0
    %2277 = vmatpush.msra.mxu0 0.0
    %2278 = vmatpush.msra.mxu0 0.0
    %2279 = vmatpush.msra.mxu0 0.0
    %2280 = vmatpush.msra.mxu0 0.0
    %2281 = vmatpush.msra.mxu0 0.0
    %2282 = vmatpush.msra.mxu0 0.0
    %2283 = vmatpush.msra.mxu0 0.0
    %2284 = vmatpush.msra.mxu0 0.0
    %2285 = vmatpush.msra.mxu0 0.0
    %2286 = vmatpush.msra.mxu0 0.0
    %2287 = vmatpush.msra.mxu0 0.0
    %2288 = vmatpush.msra.mxu0 %v2268
    %2289 = vmatmul.f32.gmra.mxu0 %v2271
    %v2290 = vpop.f32.mrf.mxu0
    %v2291 = vadd.f32 0.0, %v2290
    %2292 = vdwg.mxu0
    %2293 = vrot.lane.b32.xlu0 %v320, 40
    %v2294 = vpop.permute.xlu0 %2293
    %v2297 = vsel %vm345, %v2210, 0
    %2299 = vmatpush.msra.mxu0 0.0
    %2300 = vmatpush.msra.mxu0 0.0
    %2301 = vmatpush.msra.mxu0 0.0
    %2302 = vmatpush.msra.mxu0 0.0
    %2303 = vmatpush.msra.mxu0 0.0
    %2304 = vmatpush.msra.mxu0 0.0
    %2305 = vmatpush.msra.mxu0 0.0
    %2306 = vmatpush.msra.mxu0 0.0
    %2307 = vmatpush.msra.mxu0 0.0
    %2308 = vmatpush.msra.mxu0 0.0
    %2309 = vmatpush.msra.mxu0 0.0
    %2310 = vmatpush.msra.mxu0 0.0
    %2311 = vmatpush.msra.mxu0 0.0
    %2312 = vmatpush.msra.mxu0 0.0
    %2313 = vmatpush.msra.mxu0 0.0
    %2314 = vmatpush.msra.mxu0 %v2294
    %2315 = vmatmul.f32.gmra.mxu0 %v2297
    %v2316 = vpop.f32.mrf.mxu0
    %v2317 = vadd.f32 0.0, %v2316
    %2318 = vdwg.mxu0
    %2319 = vrot.lane.b32.xlu0 %v323, 40
    %v2320 = vpop.permute.xlu0 %2319
    %v2323 = vsel %vm345, %v2211, 0
    %2325 = vmatpush.msra.mxu0 0.0
    %2326 = vmatpush.msra.mxu0 0.0
    %2327 = vmatpush.msra.mxu0 0.0
    %2328 = vmatpush.msra.mxu0 0.0
    %2329 = vmatpush.msra.mxu0 0.0
    %2330 = vmatpush.msra.mxu0 0.0
    %2331 = vmatpush.msra.mxu0 0.0
    %2332 = vmatpush.msra.mxu0 0.0
    %2333 = vmatpush.msra.mxu0 0.0
    %2334 = vmatpush.msra.mxu0 0.0
    %2335 = vmatpush.msra.mxu0 0.0
    %2336 = vmatpush.msra.mxu0 0.0
    %2337 = vmatpush.msra.mxu0 0.0
    %2338 = vmatpush.msra.mxu0 0.0
    %2339 = vmatpush.msra.mxu0 0.0
    %2340 = vmatpush.msra.mxu0 %v2320
    %2341 = vmatmul.f32.gmra.mxu0 %v2323
    %v2342 = vpop.f32.mrf.mxu0
    %v2343 = vadd.f32 0.0, %v2342
    %2344 = vdwg.mxu0
    %2345 = vrot.lane.b32.xlu0 %v326, 40
    %v2346 = vpop.permute.xlu0 %2345
    %v2349 = vsel %vm345, %v2212, 0
    %2351 = vmatpush.msra.mxu0 0.0
    %2352 = vmatpush.msra.mxu0 0.0
    %2353 = vmatpush.msra.mxu0 0.0
    %2354 = vmatpush.msra.mxu0 0.0
    %2355 = vmatpush.msra.mxu0 0.0
    %2356 = vmatpush.msra.mxu0 0.0
    %2357 = vmatpush.msra.mxu0 0.0
    %2358 = vmatpush.msra.mxu0 0.0
    %2359 = vmatpush.msra.mxu0 0.0
    %2360 = vmatpush.msra.mxu0 0.0
    %2361 = vmatpush.msra.mxu0 0.0
    %2362 = vmatpush.msra.mxu0 0.0
    %2363 = vmatpush.msra.mxu0 0.0
    %2364 = vmatpush.msra.mxu0 0.0
    %2365 = vmatpush.msra.mxu0 0.0
    %2366 = vmatpush.msra.mxu0 %v2346
    %2367 = vmatmul.f32.gmra.mxu0 %v2349
    %v2368 = vpop.f32.mrf.mxu0
    %v2369 = vadd.f32 0.0, %v2368
    %2370 = vdwg.mxu0
    %2371 = vrot.lane.b32.xlu0 %v329, 40
    %v2372 = vpop.permute.xlu0 %2371
    %v2375 = vsel %vm345, %v2213, 0
    %2377 = vmatpush.msra.mxu0 0.0
    %2378 = vmatpush.msra.mxu0 0.0
    %2379 = vmatpush.msra.mxu0 0.0
    %2380 = vmatpush.msra.mxu0 0.0
    %2381 = vmatpush.msra.mxu0 0.0
    %2382 = vmatpush.msra.mxu0 0.0
    %2383 = vmatpush.msra.mxu0 0.0
    %2384 = vmatpush.msra.mxu0 0.0
    %2385 = vmatpush.msra.mxu0 0.0
    %2386 = vmatpush.msra.mxu0 0.0
    %2387 = vmatpush.msra.mxu0 0.0
    %2388 = vmatpush.msra.mxu0 0.0
    %2389 = vmatpush.msra.mxu0 0.0
    %2390 = vmatpush.msra.mxu0 0.0
    %2391 = vmatpush.msra.mxu0 0.0
    %2392 = vmatpush.msra.mxu0 %v2372
    %2393 = vmatmul.f32.gmra.mxu0 %v2375
    %v2394 = vpop.f32.mrf.mxu0
    %v2395 = vadd.f32 0.0, %v2394
    %2396 = vdwg.mxu0
    %2397 = vrot.lane.b32.xlu0 %v332, 40
    %v2398 = vpop.permute.xlu0 %2397
    %v2401 = vsel %vm345, %v2214, 0
    %2403 = vmatpush.msra.mxu0 0.0
    %2404 = vmatpush.msra.mxu0 0.0
    %2405 = vmatpush.msra.mxu0 0.0
    %2406 = vmatpush.msra.mxu0 0.0
    %2407 = vmatpush.msra.mxu0 0.0
    %2408 = vmatpush.msra.mxu0 0.0
    %2409 = vmatpush.msra.mxu0 0.0
    %2410 = vmatpush.msra.mxu0 0.0
    %2411 = vmatpush.msra.mxu0 0.0
    %2412 = vmatpush.msra.mxu0 0.0
    %2413 = vmatpush.msra.mxu0 0.0
    %2414 = vmatpush.msra.mxu0 0.0
    %2415 = vmatpush.msra.mxu0 0.0
    %2416 = vmatpush.msra.mxu0 0.0
    %2417 = vmatpush.msra.mxu0 0.0
    %2418 = vmatpush.msra.mxu0 %v2398
    %2419 = vmatmul.f32.gmra.mxu0 %v2401
    %v2420 = vpop.f32.mrf.mxu0
    %v2421 = vadd.f32 0.0, %v2420
    %2422 = vdwg.mxu0
    %2431 = vrot.lane.b32.xlu0 %v1199, 8
    %v2432 = vpop.permute.xlu0 %2431
    %2433 = vrot.lane.b32.xlu0 %v1225, 8
    %v2434 = vpop.permute.xlu0 %2433
    %2435 = vrot.lane.b32.xlu0 %v1251, 8
    %v2436 = vpop.permute.xlu0 %2435
    %2437 = vrot.lane.b32.xlu0 %v1277, 8
    %v2438 = vpop.permute.xlu0 %2437
    %2439 = vrot.lane.b32.xlu0 %v1303, 8
    %v2440 = vpop.permute.xlu0 %2439
    %2441 = vrot.lane.b32.xlu0 %v1329, 8
    %v2442 = vpop.permute.xlu0 %2441
    %2443 = vrot.lane.b32.xlu0 %v1355, 8
    %v2444 = vpop.permute.xlu0 %2443
    %2445 = vrot.lane.b32.xlu0 %v1381, 8
    %v2446 = vpop.permute.xlu0 %2445
    %2463 = vrot.lane.b32.xlu0 %v1719, 16
    %v2464 = vpop.permute.xlu0 %2463
    %2465 = vrot.lane.b32.xlu0 %v1745, 16
    %v2466 = vpop.permute.xlu0 %2465
    %2467 = vrot.lane.b32.xlu0 %v1771, 16
    %v2468 = vpop.permute.xlu0 %2467
    %2469 = vrot.lane.b32.xlu0 %v1797, 16
    %v2470 = vpop.permute.xlu0 %2469
    %2471 = vrot.lane.b32.xlu0 %v1823, 16
    %v2472 = vpop.permute.xlu0 %2471
    %2473 = vrot.lane.b32.xlu0 %v1849, 16
    %v2474 = vpop.permute.xlu0 %2473
    %2475 = vrot.lane.b32.xlu0 %v1875, 16
    %v2476 = vpop.permute.xlu0 %2475
    %2477 = vrot.lane.b32.xlu0 %v1901, 16
    %v2478 = vpop.permute.xlu0 %2477
    %2495 = vrot.lane.b32.xlu0 %v2239, 24
    %v2496 = vpop.permute.xlu0 %2495
    %2497 = vrot.lane.b32.xlu0 %v2265, 24
    %v2498 = vpop.permute.xlu0 %2497
    %2499 = vrot.lane.b32.xlu0 %v2291, 24
    %v2500 = vpop.permute.xlu0 %2499
    %2501 = vrot.lane.b32.xlu0 %v2317, 24
    %v2502 = vpop.permute.xlu0 %2501
    %2503 = vrot.lane.b32.xlu0 %v2343, 24
    %v2504 = vpop.permute.xlu0 %2503
    %2505 = vrot.lane.b32.xlu0 %v2369, 24
    %v2506 = vpop.permute.xlu0 %2505
    %2507 = vrot.lane.b32.xlu0 %v2395, 24
    %v2508 = vpop.permute.xlu0 %2507
    %2509 = vrot.lane.b32.xlu0 %v2421, 24
    %v2510 = vpop.permute.xlu0 %2509
    %v2519 = vsel %vm345, %v679, %v2432
    %v2520 = vsel %vm345, %v705, %v2434
    %v2521 = vsel %vm345, %v731, %v2436
    %v2522 = vsel %vm345, %v757, %v2438
    %v2523 = vsel %vm345, %v783, %v2440
    %v2524 = vsel %vm345, %v809, %v2442
    %v2525 = vsel %vm345, %v835, %v2444
    %v2526 = vsel %vm345, %v861, %v2446
    %vm2527 = vcmask 130048
    %v2528 = vsel %vm2527, %v2519, %v2464
    %v2529 = vsel %vm2527, %v2520, %v2466
    %v2530 = vsel %vm2527, %v2521, %v2468
    %v2531 = vsel %vm2527, %v2522, %v2470
    %v2532 = vsel %vm2527, %v2523, %v2472
    %v2533 = vsel %vm2527, %v2524, %v2474
    %v2534 = vsel %vm2527, %v2525, %v2476
    %v2535 = vsel %vm2527, %v2526, %v2478
    %vm2536 = vcmask 195584
    %v2537 = vsel %vm2536, %v2528, %v2496
    %v2538 = vsel %vm2536, %v2529, %v2498
    %v2539 = vsel %vm2536, %v2530, %v2500
    %v2540 = vsel %vm2536, %v2531, %v2502
    %v2541 = vsel %vm2536, %v2532, %v2504
    %v2542 = vsel %vm2536, %v2533, %v2506
    %v2543 = vsel %vm2536, %v2534, %v2508
    %v2544 = vsel %vm2536, %v2535, %v2510
    %v2545 = vld [vmem:[%s3] sm:$0xff]
    %v2546 = vld [vmem:[%s3 + $0x8] sm:$0xff]
    %v2547 = vld [vmem:[%s3 + $0x10] sm:$0xff]
    %v2548 = vld [vmem:[%s3 + $0x18] sm:$0xff]
    %v2549 = vld [vmem:[%s4] sm:$0x1]
    %v2551 = vperm.slane %v2549, 0
    %v2554 = vsel %vm55, %v2537, 0
    %v2557 = vsel %vm55, %v2538, 0
    %v2560 = vsel %vm55, %v2539, 0
    %v2563 = vsel %vm55, %v2540, 0
    %v2566 = vsel %vm55, %v2541, 0
    %v2569 = vsel %vm55, %v2542, 0
    %v2572 = vsel %vm55, %v2543, 0
    %v2575 = vsel %vm55, %v2544, 0
    %2577 = vmatpush.msra.mxu0 0.0
    %2578 = vmatpush.msra.mxu0 0.0
    %2579 = vmatpush.msra.mxu0 0.0
    %2580 = vmatpush.msra.mxu0 0.0
    %2581 = vmatpush.msra.mxu0 0.0
    %2582 = vmatpush.msra.mxu0 0.0
    %2583 = vmatpush.msra.mxu0 0.0
    %2584 = vmatpush.msra.mxu0 0.0
    %2585 = vmatpush.msra.mxu0 0.0
    %2586 = vmatpush.msra.mxu0 0.0
    %2587 = vmatpush.msra.mxu0 0.0
    %2588 = vmatpush.msra.mxu0 0.0
    %2589 = vmatpush.msra.mxu0 %v2548
    %2590 = vmatpush.msra.mxu0 %v2547
    %2591 = vmatpush.msra.mxu0 %v2546
    %2592 = vmatpush.msra.mxu0 %v2545
    %2593 = vmatmul.f32.gmra.mxu0 %v2554
    %v2594 = vpop.f32.mrf.mxu0
    %v2595 = vadd.f32 %v2551, %v2594
    %2596 = vmatmul.f32.gmra.mxu0 %v2557
    %v2597 = vpop.f32.mrf.mxu0
    %v2598 = vadd.f32 %v2551, %v2597
    %2599 = vmatmul.f32.gmra.mxu0 %v2560
    %v2600 = vpop.f32.mrf.mxu0
    %v2601 = vadd.f32 %v2551, %v2600
    %2602 = vmatmul.f32.gmra.mxu0 %v2563
    %v2603 = vpop.f32.mrf.mxu0
    %v2604 = vadd.f32 %v2551, %v2603
    %2605 = vmatmul.f32.gmra.mxu0 %v2566
    %v2606 = vpop.f32.mrf.mxu0
    %v2607 = vadd.f32 %v2551, %v2606
    %2608 = vmatmul.f32.gmra.mxu0 %v2569
    %v2609 = vpop.f32.mrf.mxu0
    %v2610 = vadd.f32 %v2551, %v2609
    %2611 = vmatmul.f32.gmra.mxu0 %v2572
    %v2612 = vpop.f32.mrf.mxu0
    %v2613 = vadd.f32 %v2551, %v2612
    %2614 = vmatmul.f32.gmra.mxu0 %v2575
    %v2615 = vpop.f32.mrf.mxu0
    %v2616 = vadd.f32 %v2551, %v2615
    %2617 = vdwg.mxu0
    %v2618 = vadd.f32 %v45, %v2595
    %v2619 = vadd.f32 %v46, %v2598
    %v2620 = vadd.f32 %v47, %v2601
    %v2621 = vadd.f32 %v48, %v2604
    %v2622 = vadd.f32 %v49, %v2607
    %v2623 = vadd.f32 %v50, %v2610
    %v2624 = vadd.f32 %v51, %v2613
    %v2625 = vadd.f32 %v52, %v2616
    %v2626 = vld [vmem:[%s7] sm:$0x1]
    %v2627 = vld [vmem:[%s8] sm:$0x1]
    %v2628 = vsel %vm55, %v2618, 0.0
    %2629 = vadd.xlane.f32.xlu0 %v2628
    %v2630 = vpop.xlane.xlu0 %2629
    %v2631 = vsel %vm55, %v2619, 0.0
    %2632 = vadd.xlane.f32.xlu0 %v2631
    %v2633 = vpop.xlane.xlu0 %2632
    %v2634 = vsel %vm55, %v2620, 0.0
    %2635 = vadd.xlane.f32.xlu0 %v2634
    %v2636 = vpop.xlane.xlu0 %2635
    %v2637 = vsel %vm55, %v2621, 0.0
    %2638 = vadd.xlane.f32.xlu0 %v2637
    %v2639 = vpop.xlane.xlu0 %2638
    %v2640 = vsel %vm55, %v2622, 0.0
    %2641 = vadd.xlane.f32.xlu0 %v2640
    %v2642 = vpop.xlane.xlu0 %2641
    %v2643 = vsel %vm55, %v2623, 0.0
    %2644 = vadd.xlane.f32.xlu0 %v2643
    %v2645 = vpop.xlane.xlu0 %2644
    %v2646 = vsel %vm55, %v2624, 0.0
    %2647 = vadd.xlane.f32.xlu0 %v2646
    %v2648 = vpop.xlane.xlu0 %2647
    %v2649 = vsel %vm55, %v2625, 0.0
    %2650 = vadd.xlane.f32.xlu0 %v2649
    %v2651 = vpop.xlane.xlu0 %2650
    %v2652 = vmul.f32 %v2630, %v86
    %v2653 = vmul.f32 %v2633, %v86
    %v2654 = vmul.f32 %v2636, %v86
    %v2655 = vmul.f32 %v2639, %v86
    %v2656 = vmul.f32 %v2642, %v86
    %v2657 = vmul.f32 %v2645, %v86
    %v2658 = vmul.f32 %v2648, %v86
    %v2659 = vmul.f32 %v2651, %v86
    %v2660 = vsub.f32 %v2618, %v2652
    %v2661 = vsub.f32 %v2619, %v2653
    %v2662 = vsub.f32 %v2620, %v2654
    %v2663 = vsub.f32 %v2621, %v2655
    %v2664 = vsub.f32 %v2622, %v2656
    %v2665 = vsub.f32 %v2623, %v2657
    %v2666 = vsub.f32 %v2624, %v2658
    %v2667 = vsub.f32 %v2625, %v2659
    %v2668 = vmul.f32 %v2660, %v2660
    %v2669 = vmul.f32 %v2661, %v2661
    %v2670 = vmul.f32 %v2662, %v2662
    %v2671 = vmul.f32 %v2663, %v2663
    %v2672 = vmul.f32 %v2664, %v2664
    %v2673 = vmul.f32 %v2665, %v2665
    %v2674 = vmul.f32 %v2666, %v2666
    %v2675 = vmul.f32 %v2667, %v2667
    %v2676 = vsel %vm55, %v2668, 0.0
    %2677 = vadd.xlane.f32.xlu0 %v2676
    %v2678 = vpop.xlane.xlu0 %2677
    %v2679 = vsel %vm55, %v2669, 0.0
    %2680 = vadd.xlane.f32.xlu0 %v2679
    %v2681 = vpop.xlane.xlu0 %2680
    %v2682 = vsel %vm55, %v2670, 0.0
    %2683 = vadd.xlane.f32.xlu0 %v2682
    %v2684 = vpop.xlane.xlu0 %2683
    %v2685 = vsel %vm55, %v2671, 0.0
    %2686 = vadd.xlane.f32.xlu0 %v2685
    %v2687 = vpop.xlane.xlu0 %2686
    %v2688 = vsel %vm55, %v2672, 0.0
    %2689 = vadd.xlane.f32.xlu0 %v2688
    %v2690 = vpop.xlane.xlu0 %2689
    %v2691 = vsel %vm55, %v2673, 0.0
    %2692 = vadd.xlane.f32.xlu0 %v2691
    %v2693 = vpop.xlane.xlu0 %2692
    %v2694 = vsel %vm55, %v2674, 0.0
    %2695 = vadd.xlane.f32.xlu0 %v2694
    %v2696 = vpop.xlane.xlu0 %2695
    %v2697 = vsel %vm55, %v2675, 0.0
    %2698 = vadd.xlane.f32.xlu0 %v2697
    %v2699 = vpop.xlane.xlu0 %2698
    %v2700 = vmul.f32 %v2678, %v86
    %v2701 = vmul.f32 %v2681, %v86
    %v2702 = vmul.f32 %v2684, %v86
    %v2703 = vmul.f32 %v2687, %v86
    %v2704 = vmul.f32 %v2690, %v86
    %v2705 = vmul.f32 %v2693, %v86
    %v2706 = vmul.f32 %v2696, %v86
    %v2707 = vmul.f32 %v2699, %v86
    %v2708 = vadd.f32 %v2700, 1e-05
    %v2709 = vadd.f32 %v2701, 1e-05
    %v2710 = vadd.f32 %v2702, 1e-05
    %v2711 = vadd.f32 %v2703, 1e-05
    %v2712 = vadd.f32 %v2704, 1e-05
    %v2713 = vadd.f32 %v2705, 1e-05
    %v2714 = vadd.f32 %v2706, 1e-05
    %v2715 = vadd.f32 %v2707, 1e-05
    %v2716 = vrsqrt.pop %v2708
    %v2717 = vmul.f32 %v2716, %v2708
    %v2718 = vmul.f32 %v2717, %v2716
    %v2719 = vmul.f32 0.5, %v2718
    %v2720 = vsub.f32 1.5, %v2719
    %v2721 = vmul.f32 %v2716, %v2720
    %vm2722 = vweird.f32 %v2708
    %vm2723 = vweird.f32 %v2716
    %vm2724 = vmor %vm2722, %vm2723
    %v2725 = vsel %vm2724, %v2716, %v2721
    %v2726 = vrsqrt.pop %v2709
    %v2727 = vmul.f32 %v2726, %v2709
    %v2728 = vmul.f32 %v2727, %v2726
    %v2729 = vmul.f32 0.5, %v2728
    %v2730 = vsub.f32 1.5, %v2729
    %v2731 = vmul.f32 %v2726, %v2730
    %vm2732 = vweird.f32 %v2709
    %vm2733 = vweird.f32 %v2726
    %vm2734 = vmor %vm2732, %vm2733
    %v2735 = vsel %vm2734, %v2726, %v2731
    %v2736 = vrsqrt.pop %v2710
    %v2737 = vmul.f32 %v2736, %v2710
    %v2738 = vmul.f32 %v2737, %v2736
    %v2739 = vmul.f32 0.5, %v2738
    %v2740 = vsub.f32 1.5, %v2739
    %v2741 = vmul.f32 %v2736, %v2740
    %vm2742 = vweird.f32 %v2710
    %vm2743 = vweird.f32 %v2736
    %vm2744 = vmor %vm2742, %vm2743
    %v2745 = vsel %vm2744, %v2736, %v2741
    %v2746 = vrsqrt.pop %v2711
    %v2747 = vmul.f32 %v2746, %v2711
    %v2748 = vmul.f32 %v2747, %v2746
    %v2749 = vmul.f32 0.5, %v2748
    %v2750 = vsub.f32 1.5, %v2749
    %v2751 = vmul.f32 %v2746, %v2750
    %vm2752 = vweird.f32 %v2711
    %vm2753 = vweird.f32 %v2746
    %vm2754 = vmor %vm2752, %vm2753
    %v2755 = vsel %vm2754, %v2746, %v2751
    %v2756 = vrsqrt.pop %v2712
    %v2757 = vmul.f32 %v2756, %v2712
    %v2758 = vmul.f32 %v2757, %v2756
    %v2759 = vmul.f32 0.5, %v2758
    %v2760 = vsub.f32 1.5, %v2759
    %v2761 = vmul.f32 %v2756, %v2760
    %vm2762 = vweird.f32 %v2712
    %vm2763 = vweird.f32 %v2756
    %vm2764 = vmor %vm2762, %vm2763
    %v2765 = vsel %vm2764, %v2756, %v2761
    %v2766 = vrsqrt.pop %v2713
    %v2767 = vmul.f32 %v2766, %v2713
    %v2768 = vmul.f32 %v2767, %v2766
    %v2769 = vmul.f32 0.5, %v2768
    %v2770 = vsub.f32 1.5, %v2769
    %v2771 = vmul.f32 %v2766, %v2770
    %vm2772 = vweird.f32 %v2713
    %vm2773 = vweird.f32 %v2766
    %vm2774 = vmor %vm2772, %vm2773
    %v2775 = vsel %vm2774, %v2766, %v2771
    %v2776 = vrsqrt.pop %v2714
    %v2777 = vmul.f32 %v2776, %v2714
    %v2778 = vmul.f32 %v2777, %v2776
    %v2779 = vmul.f32 0.5, %v2778
    %v2780 = vsub.f32 1.5, %v2779
    %v2781 = vmul.f32 %v2776, %v2780
    %vm2782 = vweird.f32 %v2714
    %vm2783 = vweird.f32 %v2776
    %vm2784 = vmor %vm2782, %vm2783
    %v2785 = vsel %vm2784, %v2776, %v2781
    %v2786 = vrsqrt.pop %v2715
    %v2787 = vmul.f32 %v2786, %v2715
    %v2788 = vmul.f32 %v2787, %v2786
    %v2789 = vmul.f32 0.5, %v2788
    %v2790 = vsub.f32 1.5, %v2789
    %v2791 = vmul.f32 %v2786, %v2790
    %vm2792 = vweird.f32 %v2715
    %vm2793 = vweird.f32 %v2786
    %vm2794 = vmor %vm2792, %vm2793
    %v2795 = vsel %vm2794, %v2786, %v2791
    %v2796 = vmul.f32 %v2660, %v2725
    %v2797 = vmul.f32 %v2661, %v2735
    %v2798 = vmul.f32 %v2662, %v2745
    %v2799 = vmul.f32 %v2663, %v2755
    %v2800 = vmul.f32 %v2664, %v2765
    %v2801 = vmul.f32 %v2665, %v2775
    %v2802 = vmul.f32 %v2666, %v2785
    %v2803 = vmul.f32 %v2667, %v2795
    %v2805 = vperm.slane %v2626, 0
    %v2807 = vmul.f32 %v2796, %v2805
    %v2808 = vmul.f32 %v2797, %v2805
    %v2809 = vmul.f32 %v2798, %v2805
    %v2810 = vmul.f32 %v2799, %v2805
    %v2811 = vmul.f32 %v2800, %v2805
    %v2812 = vmul.f32 %v2801, %v2805
    %v2813 = vmul.f32 %v2802, %v2805
    %v2814 = vmul.f32 %v2803, %v2805
    %v2816 = vperm.slane %v2627, 0
    %v2818 = vadd.f32 %v2807, %v2816
    %v2819 = vadd.f32 %v2808, %v2816
    %v2820 = vadd.f32 %v2809, %v2816
    %v2821 = vadd.f32 %v2810, %v2816
    %v2822 = vadd.f32 %v2811, %v2816
    %v2823 = vadd.f32 %v2812, %v2816
    %v2824 = vadd.f32 %v2813, %v2816
    %v2825 = vadd.f32 %v2814, %v2816
    %v2826 = vld [vmem:[%s9] sm:$0xff]
    %v2827 = vld [vmem:[%s9 + $0x8] sm:$0xff]
    %v2828 = vld [vmem:[%s9 + $0x10] sm:$0xff]
    %v2829 = vld [vmem:[%s9 + $0x18] sm:$0xff]
    %v2830 = vld [vmem:[%s10] sm:$0x1]
    %v2832 = vperm.slane %v2830, 0
    %v2835 = vsel %vm55, %v2818, 0
    %v2838 = vsel %vm55, %v2819, 0
    %v2841 = vsel %vm55, %v2820, 0
    %v2844 = vsel %vm55, %v2821, 0
    %v2847 = vsel %vm55, %v2822, 0
    %v2850 = vsel %vm55, %v2823, 0
    %v2853 = vsel %vm55, %v2824, 0
    %v2856 = vsel %vm55, %v2825, 0
    %2858 = vmatpush.msra.mxu0 0.0
    %2859 = vmatpush.msra.mxu0 0.0
    %2860 = vmatpush.msra.mxu0 0.0
    %2861 = vmatpush.msra.mxu0 0.0
    %2862 = vmatpush.msra.mxu0 0.0
    %2863 = vmatpush.msra.mxu0 0.0
    %2864 = vmatpush.msra.mxu0 0.0
    %2865 = vmatpush.msra.mxu0 0.0
    %2866 = vmatpush.msra.mxu0 0.0
    %2867 = vmatpush.msra.mxu0 0.0
    %2868 = vmatpush.msra.mxu0 0.0
    %2869 = vmatpush.msra.mxu0 0.0
    %2870 = vmatpush.msra.mxu0 %v2829
    %2871 = vmatpush.msra.mxu0 %v2828
    %2872 = vmatpush.msra.mxu0 %v2827
    %2873 = vmatpush.msra.mxu0 %v2826
    %2874 = vmatmul.f32.gmra.mxu0 %v2835
    %v2875 = vpop.f32.mrf.mxu0
    %v2876 = vadd.f32 %v2832, %v2875
    %2877 = vmatmul.f32.gmra.mxu0 %v2838
    %v2878 = vpop.f32.mrf.mxu0
    %v2879 = vadd.f32 %v2832, %v2878
    %2880 = vmatmul.f32.gmra.mxu0 %v2841
    %v2881 = vpop.f32.mrf.mxu0
    %v2882 = vadd.f32 %v2832, %v2881
    %2883 = vmatmul.f32.gmra.mxu0 %v2844
    %v2884 = vpop.f32.mrf.mxu0
    %v2885 = vadd.f32 %v2832, %v2884
    %2886 = vmatmul.f32.gmra.mxu0 %v2847
    %v2887 = vpop.f32.mrf.mxu0
    %v2888 = vadd.f32 %v2832, %v2887
    %2889 = vmatmul.f32.gmra.mxu0 %v2850
    %v2890 = vpop.f32.mrf.mxu0
    %v2891 = vadd.f32 %v2832, %v2890
    %2892 = vmatmul.f32.gmra.mxu0 %v2853
    %v2893 = vpop.f32.mrf.mxu0
    %v2894 = vadd.f32 %v2832, %v2893
    %2895 = vmatmul.f32.gmra.mxu0 %v2856
    %v2896 = vpop.f32.mrf.mxu0
    %v2897 = vadd.f32 %v2832, %v2896
    %2898 = vdwg.mxu0
    %v2899 = vmul.f32 %v2876, 0.5
    %v2900 = vmul.f32 %v2879, 0.5
    %v2901 = vmul.f32 %v2882, 0.5
    %v2902 = vmul.f32 %v2885, 0.5
    %v2903 = vmul.f32 %v2888, 0.5
    %v2904 = vmul.f32 %v2891, 0.5
    %v2905 = vmul.f32 %v2894, 0.5
    %v2906 = vmul.f32 %v2897, 0.5
    %v2907 = vmul.f32 %v2876, 0.70710677
    %v2908 = vmul.f32 %v2879, 0.70710677
    %v2909 = vmul.f32 %v2882, 0.70710677
    %v2910 = vmul.f32 %v2885, 0.70710677
    %v2911 = vmul.f32 %v2888, 0.70710677
    %v2912 = vmul.f32 %v2891, 0.70710677
    %v2913 = vmul.f32 %v2894, 0.70710677
    %v2914 = vmul.f32 %v2897, 0.70710677
    %v2915 = vand.u32 2147483647, %v2907
    %v2916 = vand.u32 2147483647, %v2908
    %v2917 = vand.u32 2147483647, %v2909
    %v2918 = vand.u32 2147483647, %v2910
    %v2919 = vand.u32 2147483647, %v2911
    %v2920 = vand.u32 2147483647, %v2912
    %v2921 = vand.u32 2147483647, %v2913
    %v2922 = vand.u32 2147483647, %v2914
    %v2923 = vmul.f32 %v2915, 0.3275911
    %v2924 = vmul.f32 %v2916, 0.3275911
    %v2925 = vmul.f32 %v2917, 0.3275911
    %v2926 = vmul.f32 %v2918, 0.3275911
    %v2927 = vmul.f32 %v2919, 0.3275911
    %v2928 = vmul.f32 %v2920, 0.3275911
    %v2929 = vmul.f32 %v2921, 0.3275911
    %v2930 = vmul.f32 %v2922, 0.3275911
    %v2931 = vadd.f32 %v2923, 1.0
    %v2932 = vadd.f32 %v2924, 1.0
    %v2933 = vadd.f32 %v2925, 1.0
    %v2934 = vadd.f32 %v2926, 1.0
    %v2935 = vadd.f32 %v2927, 1.0
    %v2936 = vadd.f32 %v2928, 1.0
    %v2937 = vadd.f32 %v2929, 1.0
    %v2938 = vadd.f32 %v2930, 1.0
    %v2939 = vrcp.pop %v2931
    %v2940 = vmul.f32 %v2931, %v2939
    %v2941 = vsub.f32 1.0, %v2940
    %v2942 = vmul.f32 %v2939, %v2941
    %v2943 = vadd.f32 %v2939, %v2942
    %vm2944 = vweird.f32 %v2931
    %vm2945 = vweird.f32 %v2939
    %vm2946 = vmor %vm2944, %vm2945
    %v2947 = vsel %vm2946, %v2939, %v2943
    %v2948 = vand.u32 2147483647, %v2931
    %vm2949 = vcmp.eq.f32.partialorder %v2948, 8.507059e+37
    %v2950 = vand.u32 %v2931, 2147483648
    %v2951 = vor.u32 1.1754944e-38, %v2950
    %v2952 = vsel %vm2949, %v2951, %v2947
    %v2953 = vrcp.pop %v2932
    %v2954 = vmul.f32 %v2932, %v2953
    %v2955 = vsub.f32 1.0, %v2954
    %v2956 = vmul.f32 %v2953, %v2955
    %v2957 = vadd.f32 %v2953, %v2956
    %vm2958 = vweird.f32 %v2932
    %vm2959 = vweird.f32 %v2953
    %vm2960 = vmor %vm2958, %vm2959
    %v2961 = vsel %vm2960, %v2953, %v2957
    %v2962 = vand.u32 2147483647, %v2932
    %vm2963 = vcmp.eq.f32.partialorder %v2962, 8.507059e+37
    %v2964 = vand.u32 %v2932, 2147483648
    %v2965 = vor.u32 1.1754944e-38, %v2964
    %v2966 = vsel %vm2963, %v2965, %v2961
    %v2967 = vrcp.pop %v2933
    %v2968 = vmul.f32 %v2933, %v2967
    %v2969 = vsub.f32 1.0, %v2968
    %v2970 = vmul.f32 %v2967, %v2969
    %v2971 = vadd.f32 %v2967, %v2970
    %vm2972 = vweird.f32 %v2933
    %vm2973 = vweird.f32 %v2967
    %vm2974 = vmor %vm2972, %vm2973
    %v2975 = vsel %vm2974, %v2967, %v2971
    %v2976 = vand.u32 2147483647, %v2933
    %vm2977 = vcmp.eq.f32.partialorder %v2976, 8.507059e+37
    %v2978 = vand.u32 %v2933, 2147483648
    %v2979 = vor.u32 1.1754944e-38, %v2978
    %v2980 = vsel %vm2977, %v2979, %v2975
    %v2981 = vrcp.pop %v2934
    %v2982 = vmul.f32 %v2934, %v2981
    %v2983 = vsub.f32 1.0, %v2982
    %v2984 = vmul.f32 %v2981, %v2983
    %v2985 = vadd.f32 %v2981, %v2984
    %vm2986 = vweird.f32 %v2934
    %vm2987 = vweird.f32 %v2981
    %vm2988 = vmor %vm2986, %vm2987
    %v2989 = vsel %vm2988, %v2981, %v2985
    %v2990 = vand.u32 2147483647, %v2934
    %vm2991 = vcmp.eq.f32.partialorder %v2990, 8.507059e+37
    %v2992 = vand.u32 %v2934, 2147483648
    %v2993 = vor.u32 1.1754944e-38, %v2992
    %v2994 = vsel %vm2991, %v2993, %v2989
    %v2995 = vrcp.pop %v2935
    %v2996 = vmul.f32 %v2935, %v2995
    %v2997 = vsub.f32 1.0, %v2996
    %v2998 = vmul.f32 %v2995, %v2997
    %v2999 = vadd.f32 %v2995, %v2998
    %vm3000 = vweird.f32 %v2935
    %vm3001 = vweird.f32 %v2995
    %vm3002 = vmor %vm3000, %vm3001
    %v3003 = vsel %vm3002, %v2995, %v2999
    %v3004 = vand.u32 2147483647, %v2935
    %vm3005 = vcmp.eq.f32.partialorder %v3004, 8.507059e+37
    %v3006 = vand.u32 %v2935, 2147483648
    %v3007 = vor.u32 1.1754944e-38, %v3006
    %v3008 = vsel %vm3005, %v3007, %v3003
    %v3009 = vrcp.pop %v2936
    %v3010 = vmul.f32 %v2936, %v3009
    %v3011 = vsub.f32 1.0, %v3010
    %v3012 = vmul.f32 %v3009, %v3011
    %v3013 = vadd.f32 %v3009, %v3012
    %vm3014 = vweird.f32 %v2936
    %vm3015 = vweird.f32 %v3009
    %vm3016 = vmor %vm3014, %vm3015
    %v3017 = vsel %vm3016, %v3009, %v3013
    %v3018 = vand.u32 2147483647, %v2936
    %vm3019 = vcmp.eq.f32.partialorder %v3018, 8.507059e+37
    %v3020 = vand.u32 %v2936, 2147483648
    %v3021 = vor.u32 1.1754944e-38, %v3020
    %v3022 = vsel %vm3019, %v3021, %v3017
    %v3023 = vrcp.pop %v2937
    %v3024 = vmul.f32 %v2937, %v3023
    %v3025 = vsub.f32 1.0, %v3024
    %v3026 = vmul.f32 %v3023, %v3025
    %v3027 = vadd.f32 %v3023, %v3026
    %vm3028 = vweird.f32 %v2937
    %vm3029 = vweird.f32 %v3023
    %vm3030 = vmor %vm3028, %vm3029
    %v3031 = vsel %vm3030, %v3023, %v3027
    %v3032 = vand.u32 2147483647, %v2937
    %vm3033 = vcmp.eq.f32.partialorder %v3032, 8.507059e+37
    %v3034 = vand.u32 %v2937, 2147483648
    %v3035 = vor.u32 1.1754944e-38, %v3034
    %v3036 = vsel %vm3033, %v3035, %v3031
    %v3037 = vrcp.pop %v2938
    %v3038 = vmul.f32 %v2938, %v3037
    %v3039 = vsub.f32 1.0, %v3038
    %v3040 = vmul.f32 %v3037, %v3039
    %v3041 = vadd.f32 %v3037, %v3040
    %vm3042 = vweird.f32 %v2938
    %vm3043 = vweird.f32 %v3037
    %vm3044 = vmor %vm3042, %vm3043
    %v3045 = vsel %vm3044, %v3037, %v3041
    %v3046 = vand.u32 2147483647, %v2938
    %vm3047 = vcmp.eq.f32.partialorder %v3046, 8.507059e+37
    %v3048 = vand.u32 %v2938, 2147483648
    %v3049 = vor.u32 1.1754944e-38, %v3048
    %v3050 = vsel %vm3047, %v3049, %v3045
    %v3051 = vmul.f32 %v2952, 1.0614054
    %v3052 = vmul.f32 %v2966, 1.0614054
    %v3053 = vmul.f32 %v2980, 1.0614054
    %v3054 = vmul.f32 %v2994, 1.0614054
    %v3055 = vmul.f32 %v3008, 1.0614054
    %v3056 = vmul.f32 %v3022, 1.0614054
    %v3057 = vmul.f32 %v3036, 1.0614054
    %v3058 = vmul.f32 %v3050, 1.0614054
    %v3059 = vadd.f32 %v3051, -1.4531521
    %v3060 = vadd.f32 %v3052, -1.4531521
    %v3061 = vadd.f32 %v3053, -1.4531521
    %v3062 = vadd.f32 %v3054, -1.4531521
    %v3063 = vadd.f32 %v3055, -1.4531521
    %v3064 = vadd.f32 %v3056, -1.4531521
    %v3065 = vadd.f32 %v3057, -1.4531521
    %v3066 = vadd.f32 %v3058, -1.4531521
    %v3067 = vmul.f32 %v3059, %v2952
    %v3068 = vmul.f32 %v3060, %v2966
    %v3069 = vmul.f32 %v3061, %v2980
    %v3070 = vmul.f32 %v3062, %v2994
    %v3071 = vmul.f32 %v3063, %v3008
    %v3072 = vmul.f32 %v3064, %v3022
    %v3073 = vmul.f32 %v3065, %v3036
    %v3074 = vmul.f32 %v3066, %v3050
    %v3075 = vadd.f32 %v3067, 1.4214138
    %v3076 = vadd.f32 %v3068, 1.4214138
    %v3077 = vadd.f32 %v3069, 1.4214138
    %v3078 = vadd.f32 %v3070, 1.4214138
    %v3079 = vadd.f32 %v3071, 1.4214138
    %v3080 = vadd.f32 %v3072, 1.4214138
    %v3081 = vadd.f32 %v3073, 1.4214138
    %v3082 = vadd.f32 %v3074, 1.4214138
    %v3083 = vmul.f32 %v3075, %v2952
    %v3084 = vmul.f32 %v3076, %v2966
    %v3085 = vmul.f32 %v3077, %v2980
    %v3086 = vmul.f32 %v3078, %v2994
    %v3087 = vmul.f32 %v3079, %v3008
    %v3088 = vmul.f32 %v3080, %v3022
    %v3089 = vmul.f32 %v3081, %v3036
    %v3090 = vmul.f32 %v3082, %v3050
    %v3091 = vadd.f32 %v3083, -0.28449672
    %v3092 = vadd.f32 %v3084, -0.28449672
    %v3093 = vadd.f32 %v3085, -0.28449672
    %v3094 = vadd.f32 %v3086, -0.28449672
    %v3095 = vadd.f32 %v3087, -0.28449672
    %v3096 = vadd.f32 %v3088, -0.28449672
    %v3097 = vadd.f32 %v3089, -0.28449672
    %v3098 = vadd.f32 %v3090, -0.28449672
    %v3099 = vmul.f32 %v3091, %v2952
    %v3100 = vmul.f32 %v3092, %v2966
    %v3101 = vmul.f32 %v3093, %v2980
    %v3102 = vmul.f32 %v3094, %v2994
    %v3103 = vmul.f32 %v3095, %v3008
    %v3104 = vmul.f32 %v3096, %v3022
    %v3105 = vmul.f32 %v3097, %v3036
    %v3106 = vmul.f32 %v3098, %v3050
    %v3107 = vadd.f32 %v3099, 0.2548296
    %v3108 = vadd.f32 %v3100, 0.2548296
    %v3109 = vadd.f32 %v3101, 0.2548296
    %v3110 = vadd.f32 %v3102, 0.2548296
    %v3111 = vadd.f32 %v3103, 0.2548296
    %v3112 = vadd.f32 %v3104, 0.2548296
    %v3113 = vadd.f32 %v3105, 0.2548296
    %v3114 = vadd.f32 %v3106, 0.2548296
    %v3115 = vmul.f32 %v3107, %v2952
    %v3116 = vmul.f32 %v3108, %v2966
    %v3117 = vmul.f32 %v3109, %v2980
    %v3118 = vmul.f32 %v3110, %v2994
    %v3119 = vmul.f32 %v3111, %v3008
    %v3120 = vmul.f32 %v3112, %v3022
    %v3121 = vmul.f32 %v3113, %v3036
    %v3122 = vmul.f32 %v3114, %v3050
    %v3123 = vsub.f32 0.0, %v2915
    %v3124 = vsub.f32 0.0, %v2916
    %v3125 = vsub.f32 0.0, %v2917
    %v3126 = vsub.f32 0.0, %v2918
    %v3127 = vsub.f32 0.0, %v2919
    %v3128 = vsub.f32 0.0, %v2920
    %v3129 = vsub.f32 0.0, %v2921
    %v3130 = vsub.f32 0.0, %v2922
    %v3131 = vmul.f32 %v3123, %v2915
    %v3132 = vmul.f32 %v3124, %v2916
    %v3133 = vmul.f32 %v3125, %v2917
    %v3134 = vmul.f32 %v3126, %v2918
    %v3135 = vmul.f32 %v3127, %v2919
    %v3136 = vmul.f32 %v3128, %v2920
    %v3137 = vmul.f32 %v3129, %v2921
    %v3138 = vmul.f32 %v3130, %v2922
    %v3139 = vmul.f32 %v3131, 1.442695
    %v3140 = vpow.pop %v3139
    %v3141 = vmul.f32 %v3132, 1.442695
    %v3142 = vpow.pop %v3141
    %v3143 = vmul.f32 %v3133, 1.442695
    %v3144 = vpow.pop %v3143
    %v3145 = vmul.f32 %v3134, 1.442695
    %v3146 = vpow.pop %v3145
    %v3147 = vmul.f32 %v3135, 1.442695
    %v3148 = vpow.pop %v3147
    %v3149 = vmul.f32 %v3136, 1.442695
    %v3150 = vpow.pop %v3149
    %v3151 = vmul.f32 %v3137, 1.442695
    %v3152 = vpow.pop %v3151
    %v3153 = vmul.f32 %v3138, 1.442695
    %v3154 = vpow.pop %v3153
    %v3155 = vmul.f32 %v3115, %v3140
    %v3156 = vmul.f32 %v3116, %v3142
    %v3157 = vmul.f32 %v3117, %v3144
    %v3158 = vmul.f32 %v3118, %v3146
    %v3159 = vmul.f32 %v3119, %v3148
    %v3160 = vmul.f32 %v3120, %v3150
    %v3161 = vmul.f32 %v3121, %v3152
    %v3162 = vmul.f32 %v3122, %v3154
    %v3163 = vsub.f32 1.0, %v3155
    %v3164 = vsub.f32 1.0, %v3156
    %v3165 = vsub.f32 1.0, %v3157
    %v3166 = vsub.f32 1.0, %v3158
    %v3167 = vsub.f32 1.0, %v3159
    %v3168 = vsub.f32 1.0, %v3160
    %v3169 = vsub.f32 1.0, %v3161
    %v3170 = vsub.f32 1.0, %v3162
    %vm3171 = vcmp.lt.f32.partialorder %v2907, 0.0
    %vm3172 = vcmp.lt.f32.partialorder %v2908, 0.0
    %vm3173 = vcmp.lt.f32.partialorder %v2909, 0.0
    %vm3174 = vcmp.lt.f32.partialorder %v2910, 0.0
    %vm3175 = vcmp.lt.f32.partialorder %v2911, 0.0
    %vm3176 = vcmp.lt.f32.partialorder %v2912, 0.0
    %vm3177 = vcmp.lt.f32.partialorder %v2913, 0.0
    %vm3178 = vcmp.lt.f32.partialorder %v2914, 0.0
    %v3179 = vsub.f32 0.0, %v3163
    %v3180 = vsub.f32 0.0, %v3164
    %v3181 = vsub.f32 0.0, %v3165
    %v3182 = vsub.f32 0.0, %v3166
    %v3183 = vsub.f32 0.0, %v3167
    %v3184 = vsub.f32 0.0, %v3168
    %v3185 = vsub.f32 0.0, %v3169
    %v3186 = vsub.f32 0.0, %v3170
    %v3187 = vsel %vm3171, %v3179, %v3163
    %v3188 = vsel %vm3172, %v3180, %v3164
    %v3189 = vsel %vm3173, %v3181, %v3165
    %v3190 = vsel %vm3174, %v3182, %v3166
    %v3191 = vsel %vm3175, %v3183, %v3167
    %v3192 = vsel %vm3176, %v3184, %v3168
    %v3193 = vsel %vm3177, %v3185, %v3169
    %v3194 = vsel %vm3178, %v3186, %v3170
    %v3195 = vadd.f32 %v3187, 1.0
    %v3196 = vadd.f32 %v3188, 1.0
    %v3197 = vadd.f32 %v3189, 1.0
    %v3198 = vadd.f32 %v3190, 1.0
    %v3199 = vadd.f32 %v3191, 1.0
    %v3200 = vadd.f32 %v3192, 1.0
    %v3201 = vadd.f32 %v3193, 1.0
    %v3202 = vadd.f32 %v3194, 1.0
    %v3203 = vmul.f32 %v2899, %v3195
    %v3204 = vmul.f32 %v2900, %v3196
    %v3205 = vmul.f32 %v2901, %v3197
    %v3206 = vmul.f32 %v2902, %v3198
    %v3207 = vmul.f32 %v2903, %v3199
    %v3208 = vmul.f32 %v2904, %v3200
    %v3209 = vmul.f32 %v2905, %v3201
    %v3210 = vmul.f32 %v2906, %v3202
    %v3211 = vld [vmem:[%s11] sm:$0xff]
    %v3212 = vld [vmem:[%s11 + $0x8] sm:$0xff]
    %v3213 = vld [vmem:[%s11 + $0x10] sm:$0xff]
    %v3214 = vld [vmem:[%s11 + $0x18] sm:$0xff]
    %v3215 = vld [vmem:[%s11 + $0x20] sm:$0xff]
    %v3216 = vld [vmem:[%s11 + $0x28] sm:$0xff]
    %v3217 = vld [vmem:[%s11 + $0x30] sm:$0xff]
    %v3218 = vld [vmem:[%s11 + $0x38] sm:$0xff]
    %v3219 = vld [vmem:[%s11 + $0x40] sm:$0xff]
    %v3220 = vld [vmem:[%s11 + $0x48] sm:$0xff]
    %v3221 = vld [vmem:[%s11 + $0x50] sm:$0xff]
    %v3222 = vld [vmem:[%s11 + $0x58] sm:$0xff]
    %v3223 = vld [vmem:[%s11 + $0x60] sm:$0xff]
    %v3224 = vld [vmem:[%s11 + $0x68] sm:$0xff]
    %v3225 = vld [vmem:[%s11 + $0x70] sm:$0xff]
    %v3226 = vld [vmem:[%s11 + $0x78] sm:$0xff]
    %v3227 = vld [vmem:[%s12] sm:$0x1]
    %v3229 = vperm.slane %v3227, 0
    %3231 = vmatpush.msra.mxu0 %v3226
    %3232 = vmatpush.msra.mxu0 %v3225
    %3233 = vmatpush.msra.mxu0 %v3224
    %3234 = vmatpush.msra.mxu0 %v3223
    %3235 = vmatpush.msra.mxu0 %v3222
    %3236 = vmatpush.msra.mxu0 %v3221
    %3237 = vmatpush.msra.mxu0 %v3220
    %3238 = vmatpush.msra.mxu0 %v3219
    %3239 = vmatpush.msra.mxu0 %v3218
    %3240 = vmatpush.msra.mxu0 %v3217
    %3241 = vmatpush.msra.mxu0 %v3216
    %3242 = vmatpush.msra.mxu0 %v3215
    %3243 = vmatpush.msra.mxu0 %v3214
    %3244 = vmatpush.msra.mxu0 %v3213
    %3245 = vmatpush.msra.mxu0 %v3212
    %3246 = vmatpush.msra.mxu0 %v3211
    %3247 = vmatmul.f32.gmra.mxu0 %v3203
    %v3248 = vpop.f32.mrf.mxu0
    %v3249 = vadd.f32 %v3229, %v3248
    %3250 = vmatmul.f32.gmra.mxu0 %v3204
    %v3251 = vpop.f32.mrf.mxu0
    %v3252 = vadd.f32 %v3229, %v3251
    %3253 = vmatmul.f32.gmra.mxu0 %v3205
    %v3254 = vpop.f32.mrf.mxu0
    %v3255 = vadd.f32 %v3229, %v3254
    %3256 = vmatmul.f32.gmra.mxu0 %v3206
    %v3257 = vpop.f32.mrf.mxu0
    %v3258 = vadd.f32 %v3229, %v3257
    %3259 = vmatmul.f32.gmra.mxu0 %v3207
    %v3260 = vpop.f32.mrf.mxu0
    %v3261 = vadd.f32 %v3229, %v3260
    %3262 = vmatmul.f32.gmra.mxu0 %v3208
    %v3263 = vpop.f32.mrf.mxu0
    %v3264 = vadd.f32 %v3229, %v3263
    %3265 = vmatmul.f32.gmra.mxu0 %v3209
    %v3266 = vpop.f32.mrf.mxu0
    %v3267 = vadd.f32 %v3229, %v3266
    %3268 = vmatmul.f32.gmra.mxu0 %v3210
    %v3269 = vpop.f32.mrf.mxu0
    %v3270 = vadd.f32 %v3229, %v3269
    %3271 = vdwg.mxu0
    %v3272 = vadd.f32 %v2618, %v3249
    %v3273 = vadd.f32 %v2619, %v3252
    %v3274 = vadd.f32 %v2620, %v3255
    %v3275 = vadd.f32 %v2621, %v3258
    %v3276 = vadd.f32 %v2622, %v3261
    %v3277 = vadd.f32 %v2623, %v3264
    %v3278 = vadd.f32 %v2624, %v3267
    %v3279 = vadd.f32 %v2625, %v3270
    %3280 = vst.msk [vmem:[#allocation2] sm:$0xff] %vm55, %v3272
    %3281 = vst.msk [vmem:[#allocation2 + $0x8] sm:$0xff] %vm55, %v3273
    %3282 = vst.msk [vmem:[#allocation2 + $0x10] sm:$0xff] %vm55, %v3274
    %3283 = vst.msk [vmem:[#allocation2 + $0x18] sm:$0xff] %vm55, %v3275
    %3284 = vst.msk [vmem:[#allocation2 + $0x20] sm:$0xff] %vm55, %v3276
    %3285 = vst.msk [vmem:[#allocation2 + $0x28] sm:$0xff] %vm55, %v3277
    %3286 = vst.msk [vmem:[#allocation2 + $0x30] sm:$0xff] %vm55, %v3278
    %3287 = vst.msk [vmem:[#allocation2 + $0x38] sm:$0xff] %vm55, %v3279
    // Predicated region
    $region54: #{tpu_custom_call.1} parent=1 // pred_check
      _
    $region55: #{tpu_custom_call.1} parent=1 // pred_check_branch
      %3289 = sbr.rel (0) target = $region57
    $region56: #{tpu_custom_call.1} parent=1 // pred_region
      %3291 = vsyncadd [#allocation3], 0
      %s3292 = sshll.u32 [#allocation2], 4
      %s3293 = int_to_ptr.vmem [resolvable:$true] %s3292
      %s3294 = sshll.u32 %s13, 4
      %s3295 = int_to_ptr.hbm [resolvable:$true] %s3294
      %3300 = dma.vmem_to_hbm [thread:$0]  %s3293, 1024, %s3295, [#allocation3], 128, 128, 8
    $region57: #{tpu_custom_call.1} parent=1 // pred_fallthru
      _
    // Predicated region
    $region58: #{tpu_custom_call.1} parent=1 // pred_check
      _
    $region59: #{tpu_custom_call.1} parent=1 // pred_check_branch
      %3302 = sbr.rel (0) target = $region61
    $region60: #{tpu_custom_call.1} parent=1 // pred_region
      %3304 = dma.done [#allocation3], 1024
    $region61: #{tpu_custom_call.1} parent=1 // pred_fallthru
      _
    %3305 = vsyncpa [#allocation3], 1

</llo_original>
